<compile_context>
chip_gen: v7x
topology: tpu7x:2x2x1
jax: 0.10.0
libtpu: 0.0.40
codegen_flags: <defaults>
</compile_context>

<pallas_src>
import math

import jax
import jax.numpy as jnp
import numpy as np
from jax import lax
from jax.experimental import pallas as pl
from jax.experimental.pallas import tpu as pltpu


def _round_up(x, m):
    return ((x + m - 1) // m) * m


def _cdiv(a, b):
    return (a + b - 1) // b


# ----------------------------- Pallas kernels ------------------------------ #

def _make_rowconv_kernel(ksz, lanes_in, rows_out):
    """Conv + bias + ReLU for one batch tile via a single wide-K MXU matmul.

    x_ref  : (rows_in, lanes_in)        bf16  compact padded frames, row=(img,h)
    w_ref  : (ksz*lanes_in, n_pad)      bf16  width-Toeplitz weights (constant block)
    b_ref  : (1, n_pad)                 f32   bias broadcast over the w*Cout lanes
    o_ref  : (rows_out, n_pad)          bf16  ReLU(conv), lane-dense output
    col_ref: (rows_out, ksz*lanes_in)   bf16  VMEM scratch (wide-K im2col slab)
    """

    def kernel(x_ref, w_ref, b_ref, o_ref, col_ref):
        # Build the wide-K slab: 5 row-shifted copies placed at 128-aligned lane
        # offsets (every store is a full, unmasked block).
        for kh in range(ksz):
            col_ref[:, kh * lanes_in:(kh + 1) * lanes_in] = x_ref[pl.ds(kh, rows_out), :]
        # One MXU matmul with f32 accumulation; bias + ReLU + bf16 downcast fused.
        y = jnp.dot(col_ref[...], w_ref[...], preferred_element_type=jnp.float32)
        o_ref[...] = jnp.maximum(y + b_ref[...], 0.0).astype(o_ref.dtype)

    return kernel


def _linear_kernel(x_ref, w_ref, b_ref, o_ref):
    o_ref[...] = jnp.dot(x_ref[...], w_ref[...],
                         preferred_element_type=jnp.float32) + b_ref[...]


# ------------------------------- wrappers ---------------------------------- #

def _toeplitz_weight(w_hwio, wp_frame, lanes_in, w_out, n_pad):
    """(kh,kw,Cin,Cout) filters -> (ksz*lanes_in, n_pad) width-Toeplitz matrix.

    W[kh*lanes_in + wp*Cin + ci, w*Cout + c] = w_hwio[kh, wp - w, ci, c] when
    0 <= wp - w < ksz, else 0.  Built once per call by XLA (a few hundred KB).
    """
    ksz, _, cin, cout = w_hwio.shape
    wp = jnp.arange(wp_frame)
    kw = jnp.arange(ksz)
    wo = jnp.arange(w_out)
    sel = (wp[:, None, None] == wo[None, None, :] + kw[None, :, None]).astype(w_hwio.dtype)
    blocks = jnp.einsum("pkw,hkic->hpiwc", sel, w_hwio)          # (ksz, Wp, Cin, W, Cout)
    blocks = blocks.reshape(ksz, wp_frame * cin, w_out * cout)
    blocks = jnp.pad(blocks, ((0, 0),
                              (0, lanes_in - wp_frame * cin),
                              (0, n_pad - w_out * cout)))
    return blocks.reshape(ksz * lanes_in, n_pad).astype(jnp.bfloat16)


def conv2d_relu(x_nhwc, w_hwio, b, *, pad=2, batch_tile=8):
    """'Same' Conv2d(k=5, s=1, p=2) + bias + ReLU -> (B, H, W, Cout) bf16."""
    B, H, W, Cin = x_nhwc.shape
    ksz, _, _, Cout = w_hwio.shape
    Hp, Wp = H + 2 * pad, W + 2 * pad
    lanes_in = _round_up(Wp * Cin, 128)          # conv1: 128, conv2: 384
    n_out = W * Cout                             # 448 for both layers
    n_pad = _round_up(n_out, 128)                # 512 -> lane-dense, unmasked stores

    # Keep grid >= 2 even at tiny batch (v7x: 2 TCs + pipeline overlap).
    BT = max(1, min(batch_tile, _cdiv(B, 2)))
    Bp = _round_up(B, BT)
    G = Bp // BT
    # Per-image row stride chosen so the per-step block height is 16-aligned.
    Hp_blk = _round_up(Hp, 16 // math.gcd(BT, 16))
    rows_out = BT * Hp_blk
    rows_in = rows_out + 16                      # slack for the kh row shifts (<= 4)

    # Compact padded frames in HBM: (grid, rows, lanes) with zero padding only
    # (no k*k im2col expansion ever leaves the chip).
    xp = jnp.pad(x_nhwc.astype(jnp.bfloat16),
                 ((0, Bp - B), (pad, pad), (pad, pad), (0, 0)))
    xf = xp.reshape(Bp, Hp, Wp * Cin)
    xf = jnp.pad(xf, ((0, 0), (0, Hp_blk - Hp), (0, lanes_in - Wp * Cin)))
    xf = xf.reshape(G, rows_out, lanes_in)
    xf = jnp.pad(xf, ((0, 0), (0, rows_in - rows_out), (0, 0)))
    xf = xf.reshape(G * rows_in, lanes_in)

    w_big = _toeplitz_weight(w_hwio, Wp, lanes_in, W, n_pad)     # (ksz*lanes_in, n_pad)
    b_lane = jnp.pad(jnp.tile(b, W), (0, n_pad - n_out)).reshape(1, n_pad).astype(jnp.float32)

    out = pl.pallas_call(
        _make_rowconv_kernel(ksz, lanes_in, rows_out),
        out_shape=jax.ShapeDtypeStruct((G * rows_out, n_pad), jnp.bfloat16),
        grid=(G,),
        in_specs=[pl.BlockSpec((rows_in, lanes_in), lambda i: (i, 0)),
                  pl.BlockSpec((ksz * lanes_in, n_pad), lambda i: (0, 0)),   # resident weights
                  pl.BlockSpec((1, n_pad), lambda i: (0, 0))],
        out_specs=pl.BlockSpec((rows_out, n_pad), lambda i: (i, 0)),
        scratch_shapes=[pltpu.VMEM((rows_out, ksz * lanes_in), jnp.bfloat16)],
        compiler_params=pltpu.CompilerParams(dimension_semantics=("parallel",)),
    )(xf, w_big, b_lane)

    # rows = (img, h in [0, Hp_blk)), lanes = w*Cout + c -> slice valid region.
    y = out.reshape(Bp, Hp_blk, n_pad)[:B, :H, :n_out]
    return y.reshape(B, H, W, Cout)


def maxpool2(x):
    """2x2 max pool on a small bf16 NHWC activation.

    TODO(synk): fuse into the conv kernel epilogue; the w-direction max is a
    lane-group shuffle in the (w*Cout) lane layout, so it is left to XLA on the
    already-bf16, lane-dense conv output (~30x less traffic than before)."""
    B, H, W, C = x.shape
    return x.reshape(B, H // 2, 2, W // 2, 2, C).max(axis=(2, 4))


def linear(x, w, b, *, row_tile=256):
    B, K = x.shape
    N = w.shape[-1]
    Np = _round_up(N, 128)                       # lane-dense output, no masked stores
    bt = min(row_tile, _round_up(max(_cdiv(B, 2), 1), 16))   # grid >= 2 once B > 16
    Bp = _round_up(B, bt)

    xp = jnp.pad(x.astype(jnp.bfloat16), ((0, Bp - B), (0, 0)))
    wp_ = jnp.pad(w, ((0, 0), (0, Np - N))).astype(jnp.bfloat16)
    bp_ = jnp.pad(b, (0, Np - N)).reshape(1, Np).astype(jnp.float32)

    out = pl.pallas_call(
        _linear_kernel,
        out_shape=jax.ShapeDtypeStruct((Bp, Np), jnp.float32),
        grid=(Bp // bt,),
        in_specs=[pl.BlockSpec((bt, K), lambda i: (i, 0)),
                  pl.BlockSpec((K, Np), lambda i: (0, 0)),
                  pl.BlockSpec((1, Np), lambda i: (0, 0))],
        out_specs=pl.BlockSpec((bt, Np), lambda i: (i, 0)),
        compiler_params=pltpu.CompilerParams(dimension_semantics=("parallel",)),
    )(xp, wp_, bp_)
    return out[:B, :N]


def init_params(key):
    k1, k2, k3, k4, k5, k6 = jax.random.split(key, 6)
    return {
        "w1": jax.random.normal(k1, (5, 5, 1, 16), jnp.float32) * 0.1,    # HWIO
        "b1": jax.random.normal(k2, (16,), jnp.float32) * 0.1,
        "w2": jax.random.normal(k3, (5, 5, 16, 32), jnp.float32) * 0.05,  # HWIO
        "b2": jax.random.normal(k4, (32,), jnp.float32) * 0.05,
        "w_out": jax.random.normal(k5, (32 * 7 * 7, 10), jnp.float32) * 0.02,
        "b_out": jax.random.normal(k6, (10,), jnp.float32) * 0.02,
    }


@jax.jit
def cnn_forward(params, x_nchw):
    """x_nchw: (B, 1, 28, 28) float32, same convention as the PyTorch module."""
    x = jnp.transpose(x_nchw, (0, 2, 3, 1))                         # NCHW -> NHWC
    y = conv2d_relu(x, params["w1"], params["b1"])                  # (B, 28, 28, 16) bf16
    y = maxpool2(y)                                                 # (B, 14, 14, 16)
    y = conv2d_relu(y, params["w2"], params["b2"])                  # (B, 14, 14, 32) bf16
    y = maxpool2(y)                                                 # (B,  7,  7, 32)
    # Flatten in PyTorch's x.view(B, -1) order (NCHW).
    feats = jnp.transpose(y, (0, 3, 1, 2)).reshape(y.shape[0], -1)  # (B, 1568) bf16
    out = linear(feats, params["w_out"], params["b_out"])           # (B, 10) f32
    return out, feats.astype(jnp.float32)


# --------------------------- pure-JAX reference ----------------------------- #

def _reference_forward(params, x_nchw):
    def conv2d(x, w_hwio, bias):
        w = jnp.transpose(w_hwio, (3, 2, 0, 1))                     # HWIO -> OIHW
        y = lax.conv_general_dilated(
            x, w, window_strides=(1, 1), padding=((2, 2), (2, 2)),
            dimension_numbers=("NCHW", "OIHW", "NCHW"))
        return y + bias.reshape(1, -1, 1, 1)

    def maxpool2_ref(x):
        return lax.reduce_window(x, -jnp.inf, lax.max,
                                 (1, 1, 2, 2), (1, 1, 2, 2), "VALID")

    y = maxpool2_ref(jax.nn.relu(conv2d(x_nchw, params["w1"], params["b1"])))
    y = maxpool2_ref(jax.nn.relu(conv2d(y, params["w2"], params["b2"])))
    feats = y.reshape(y.shape[0], -1)
    out = feats @ params["w_out"] + params["b_out"]
    return out, feats


if __name__ == "__main__":
    key = jax.random.PRNGKey(0)
    pkey, xkey = jax.random.split(key)
    params = init_params(pkey)
    x = jax.random.normal(xkey, (2, 1, 28, 28), jnp.float32)        # MNIST-sized, batch=2

    out, feats = cnn_forward(params, x)
    out, feats = jax.block_until_ready((out, feats))

    assert out.shape == (2, 10) and feats.shape == (2, 32 * 7 * 7)

    # bf16 MXU operands / bf16 activation storage with f32 accumulation -> compare
    # against the f32 reference with a correspondingly loose tolerance.
    ref_out, ref_feats = _reference_forward(params, x)
    np.testing.assert_allclose(np.asarray(out), np.asarray(ref_out), rtol=3e-2, atol=3e-2)
    np.testing.assert_allclose(np.asarray(feats), np.asarray(ref_feats), rtol=3e-2, atol=3e-2)

    print("KERNEL_OK")
</pallas_src>

<mosaic_0001>
module attributes {stable_mosaic.version = 11 : i64} {
  func.func @kernel(%arg0: i32, %arg1: memref<48x128xbf16, #tpu.memory_space<vmem>>, %arg2: memref<640x512xbf16, #tpu.memory_space<vmem>>, %arg3: memref<1x512xf32, #tpu.memory_space<vmem>>, %arg4: memref<32x512xbf16, #tpu.memory_space<vmem>>, %arg5: memref<32x640xbf16, #tpu.memory_space<vmem>>) attributes {dimension_semantics = [#tpu.dimension_semantics<parallel>], iteration_bounds = array<i64: 2>, scalar_prefetch = 0 : i64, scratch_operands = 1 : i64, tpu.core_type = #tpu.core_type<tc>, window_params = [{transform_indices = @transform_0, window_bounds = array<i64: 48, 128>}, {pipeline_mode = #tpu.pipeline_mode<synchronous>, transform_indices = @transform_1, window_bounds = array<i64: 640, 512>}, {pipeline_mode = #tpu.pipeline_mode<synchronous>, transform_indices = @transform_2, window_bounds = array<i64: 1, 512>}, {transform_indices = @transform_3, window_bounds = array<i64: 32, 512>}]} {
    %c0 = arith.constant 0 : index
    %c0_0 = arith.constant 0 : index
    %0 = vector.load %arg1[%c0, %c0_0] : memref<48x128xbf16, #tpu.memory_space<vmem>>, vector<32x128xbf16>
    %c0_1 = arith.constant 0 : index
    %c0_2 = arith.constant 0 : index
    %1 = vector.load %arg5[%c0_1, %c0_2] : memref<32x640xbf16, #tpu.memory_space<vmem>>, vector<32x128xbf16>
    tpu.vector_store %arg5[%c0_1, %c0_2], %0 {strides = array<i32>} : memref<32x640xbf16, #tpu.memory_space<vmem>>, vector<32x128xbf16>,
    %c1 = arith.constant 1 : index
    %c0_3 = arith.constant 0 : index
    %2 = vector.load %arg1[%c1, %c0_3] : memref<48x128xbf16, #tpu.memory_space<vmem>>, vector<32x128xbf16>
    %c0_4 = arith.constant 0 : index
    %c128 = arith.constant 128 : index
    %3 = vector.load %arg5[%c0_4, %c128] : memref<32x640xbf16, #tpu.memory_space<vmem>>, vector<32x128xbf16>
    tpu.vector_store %arg5[%c0_4, %c128], %2 {strides = array<i32>} : memref<32x640xbf16, #tpu.memory_space<vmem>>, vector<32x128xbf16>,
    %c2 = arith.constant 2 : index
    %c0_5 = arith.constant 0 : index
    %4 = vector.load %arg1[%c2, %c0_5] : memref<48x128xbf16, #tpu.memory_space<vmem>>, vector<32x128xbf16>
    %c0_6 = arith.constant 0 : index
    %c256 = arith.constant 256 : index
    %5 = vector.load %arg5[%c0_6, %c256] : memref<32x640xbf16, #tpu.memory_space<vmem>>, vector<32x128xbf16>
    tpu.vector_store %arg5[%c0_6, %c256], %4 {strides = array<i32>} : memref<32x640xbf16, #tpu.memory_space<vmem>>, vector<32x128xbf16>,
    %c3 = arith.constant 3 : index
    %c0_7 = arith.constant 0 : index
    %6 = vector.load %arg1[%c3, %c0_7] : memref<48x128xbf16, #tpu.memory_space<vmem>>, vector<32x128xbf16>
    %c0_8 = arith.constant 0 : index
    %c384 = arith.constant 384 : index
    %7 = vector.load %arg5[%c0_8, %c384] : memref<32x640xbf16, #tpu.memory_space<vmem>>, vector<32x128xbf16>
    tpu.vector_store %arg5[%c0_8, %c384], %6 {strides = array<i32>} : memref<32x640xbf16, #tpu.memory_space<vmem>>, vector<32x128xbf16>,
    %c4 = arith.constant 4 : index
    %c0_9 = arith.constant 0 : index
    %8 = vector.load %arg1[%c4, %c0_9] : memref<48x128xbf16, #tpu.memory_space<vmem>>, vector<32x128xbf16>
    %c0_10 = arith.constant 0 : index
    %c512 = arith.constant 512 : index
    %9 = vector.load %arg5[%c0_10, %c512] : memref<32x640xbf16, #tpu.memory_space<vmem>>, vector<32x128xbf16>
    tpu.vector_store %arg5[%c0_10, %c512], %8 {strides = array<i32>} : memref<32x640xbf16, #tpu.memory_space<vmem>>, vector<32x128xbf16>,
    %c0_11 = arith.constant 0 : index
    %c0_12 = arith.constant 0 : index
    %10 = vector.load %arg5[%c0_11, %c0_12] : memref<32x640xbf16, #tpu.memory_space<vmem>>, vector<32x640xbf16>
    %c0_13 = arith.constant 0 : index
    %c0_14 = arith.constant 0 : index
    %11 = vector.load %arg2[%c0_13, %c0_14] : memref<640x512xbf16, #tpu.memory_space<vmem>>, vector<640x512xbf16>
    %cst = arith.constant dense<0.000000e+00> : vector<32x512xf32>
    %12 = tpu.matmul %10, %11, %cst {dimension_numbers = #tpu.dot_dimension_numbers<[1], [0], [0], [1], [0, 0, 1, 1], [], []>} : vector<32x640xbf16>, vector<640x512xbf16>, vector<32x512xf32> -> vector<32x512xf32>
    %c0_15 = arith.constant 0 : index
    %c0_16 = arith.constant 0 : index
    %13 = vector.load %arg3[%c0_15, %c0_16] : memref<1x512xf32, #tpu.memory_space<vmem>>, vector<1x512xf32>
    %14 = vector.broadcast %13 : vector<1x512xf32> to vector<32x512xf32>
    %15 = arith.addf %12, %14 : vector<32x512xf32>
    %cst_17 = arith.constant 0.000000e+00 : f32
    %16 = vector.broadcast %cst_17 : f32 to vector<32x512xf32>
    %17 = arith.maximumf %15, %16 : vector<32x512xf32>
    %18 = arith.truncf %17 : vector<32x512xf32> to vector<32x512xbf16>
    %c0_18 = arith.constant 0 : index
    %c0_19 = arith.constant 0 : index
    %19 = vector.load %arg4[%c0_18, %c0_19] : memref<32x512xbf16, #tpu.memory_space<vmem>>, vector<32x512xbf16>
    tpu.vector_store %arg4[%c0_18, %c0_19], %18 {strides = array<i32>} : memref<32x512xbf16, #tpu.memory_space<vmem>>, vector<32x512xbf16>,
    return
  }
  func.func @transform_0(%arg0: i32) -> (i32, i32) {
    %c0_i32 = arith.constant 0 : i32
    %c0_i32_0 = arith.constant 0 : i32
    return %arg0, %c0_i32 : i32, i32
  }
  func.func @transform_1(%arg0: i32) -> (i32, i32) {
    %c0_i32 = arith.constant 0 : i32
    %c0_i32_0 = arith.constant 0 : i32
    %c0_i32_1 = arith.constant 0 : i32
    return %c0_i32, %c0_i32_0 : i32, i32
  }
  func.func @transform_2(%arg0: i32) -> (i32, i32) {
    %c0_i32 = arith.constant 0 : i32
    %c0_i32_0 = arith.constant 0 : i32
    %c0_i32_1 = arith.constant 0 : i32
    return %c0_i32, %c0_i32_0 : i32, i32
  }
  func.func @transform_3(%arg0: i32) -> (i32, i32) {
    %c0_i32 = arith.constant 0 : i32
    %c0_i32_0 = arith.constant 0 : i32
    return %arg0, %c0_i32 : i32, i32
  }
}

module attributes {stable_mosaic.version = 11 : i64} {
  func.func @kernel(%arg0: i32, %arg1: memref<48x384xbf16, #tpu.memory_space<vmem>>, %arg2: memref<1920x512xbf16, #tpu.memory_space<vmem>>, %arg3: memref<1x512xf32, #tpu.memory_space<vmem>>, %arg4: memref<32x512xbf16, #tpu.memory_space<vmem>>, %arg5: memref<32x1920xbf16, #tpu.memory_space<vmem>>) attributes {dimension_semantics = [#tpu.dimension_semantics<parallel>], iteration_bounds = array<i64: 2>, scalar_prefetch = 0 : i64, scratch_operands = 1 : i64, tpu.core_type = #tpu.core_type<tc>, window_params = [{transform_indices = @transform_0, window_bounds = array<i64: 48, 384>}, {pipeline_mode = #tpu.pipeline_mode<synchronous>, transform_indices = @transform_1, window_bounds = array<i64: 1920, 512>}, {pipeline_mode = #tpu.pipeline_mode<synchronous>, transform_indices = @transform_2, window_bounds = array<i64: 1, 512>}, {transform_indices = @transform_3, window_bounds = array<i64: 32, 512>}]} {
    %c0 = arith.constant 0 : index
    %c0_0 = arith.constant 0 : index
    %0 = vector.load %arg1[%c0, %c0_0] : memref<48x384xbf16, #tpu.memory_space<vmem>>, vector<32x384xbf16>
    %c0_1 = arith.constant 0 : index
    %c0_2 = arith.constant 0 : index
    %1 = vector.load %arg5[%c0_1, %c0_2] : memref<32x1920xbf16, #tpu.memory_space<vmem>>, vector<32x384xbf16>
    tpu.vector_store %arg5[%c0_1, %c0_2], %0 {strides = array<i32>} : memref<32x1920xbf16, #tpu.memory_space<vmem>>, vector<32x384xbf16>,
    %c1 = arith.constant 1 : index
    %c0_3 = arith.constant 0 : index
    %2 = vector.load %arg1[%c1, %c0_3] : memref<48x384xbf16, #tpu.memory_space<vmem>>, vector<32x384xbf16>
    %c0_4 = arith.constant 0 : index
    %c384 = arith.constant 384 : index
    %3 = vector.load %arg5[%c0_4, %c384] : memref<32x1920xbf16, #tpu.memory_space<vmem>>, vector<32x384xbf16>
    tpu.vector_store %arg5[%c0_4, %c384], %2 {strides = array<i32>} : memref<32x1920xbf16, #tpu.memory_space<vmem>>, vector<32x384xbf16>,
    %c2 = arith.constant 2 : index
    %c0_5 = arith.constant 0 : index
    %4 = vector.load %arg1[%c2, %c0_5] : memref<48x384xbf16, #tpu.memory_space<vmem>>, vector<32x384xbf16>
    %c0_6 = arith.constant 0 : index
    %c768 = arith.constant 768 : index
    %5 = vector.load %arg5[%c0_6, %c768] : memref<32x1920xbf16, #tpu.memory_space<vmem>>, vector<32x384xbf16>
    tpu.vector_store %arg5[%c0_6, %c768], %4 {strides = array<i32>} : memref<32x1920xbf16, #tpu.memory_space<vmem>>, vector<32x384xbf16>,
    %c3 = arith.constant 3 : index
    %c0_7 = arith.constant 0 : index
    %6 = vector.load %arg1[%c3, %c0_7] : memref<48x384xbf16, #tpu.memory_space<vmem>>, vector<32x384xbf16>
    %c0_8 = arith.constant 0 : index
    %c1152 = arith.constant 1152 : index
    %7 = vector.load %arg5[%c0_8, %c1152] : memref<32x1920xbf16, #tpu.memory_space<vmem>>, vector<32x384xbf16>
    tpu.vector_store %arg5[%c0_8, %c1152], %6 {strides = array<i32>} : memref<32x1920xbf16, #tpu.memory_space<vmem>>, vector<32x384xbf16>,
    %c4 = arith.constant 4 : index
    %c0_9 = arith.constant 0 : index
    %8 = vector.load %arg1[%c4, %c0_9] : memref<48x384xbf16, #tpu.memory_space<vmem>>, vector<32x384xbf16>
    %c0_10 = arith.constant 0 : index
    %c1536 = arith.constant 1536 : index
    %9 = vector.load %arg5[%c0_10, %c1536] : memref<32x1920xbf16, #tpu.memory_space<vmem>>, vector<32x384xbf16>
    tpu.vector_store %arg5[%c0_10, %c1536], %8 {strides = array<i32>} : memref<32x1920xbf16, #tpu.memory_space<vmem>>, vector<32x384xbf16>,
    %c0_11 = arith.constant 0 : index
    %c0_12 = arith.constant 0 : index
    %10 = vector.load %arg5[%c0_11, %c0_12] : memref<32x1920xbf16, #tpu.memory_space<vmem>>, vector<32x1920xbf16>
    %c0_13 = arith.constant 0 : index
    %c0_14 = arith.constant 0 : index
    %11 = vector.load %arg2[%c0_13, %c0_14] : memref<1920x512xbf16, #tpu.memory_space<vmem>>, vector<1920x512xbf16>
    %cst = arith.constant dense<0.000000e+00> : vector<32x512xf32>
    %12 = tpu.matmul %10, %11, %cst {dimension_numbers = #tpu.dot_dimension_numbers<[1], [0], [0], [1], [0, 0, 1, 1], [], []>} : vector<32x1920xbf16>, vector<1920x512xbf16>, vector<32x512xf32> -> vector<32x512xf32>
    %c0_15 = arith.constant 0 : index
    %c0_16 = arith.constant 0 : index
    %13 = vector.load %arg3[%c0_15, %c0_16] : memref<1x512xf32, #tpu.memory_space<vmem>>, vector<1x512xf32>
    %14 = vector.broadcast %13 : vector<1x512xf32> to vector<32x512xf32>
    %15 = arith.addf %12, %14 : vector<32x512xf32>
    %cst_17 = arith.constant 0.000000e+00 : f32
    %16 = vector.broadcast %cst_17 : f32 to vector<32x512xf32>
    %17 = arith.maximumf %15, %16 : vector<32x512xf32>
    %18 = arith.truncf %17 : vector<32x512xf32> to vector<32x512xbf16>
    %c0_18 = arith.constant 0 : index
    %c0_19 = arith.constant 0 : index
    %19 = vector.load %arg4[%c0_18, %c0_19] : memref<32x512xbf16, #tpu.memory_space<vmem>>, vector<32x512xbf16>
    tpu.vector_store %arg4[%c0_18, %c0_19], %18 {strides = array<i32>} : memref<32x512xbf16, #tpu.memory_space<vmem>>, vector<32x512xbf16>,
    return
  }
  func.func @transform_0(%arg0: i32) -> (i32, i32) {
    %c0_i32 = arith.constant 0 : i32
    %c0_i32_0 = arith.constant 0 : i32
    return %arg0, %c0_i32 : i32, i32
  }
  func.func @transform_1(%arg0: i32) -> (i32, i32) {
    %c0_i32 = arith.constant 0 : i32
    %c0_i32_0 = arith.constant 0 : i32
    %c0_i32_1 = arith.constant 0 : i32
    return %c0_i32, %c0_i32_0 : i32, i32
  }
  func.func @transform_2(%arg0: i32) -> (i32, i32) {
    %c0_i32 = arith.constant 0 : i32
    %c0_i32_0 = arith.constant 0 : i32
    %c0_i32_1 = arith.constant 0 : i32
    return %c0_i32, %c0_i32_0 : i32, i32
  }
  func.func @transform_3(%arg0: i32) -> (i32, i32) {
    %c0_i32 = arith.constant 0 : i32
    %c0_i32_0 = arith.constant 0 : i32
    return %arg0, %c0_i32 : i32, i32
  }
}

module attributes {stable_mosaic.version = 11 : i64} {
  func.func @_linear_kernel(%arg0: i32, %arg1: memref<16x1568xbf16, #tpu.memory_space<vmem>>, %arg2: memref<1568x128xbf16, #tpu.memory_space<vmem>>, %arg3: memref<1x128xf32, #tpu.memory_space<vmem>>, %arg4: memref<16x128xf32, #tpu.memory_space<vmem>>) attributes {dimension_semantics = [#tpu.dimension_semantics<parallel>], iteration_bounds = array<i64: 1>, scalar_prefetch = 0 : i64, scratch_operands = 0 : i64, tpu.core_type = #tpu.core_type<tc>, window_params = [{transform_indices = @transform_0, window_bounds = array<i64: 16, 1568>}, {pipeline_mode = #tpu.pipeline_mode<synchronous>, transform_indices = @transform_1, window_bounds = array<i64: 1568, 128>}, {pipeline_mode = #tpu.pipeline_mode<synchronous>, transform_indices = @transform_2, window_bounds = array<i64: 1, 128>}, {transform_indices = @transform_3, window_bounds = array<i64: 16, 128>}]} {
    %c0 = arith.constant 0 : index
    %c0_0 = arith.constant 0 : index
    %0 = vector.load %arg1[%c0, %c0_0] : memref<16x1568xbf16, #tpu.memory_space<vmem>>, vector<16x1568xbf16>
    %c0_1 = arith.constant 0 : index
    %c0_2 = arith.constant 0 : index
    %1 = vector.load %arg2[%c0_1, %c0_2] : memref<1568x128xbf16, #tpu.memory_space<vmem>>, vector<1568x128xbf16>
    %cst = arith.constant dense<0.000000e+00> : vector<16x128xf32>
    %2 = tpu.matmul %0, %1, %cst {dimension_numbers = #tpu.dot_dimension_numbers<[1], [0], [0], [1], [0, 0, 1, 1], [], []>} : vector<16x1568xbf16>, vector<1568x128xbf16>, vector<16x128xf32> -> vector<16x128xf32>
    %c0_3 = arith.constant 0 : index
    %c0_4 = arith.constant 0 : index
    %3 = vector.load %arg3[%c0_3, %c0_4] : memref<1x128xf32, #tpu.memory_space<vmem>>, vector<1x128xf32>
    %4 = vector.broadcast %3 : vector<1x128xf32> to vector<16x128xf32>
    %5 = arith.addf %2, %4 : vector<16x128xf32>
    %c0_5 = arith.constant 0 : index
    %c0_6 = arith.constant 0 : index
    %6 = vector.load %arg4[%c0_5, %c0_6] : memref<16x128xf32, #tpu.memory_space<vmem>>, vector<16x128xf32>
    tpu.vector_store %arg4[%c0_5, %c0_6], %5 {strides = array<i32>} : memref<16x128xf32, #tpu.memory_space<vmem>>, vector<16x128xf32>,
    return
  }
  func.func @transform_0(%arg0: i32) -> (i32, i32) {
    %c0_i32 = arith.constant 0 : i32
    %c0_i32_0 = arith.constant 0 : i32
    return %arg0, %c0_i32 : i32, i32
  }
  func.func @transform_1(%arg0: i32) -> (i32, i32) {
    %c0_i32 = arith.constant 0 : i32
    %c0_i32_0 = arith.constant 0 : i32
    %c0_i32_1 = arith.constant 0 : i32
    return %c0_i32, %c0_i32_0 : i32, i32
  }
  func.func @transform_2(%arg0: i32) -> (i32, i32) {
    %c0_i32 = arith.constant 0 : i32
    %c0_i32_0 = arith.constant 0 : i32
    %c0_i32_1 = arith.constant 0 : i32
    return %c0_i32, %c0_i32_0 : i32, i32
  }
  func.func @transform_3(%arg0: i32) -> (i32, i32) {
    %c0_i32 = arith.constant 0 : i32
    %c0_i32_0 = arith.constant 0 : i32
    return %arg0, %c0_i32 : i32, i32
  }
}

</mosaic_0001>

<llo_original>
// kernel: tile.13
$region0: #{tile.13}
  #allocation0 [shape = 's32[1]{0}', space=sflag, size = 0x4, scoped, tag = 'scoped memory for tile.13']
  %s0 = inlined_call_operand.vmem [shape: f32[16], index: 0, kind: input, shape index: {}]
  %s1 = inlined_call_operand.vmem [shape: f32[28,16], index: 1, kind: output, shape index: {}]
  // Predicated region
  $region2: #{tile.13} parent=0 // pred_check
    _
  $region3: #{tile.13} parent=0 // pred_check_branch
    %3 = sbr.rel (0) target = $region5
  $region4: #{tile.13} parent=0 // pred_region
    _
  $region5: #{tile.13} parent=0 // pred_fallthru
    _
  %v4 = vld [vmem:[%s0] ss:$0 sm:$0xff]
  %5 = vst [vmem:[%s1] sm:$0xff] %v4
  %s6 = scalar_lea.vmem %s1, 8
  %7 = vst [vmem:[%s6] sm:$0xff] %v4
  %s8 = scalar_lea.vmem %s1, 16
  %9 = vst [vmem:[%s8] sm:$0xff] %v4
  %s10 = scalar_lea.vmem %s1, 24
  %11 = vst [vmem:[%s10] sm:$0xff] %v4

// kernel: tile.14
$region0: #{tile.14}
  %s0 = inlined_call_operand.vmem [shape: f32[28,16], index: 0, kind: input, shape index: {}]
  %s1 = inlined_call_operand.vmem [shape: f32[448], index: 1, kind: output, shape index: {}]
  $region1: #{tile.14} parent=0
    #allocation0 [shape = 'u8[4096]{0}', space=vmem, size = 0x1000, scoped, tag = 'scoped mem for output reshape']
    %v2 = vld [vmem:[%s0] ss:$8 sm:$0xf]
    %vm3 = vcmask 130048
    %4 = vst.msk [vmem:[#allocation0] sm:$0xf] %vm3, %v2
    %s5 = scalar_lea.vmem %s0, 7
    %v6 = vld [vmem:[%s5] ss:$8 sm:$0x7]
    %7 = vrot.lane.b32.xlu0 %v6, 112
    %v8 = vpop.permute.xlu0 %7
    %vm9 = vcmask 1048448
    %10 = vst.msk [vmem:[#allocation0] sm:$0x7] %vm9, %v8
    %s11 = scalar_lea.vmem %s0, 6
    %v12 = vld [vmem:[%s11] ss:$8 sm:$0x7]
    %13 = vrot.lane.b32.xlu0 %v12, 96
    %v14 = vpop.permute.xlu0 %13
    %vm15 = vcmask 917248
    %16 = vst.msk [vmem:[#allocation0] sm:$0x7] %vm15, %v14
    %s17 = scalar_lea.vmem %s0, 5
    %v18 = vld [vmem:[%s17] ss:$8 sm:$0x7]
    %19 = vrot.lane.b32.xlu0 %v18, 80
    %v20 = vpop.permute.xlu0 %19
    %vm21 = vcmask 786048
    %22 = vst.msk [vmem:[#allocation0] sm:$0x7] %vm21, %v20
    %s23 = scalar_lea.vmem %s0, 4
    %v24 = vld [vmem:[%s23] ss:$8 sm:$0x7]
    %25 = vrot.lane.b32.xlu0 %v24, 64
    %v26 = vpop.permute.xlu0 %25
    %vm27 = vcmask 654848
    %28 = vst.msk [vmem:[#allocation0] sm:$0x7] %vm27, %v26
    %s29 = scalar_lea.vmem %s0, 3
    %v30 = vld [vmem:[%s29] ss:$8 sm:$0xf]
    %31 = vrot.lane.b32.xlu0 %v30, 48
    %v32 = vpop.permute.xlu0 %31
    %vm33 = vcmask 523648
    %34 = vst.msk [vmem:[#allocation0] sm:$0xf] %vm33, %v32
    %s35 = scalar_lea.vmem %s0, 2
    %v36 = vld [vmem:[%s35] ss:$8 sm:$0xf]
    %37 = vrot.lane.b32.xlu0 %v36, 32
    %v38 = vpop.permute.xlu0 %37
    %vm39 = vcmask 392448
    %40 = vst.msk [vmem:[#allocation0] sm:$0xf] %vm39, %v38
    %s41 = scalar_lea.vmem %s0, 1
    %v42 = vld [vmem:[%s41] ss:$8 sm:$0xf]
    %43 = vrot.lane.b32.xlu0 %v42, 16
    %v44 = vpop.permute.xlu0 %43
    %vm45 = vcmask 261248
    %46 = vst.msk [vmem:[#allocation0] sm:$0xf] %vm45, %v44
    %s48 = sshllo.u32 0, 4
    %v50 = vld [vmem:[#allocation0] sm:%s48]
    %s51 = sshllo.u32 0, 4
    %52 = vst [vmem:[%s1] sm:%s51] %v50

// kernel: cnn_forward.3
$region0: #{cnn_forward.3}
  #allocation0 [shape = 'u32[]', space=smem, size = 0x4, offset = 0x4, fixed_abs, tag = 'smem constant byte address 0x4 - core index']
  #allocation1 [shape = 'u32[144,128]{1,0:T(1,128)}', space=vmem, size = 0x12000, scoped, tag = 'internal scratch']
  #allocation2 [shape = 'bf16[32,640]{1,0:T(16,128)(2,1)}', space=vmem, size = 0xa000, scoped, tag = 'scratch operand']
  %s0 = inlined_call_operand.vmem [shape: bf16[96,128], index: 0, kind: input, shape index: {}]
  %s1 = inlined_call_operand.vmem [shape: bf16[640,512], index: 1, kind: input, shape index: {}]
  %s2 = inlined_call_operand.vmem [shape: f32[1,512], index: 2, kind: input, shape index: {}]
  %s3 = inlined_call_operand.vmem [shape: bf16[64,512], index: 3, kind: output, shape index: {}]
  %s4 = sld [smem:[#allocation0]]
  $region45: #{cnn_forward.3} parent=0
    _
  %s6 = ssub.s32 1, %s4
  %s7 = scalar_select 0, %s6, %s4
  loop: start=0, step=1, limit=4
  $region2: #{cnn_forward.3} parent=0 // loop_pre_header
    _
  $region3: #{cnn_forward.3} parent=0 // loop_header
    %s9 = sphi 0, %s13
    %p10 = scmp.ge.s32.totalorder %s9, 4
    %s19 = sphi 0, %s21
    %s22 = sphi 0, %s19
    %s23 = sphi 0, %s22
    %s39 = sphi 0, %s23
    %s43 = sphi 0, %s43
    %s45 = sphi 0, %s43
    %s46 = sphi 0, %s45
    %s60 = sphi 0, %s46
    %s64 = sphi 0, %s64
    %s66 = sphi 0, %s64
    %s67 = sphi 0, %s66
    %s81 = sphi 0, %s67
    %s87 = sphi 0, %s89
    %s90 = sphi 0, %s87
    %s91 = sphi 0, %s90
    %s107 = sphi 0, %s91
  $region4: #{cnn_forward.3} parent=0 // loop_header_branch
    %12 = sbr.rel (%p10) target = $region8
  $region5: #{cnn_forward.3} parent=0 // loop_body
    %s14 = ssub.s32 %s9, 1
    %s15 = ssub.s32 %s9, 2
    %s16 = sadd.s32 %s9, 1
    %s17 = ssub.s32 %s9, %s16
    %p18 = scmp.eq.s32.totalorder %s17, 0
    %s20 = sadd.s32 %s19, 1
    %s21 = scalar_select %p18, %s19, %s20
    %p24 = pneg %p18
    %p25 = scmp.eq.s32.totalorder %s9, 1
    %p26 = por %p24, %p25
    %p27 = scmp.ne.s32.totalorder %s19, %s22
    %p28 = scmp.eq.s32.totalorder %s9, 0
    %p29 = por %p27, %p28
    %p30 = scmp.ne.s32.totalorder %s19, %s22
    %p31 = scmp.eq.s32.totalorder %s14, 1
    %p32 = por %p30, %p31
    %p33 = scmp.ne.s32.totalorder %s22, %s23
    %p34 = scmp.eq.s32.totalorder %s14, 0
    %p35 = por %p33, %p34
    %p36 = scmp.ne.s32.totalorder %s22, %s23
    %p37 = scmp.eq.s32.totalorder %s15, 1
    %p38 = por %p36, %p37
    %p40 = scmp.ne.s32.totalorder %s23, %s39
    %p41 = scmp.eq.s32.totalorder %s15, 0
    %p42 = por %p40, %p41
    %s44 = sadd.s32 %s43, 1
    %p47 = scmp.eq.s32.totalorder %s9, 1
    %p48 = scmp.ne.s32.totalorder %s43, %s45
    %p49 = scmp.eq.s32.totalorder %s9, 0
    %p50 = por %p48, %p49
    %p51 = scmp.ne.s32.totalorder %s43, %s45
    %p52 = scmp.eq.s32.totalorder %s14, 1
    %p53 = por %p51, %p52
    %p54 = scmp.ne.s32.totalorder %s45, %s46
    %p55 = scmp.eq.s32.totalorder %s14, 0
    %p56 = por %p54, %p55
    %p57 = scmp.ne.s32.totalorder %s45, %s46
    %p58 = scmp.eq.s32.totalorder %s15, 1
    %p59 = por %p57, %p58
    %p61 = scmp.ne.s32.totalorder %s46, %s60
    %p62 = scmp.eq.s32.totalorder %s15, 0
    %p63 = por %p61, %p62
    %s65 = sadd.s32 %s64, 1
    %p68 = scmp.eq.s32.totalorder %s9, 1
    %p69 = scmp.ne.s32.totalorder %s64, %s66
    %p70 = scmp.eq.s32.totalorder %s9, 0
    %p71 = por %p69, %p70
    %p72 = scmp.ne.s32.totalorder %s64, %s66
    %p73 = scmp.eq.s32.totalorder %s14, 1
    %p74 = por %p72, %p73
    %p75 = scmp.ne.s32.totalorder %s66, %s67
    %p76 = scmp.eq.s32.totalorder %s14, 0
    %p77 = por %p75, %p76
    %p78 = scmp.ne.s32.totalorder %s66, %s67
    %p79 = scmp.eq.s32.totalorder %s15, 1
    %p80 = por %p78, %p79
    %p82 = scmp.ne.s32.totalorder %s67, %s81
    %p83 = scmp.eq.s32.totalorder %s15, 0
    %p84 = por %p82, %p83
    %s85 = ssub.s32 %s9, %s16
    %p86 = scmp.eq.s32.totalorder %s85, 0
    %s88 = sadd.s32 %s87, 1
    %s89 = scalar_select %p86, %s87, %s88
    %p92 = pneg %p86
    %p93 = scmp.eq.s32.totalorder %s9, 1
    %p94 = por %p92, %p93
    %p95 = scmp.ne.s32.totalorder %s87, %s90
    %p96 = scmp.eq.s32.totalorder %s9, 0
    %p97 = por %p95, %p96
    %p98 = scmp.ne.s32.totalorder %s87, %s90
    %p99 = scmp.eq.s32.totalorder %s14, 1
    %p100 = por %p98, %p99
    %p101 = scmp.ne.s32.totalorder %s90, %s91
    %p102 = scmp.eq.s32.totalorder %s14, 0
    %p103 = por %p101, %p102
    %p104 = scmp.ne.s32.totalorder %s90, %s91
    %p105 = scmp.eq.s32.totalorder %s15, 1
    %p106 = por %p104, %p105
    %p108 = scmp.ne.s32.totalorder %s91, %s107
    %p109 = scmp.eq.s32.totalorder %s15, 0
    %p110 = por %p108, %p109
    %p111 = scmp.le.s32.totalorder 1, %s9
    %p112 = scmp.lt.s32.totalorder %s9, 3
    %p113 = pnand %p111, %p112
    %p114 = pneg %p113
    // Predicated region
    $region9: #{cnn_forward.3} parent=5 // pred_check
      _
    $region10: #{cnn_forward.3} parent=5 // pred_check_branch
      %116 = sbr.rel (%p113) target = $region12
    $region11: #{cnn_forward.3} parent=5 // pred_region
      %s117 = ssub.s32 %s9, 1
      // Predicated region
      $region13: #{cnn_forward.3} parent=11 // pred_check
        %p118 = pneg %p56
      $region14: #{cnn_forward.3} parent=11 // pred_check_branch
        %120 = sbr.rel (%p118) target = $region16
      $region15: #{cnn_forward.3} parent=11 // pred_region
        _
      $region16: #{cnn_forward.3} parent=11 // pred_fallthru
        _
      // Predicated region
      $region17: #{cnn_forward.3} parent=11 // pred_check
        %p121 = pneg %p77
      $region18: #{cnn_forward.3} parent=11 // pred_check_branch
        %123 = sbr.rel (%p121) target = $region20
      $region19: #{cnn_forward.3} parent=11 // pred_region
        _
      $region20: #{cnn_forward.3} parent=11 // pred_fallthru
        _
    $region12: #{cnn_forward.3} parent=5 // pred_fallthru
      _
    %p124 = scmp.lt.s32.totalorder %s9, 2
    // Predicated region
    $region21: #{cnn_forward.3} parent=5 // pred_check
      %p125 = pneg %p124
    $region22: #{cnn_forward.3} parent=5 // pred_check_branch
      %127 = sbr.rel (%p125) target = $region24
    $region23: #{cnn_forward.3} parent=5 // pred_region
      // Predicated region
      $region25: #{cnn_forward.3} parent=23 // pred_check
        %p128 = pneg %p29
      $region26: #{cnn_forward.3} parent=23 // pred_check_branch
        %130 = sbr.rel (%p128) target = $region28
      $region27: #{cnn_forward.3} parent=23 // pred_region
        %s131 = smul.u32 6, %s9
        %p132 = scmp.lt.s32.totalorder %s131, 11
        %s133 = scalar_select %p132, %s131, 11
        %s134 = smul.addr %s133, 4
        %s135 = scalar_lea.vmem %s0, %s134
        %s136 = smul.u32 6, %s9
      $region28: #{cnn_forward.3} parent=23 // pred_fallthru
        _
    $region24: #{cnn_forward.3} parent=5 // pred_fallthru
      _
    %p137 = scmp.le.s32.totalorder 1, %s9
    %p138 = scmp.lt.s32.totalorder %s9, 3
    %p139 = pnand %p137, %p138
    %p140 = pneg %p139
    // Predicated region
    $region29: #{cnn_forward.3} parent=5 // pred_check
      _
    $region30: #{cnn_forward.3} parent=5 // pred_check_branch
      %142 = sbr.rel (%p139) target = $region32
    $region31: #{cnn_forward.3} parent=5 // pred_region
      %s143 = ssub.s32 %s9, 1
      %s144 = smul.u32 6, %s14
      %p145 = scmp.lt.s32.totalorder %s144, 11
      %s146 = scalar_select %p145, %s144, 11
      %s147 = smul.addr %s146, 4
      %s148 = scalar_lea.vmem %s0, %s147
      %p149 = pneg %p35
      %p150 = pneg %p32
      %p151 = pneg %p56
      %p152 = pneg %p53
      %p153 = pneg %p77
      %p154 = pneg %p74
      %p155 = pneg %p103
      %p156 = pneg %p100
      %s157 = smul.u32 4, %s14
      %p158 = scmp.lt.s32.totalorder %s157, 7
      %s159 = scalar_select %p158, %s157, 7
      %s160 = smul.addr %s159, 4
      %s161 = smul.addr %s160, 4
      %s162 = scalar_lea.vmem %s3, %s161
      %s163 = smul.u32 6, %s14
      %p164 = scmp.lt.s32.totalorder %s163, 11
      %s165 = scalar_select %p164, %s163, 11
      %s166 = smul.addr %s165, 4
      %s167 = scalar_lea.vmem %s0, %s166
      %s168 = smul.u32 6, %s14
      %s169 = smul.u32 4, %s14
      %p170 = scmp.lt.s32.totalorder %s169, 7
      %s171 = scalar_select %p170, %s169, 7
      %s172 = smul.addr %s171, 4
      %s173 = smul.addr %s172, 4
      %s174 = scalar_lea.vmem %s3, %s173
      %s175 = smul.u32 4, %s14
      %v177 = vld [vmem:[%s167] sm:$0xf]
      %v178 = vld [vmem:[%s167 + $0x4] sm:$0xf]
      %v179 = vld [vmem:[%s167 + $0x8] sm:$0xf]
      %v180 = vld [vmem:[%s167 + $0xc] sm:$0xf]
      %v185 = vunpack.c.l.b16 %v177
      %v186 = vunpack.c.l.b16 %v178
      %v187 = vunpack.c.l.b16 %v179
      %v188 = vunpack.c.l.b16 %v180
      %v189 = vpack.c.b16 %v186, %v185
      %v190 = vpack.c.b16 %v188, %v187
      %193 = vst [vmem:[#allocation2] sm:$0xff] %v189
      %194 = vst [vmem:[#allocation2 + $0x28] sm:$0xff] %v190
      %v195 = vld [vmem:[%s167] sm:$0xf]
      %v196 = vld [vmem:[%s167 + $0x4] sm:$0xf]
      %v197 = vld [vmem:[%s167 + $0x8] sm:$0xf]
      %v198 = vld [vmem:[%s167 + $0xc] sm:$0xf]
      %v199 = vld [vmem:[%s167 + $0x10] sm:$0x1]
      %v205 = vunpack.c.l.b16 %v195
      %v206 = vunpack.c.l.b16 %v196
      %v207 = vunpack.c.l.b16 %v197
      %v208 = vunpack.c.l.b16 %v198
      %v209 = vunpack.c.l.b16 %v199
      %v210 = vpack.c.b16 %v206, %v205
      %v211 = vpack.c.b16 %v208, %v207
      %v212 = vpack.c.b16 %v209, %v209
      %vm213 = vsmask.f32 7424
      %v215 = vshrl.u32 %v210, 16
      %v217 = vshll.u32 %v210, 16
      %v219 = vrot.slane %v217, 1
      %v220 = vor.u32 %v215, %v219
      %v222 = vshll.u32 %v211, 16
      %v224 = vrot.slane %v222, 1
      %v225 = vsel %vm213, %v220, %v224
      %v226 = vshrl.u32 %v211, 16
      %v228 = vor.u32 %v226, %v224
      %v230 = vshll.u32 %v212, 16
      %v232 = vrot.slane %v230, 1
      %v233 = vsel %vm213, %v228, %v232
      %236 = vst [vmem:[#allocation2 + $0x8] sm:$0xff] %v225
      %237 = vst [vmem:[#allocation2 + $0x30] sm:$0xff] %v233
      %v238 = vld [vmem:[%s167] sm:$0xe]
      %v239 = vld [vmem:[%s167 + $0x4] sm:$0xf]
      %v240 = vld [vmem:[%s167 + $0x8] sm:$0xf]
      %v241 = vld [vmem:[%s167 + $0xc] sm:$0xf]
      %v242 = vld [vmem:[%s167 + $0x10] sm:$0x1]
      %v248 = vunpack.c.l.b16 %v238
      %v249 = vunpack.c.l.b16 %v239
      %v250 = vunpack.c.l.b16 %v240
      %v251 = vunpack.c.l.b16 %v241
      %v252 = vunpack.c.l.b16 %v242
      %v253 = vpack.c.b16 %v249, %v248
      %v254 = vpack.c.b16 %v251, %v250
      %v255 = vpack.c.b16 %v252, %v252
      %vm256 = vcmask 1046528
      %v257 = vrot.slane %v253, 1
      %v258 = vrot.slane %v254, 1
      %v259 = vsel %vm256, %v257, %v258
      %v260 = vrot.slane %v255, 1
      %v261 = vsel %vm256, %v258, %v260
      %264 = vst [vmem:[#allocation2 + $0x10] sm:$0xff] %v259
      %265 = vst [vmem:[#allocation2 + $0x38] sm:$0xff] %v261
      %v266 = vld [vmem:[%s167] sm:$0xe]
      %v267 = vld [vmem:[%s167 + $0x4] sm:$0xf]
      %v268 = vld [vmem:[%s167 + $0x8] sm:$0xf]
      %v269 = vld [vmem:[%s167 + $0xc] sm:$0xf]
      %v270 = vld [vmem:[%s167 + $0x10] sm:$0x3]
      %v276 = vunpack.c.l.b16 %v266
      %v277 = vunpack.c.l.b16 %v267
      %v278 = vunpack.c.l.b16 %v268
      %v279 = vunpack.c.l.b16 %v269
      %v280 = vunpack.c.l.b16 %v270
      %v281 = vpack.c.b16 %v277, %v276
      %v282 = vpack.c.b16 %v279, %v278
      %v283 = vpack.c.b16 %v280, %v280
      %vm284 = vsmask.f32 6400
      %v286 = vshrl.u32 %v281, 16
      %v288 = vrot.slane %v286, 1
      %v289 = vshll.u32 %v281, 16
      %v291 = vrot.slane %v289, 2
      %v292 = vor.u32 %v288, %v291
      %v294 = vshrl.u32 %v282, 16
      %v296 = vrot.slane %v294, 1
      %v297 = vshll.u32 %v282, 16
      %v299 = vrot.slane %v297, 2
      %v300 = vor.u32 %v296, %v299
      %v301 = vsel %vm284, %v292, %v300
      %v303 = vshrl.u32 %v283, 16
      %v305 = vrot.slane %v303, 1
      %v306 = vshll.u32 %v283, 16
      %v308 = vrot.slane %v306, 2
      %v309 = vor.u32 %v305, %v308
      %v310 = vsel %vm284, %v300, %v309
      %313 = vst [vmem:[#allocation2 + $0x18] sm:$0xff] %v301
      %314 = vst [vmem:[#allocation2 + $0x40] sm:$0xff] %v310
      %v315 = vld [vmem:[%s167] sm:$0xc]
      %v316 = vld [vmem:[%s167 + $0x4] sm:$0xf]
      %v317 = vld [vmem:[%s167 + $0x8] sm:$0xf]
      %v318 = vld [vmem:[%s167 + $0xc] sm:$0xf]
      %v319 = vld [vmem:[%s167 + $0x10] sm:$0x3]
      %v325 = vunpack.c.l.b16 %v315
      %v326 = vunpack.c.l.b16 %v316
      %v327 = vunpack.c.l.b16 %v317
      %v328 = vunpack.c.l.b16 %v318
      %v329 = vunpack.c.l.b16 %v319
      %v330 = vpack.c.b16 %v326, %v325
      %v331 = vpack.c.b16 %v328, %v327
      %v332 = vpack.c.b16 %v329, %v329
      %vm333 = vcmask 1045504
      %v334 = vrot.slane %v330, 2
      %v335 = vrot.slane %v331, 2
      %v336 = vsel %vm333, %v334, %v335
      %v337 = vrot.slane %v332, 2
      %v338 = vsel %vm333, %v335, %v337
      %341 = vst [vmem:[#allocation2 + $0x20] sm:$0xff] %v336
      %342 = vst [vmem:[#allocation2 + $0x48] sm:$0xff] %v338
      %v343 = vld [vmem:[#allocation2] sm:$0xff]
      %v344 = vld [vmem:[#allocation2 + $0x8] sm:$0xff]
      %v345 = vld [vmem:[#allocation2 + $0x10] sm:$0xff]
      %v346 = vld [vmem:[#allocation2 + $0x18] sm:$0xff]
      %v347 = vld [vmem:[#allocation2 + $0x20] sm:$0xff]
      %v348 = vld [vmem:[#allocation2 + $0x28] sm:$0xff]
      %v349 = vld [vmem:[#allocation2 + $0x30] sm:$0xff]
      %v350 = vld [vmem:[#allocation2 + $0x38] sm:$0xff]
      %v351 = vld [vmem:[#allocation2 + $0x40] sm:$0xff]
      %v352 = vld [vmem:[#allocation2 + $0x48] sm:$0xff]
      %v353 = vld [vmem:[%s1] sm:$0xff]
      %v354 = vld [vmem:[%s1 + $0x8] sm:$0xff]
      %v355 = vld [vmem:[%s1 + $0x10] sm:$0xff]
      %v356 = vld [vmem:[%s1 + $0x18] sm:$0xff]
      %v357 = vld [vmem:[%s1 + $0x20] sm:$0xff]
      %v358 = vld [vmem:[%s1 + $0x28] sm:$0xff]
      %v359 = vld [vmem:[%s1 + $0x30] sm:$0xff]
      %v360 = vld [vmem:[%s1 + $0x38] sm:$0xff]
      %v361 = vld [vmem:[%s1 + $0x40] sm:$0xff]
      %v362 = vld [vmem:[%s1 + $0x48] sm:$0xff]
      %v363 = vld [vmem:[%s1 + $0x50] sm:$0xff]
      %v364 = vld [vmem:[%s1 + $0x58] sm:$0xff]
      %v365 = vld [vmem:[%s1 + $0x60] sm:$0xff]
      %v366 = vld [vmem:[%s1 + $0x68] sm:$0xff]
      %v367 = vld [vmem:[%s1 + $0x70] sm:$0xff]
      %v368 = vld [vmem:[%s1 + $0x78] sm:$0xff]
      %v369 = vld [vmem:[%s1 + $0x80] sm:$0xff]
      %v370 = vld [vmem:[%s1 + $0x88] sm:$0xff]
      %v371 = vld [vmem:[%s1 + $0x90] sm:$0xff]
      %v372 = vld [vmem:[%s1 + $0x98] sm:$0xff]
      %v373 = vld [vmem:[%s1 + $0xa0] sm:$0xff]
      %v374 = vld [vmem:[%s1 + $0xa8] sm:$0xff]
      %v375 = vld [vmem:[%s1 + $0xb0] sm:$0xff]
      %v376 = vld [vmem:[%s1 + $0xb8] sm:$0xff]
      %v377 = vld [vmem:[%s1 + $0xc0] sm:$0xff]
      %v378 = vld [vmem:[%s1 + $0xc8] sm:$0xff]
      %v379 = vld [vmem:[%s1 + $0xd0] sm:$0xff]
      %v380 = vld [vmem:[%s1 + $0xd8] sm:$0xff]
      %v381 = vld [vmem:[%s1 + $0xe0] sm:$0xff]
      %v382 = vld [vmem:[%s1 + $0xe8] sm:$0xff]
      %v383 = vld [vmem:[%s1 + $0xf0] sm:$0xff]
      %v384 = vld [vmem:[%s1 + $0xf8] sm:$0xff]
      %v385 = vld [vmem:[%s1 + $0x100] sm:$0xff]
      %v386 = vld [vmem:[%s1 + $0x108] sm:$0xff]
      %v387 = vld [vmem:[%s1 + $0x110] sm:$0xff]
      %v388 = vld [vmem:[%s1 + $0x118] sm:$0xff]
      %v389 = vld [vmem:[%s1 + $0x120] sm:$0xff]
      %v390 = vld [vmem:[%s1 + $0x128] sm:$0xff]
      %v391 = vld [vmem:[%s1 + $0x130] sm:$0xff]
      %v392 = vld [vmem:[%s1 + $0x138] sm:$0xff]
      %v393 = vld [vmem:[%s1 + $0x140] sm:$0xff]
      %v394 = vld [vmem:[%s1 + $0x148] sm:$0xff]
      %v395 = vld [vmem:[%s1 + $0x150] sm:$0xff]
      %v396 = vld [vmem:[%s1 + $0x158] sm:$0xff]
      %v397 = vld [vmem:[%s1 + $0x160] sm:$0xff]
      %v398 = vld [vmem:[%s1 + $0x168] sm:$0xff]
      %v399 = vld [vmem:[%s1 + $0x170] sm:$0xff]
      %v400 = vld [vmem:[%s1 + $0x178] sm:$0xff]
      %v401 = vld [vmem:[%s1 + $0x180] sm:$0xff]
      %v402 = vld [vmem:[%s1 + $0x188] sm:$0xff]
      %v403 = vld [vmem:[%s1 + $0x190] sm:$0xff]
      %v404 = vld [vmem:[%s1 + $0x198] sm:$0xff]
      %v405 = vld [vmem:[%s1 + $0x1a0] sm:$0xff]
      %v406 = vld [vmem:[%s1 + $0x1a8] sm:$0xff]
      %v407 = vld [vmem:[%s1 + $0x1b0] sm:$0xff]
      %v408 = vld [vmem:[%s1 + $0x1b8] sm:$0xff]
      %v409 = vld [vmem:[%s1 + $0x1c0] sm:$0xff]
      %v410 = vld [vmem:[%s1 + $0x1c8] sm:$0xff]
      %v411 = vld [vmem:[%s1 + $0x1d0] sm:$0xff]
      %v412 = vld [vmem:[%s1 + $0x1d8] sm:$0xff]
      %v413 = vld [vmem:[%s1 + $0x1e0] sm:$0xff]
      %v414 = vld [vmem:[%s1 + $0x1e8] sm:$0xff]
      %v415 = vld [vmem:[%s1 + $0x1f0] sm:$0xff]
      %v416 = vld [vmem:[%s1 + $0x1f8] sm:$0xff]
      %v417 = vld [vmem:[%s1 + $0x200] sm:$0xff]
      %v418 = vld [vmem:[%s1 + $0x208] sm:$0xff]
      %v419 = vld [vmem:[%s1 + $0x210] sm:$0xff]
      %v420 = vld [vmem:[%s1 + $0x218] sm:$0xff]
      %v421 = vld [vmem:[%s1 + $0x220] sm:$0xff]
      %v422 = vld [vmem:[%s1 + $0x228] sm:$0xff]
      %v423 = vld [vmem:[%s1 + $0x230] sm:$0xff]
      %v424 = vld [vmem:[%s1 + $0x238] sm:$0xff]
      %v425 = vld [vmem:[%s1 + $0x240] sm:$0xff]
      %v426 = vld [vmem:[%s1 + $0x248] sm:$0xff]
      %v427 = vld [vmem:[%s1 + $0x250] sm:$0xff]
      %v428 = vld [vmem:[%s1 + $0x258] sm:$0xff]
      %v429 = vld [vmem:[%s1 + $0x260] sm:$0xff]
      %v430 = vld [vmem:[%s1 + $0x268] sm:$0xff]
      %v431 = vld [vmem:[%s1 + $0x270] sm:$0xff]
      %v432 = vld [vmem:[%s1 + $0x278] sm:$0xff]
      %v433 = vld [vmem:[%s1 + $0x280] sm:$0xff]
      %v434 = vld [vmem:[%s1 + $0x288] sm:$0xff]
      %v435 = vld [vmem:[%s1 + $0x290] sm:$0xff]
      %v436 = vld [vmem:[%s1 + $0x298] sm:$0xff]
      %v437 = vld [vmem:[%s1 + $0x2a0] sm:$0xff]
      %v438 = vld [vmem:[%s1 + $0x2a8] sm:$0xff]
      %v439 = vld [vmem:[%s1 + $0x2b0] sm:$0xff]
      %v440 = vld [vmem:[%s1 + $0x2b8] sm:$0xff]
      %v441 = vld [vmem:[%s1 + $0x2c0] sm:$0xff]
      %v442 = vld [vmem:[%s1 + $0x2c8] sm:$0xff]
      %v443 = vld [vmem:[%s1 + $0x2d0] sm:$0xff]
      %v444 = vld [vmem:[%s1 + $0x2d8] sm:$0xff]
      %v445 = vld [vmem:[%s1 + $0x2e0] sm:$0xff]
      %v446 = vld [vmem:[%s1 + $0x2e8] sm:$0xff]
      %v447 = vld [vmem:[%s1 + $0x2f0] sm:$0xff]
      %v448 = vld [vmem:[%s1 + $0x2f8] sm:$0xff]
      %v449 = vld [vmem:[%s1 + $0x300] sm:$0xff]
      %v450 = vld [vmem:[%s1 + $0x308] sm:$0xff]
      %v451 = vld [vmem:[%s1 + $0x310] sm:$0xff]
      %v452 = vld [vmem:[%s1 + $0x318] sm:$0xff]
      %v453 = vld [vmem:[%s1 + $0x320] sm:$0xff]
      %v454 = vld [vmem:[%s1 + $0x328] sm:$0xff]
      %v455 = vld [vmem:[%s1 + $0x330] sm:$0xff]
      %v456 = vld [vmem:[%s1 + $0x338] sm:$0xff]
      %v457 = vld [vmem:[%s1 + $0x340] sm:$0xff]
      %v458 = vld [vmem:[%s1 + $0x348] sm:$0xff]
      %v459 = vld [vmem:[%s1 + $0x350] sm:$0xff]
      %v460 = vld [vmem:[%s1 + $0x358] sm:$0xff]
      %v461 = vld [vmem:[%s1 + $0x360] sm:$0xff]
      %v462 = vld [vmem:[%s1 + $0x368] sm:$0xff]
      %v463 = vld [vmem:[%s1 + $0x370] sm:$0xff]
      %v464 = vld [vmem:[%s1 + $0x378] sm:$0xff]
      %v465 = vld [vmem:[%s1 + $0x380] sm:$0xff]
      %v466 = vld [vmem:[%s1 + $0x388] sm:$0xff]
      %v467 = vld [vmem:[%s1 + $0x390] sm:$0xff]
      %v468 = vld [vmem:[%s1 + $0x398] sm:$0xff]
      %v469 = vld [vmem:[%s1 + $0x3a0] sm:$0xff]
      %v470 = vld [vmem:[%s1 + $0x3a8] sm:$0xff]
      %v471 = vld [vmem:[%s1 + $0x3b0] sm:$0xff]
      %v472 = vld [vmem:[%s1 + $0x3b8] sm:$0xff]
      %v473 = vld [vmem:[%s1 + $0x3c0] sm:$0xff]
      %v474 = vld [vmem:[%s1 + $0x3c8] sm:$0xff]
      %v475 = vld [vmem:[%s1 + $0x3d0] sm:$0xff]
      %v476 = vld [vmem:[%s1 + $0x3d8] sm:$0xff]
      %v477 = vld [vmem:[%s1 + $0x3e0] sm:$0xff]
      %v478 = vld [vmem:[%s1 + $0x3e8] sm:$0xff]
      %v479 = vld [vmem:[%s1 + $0x3f0] sm:$0xff]
      %v480 = vld [vmem:[%s1 + $0x3f8] sm:$0xff]
      %v481 = vld [vmem:[%s1 + $0x400] sm:$0xff]
      %v482 = vld [vmem:[%s1 + $0x408] sm:$0xff]
      %v483 = vld [vmem:[%s1 + $0x410] sm:$0xff]
      %v484 = vld [vmem:[%s1 + $0x418] sm:$0xff]
      %v485 = vld [vmem:[%s1 + $0x420] sm:$0xff]
      %v486 = vld [vmem:[%s1 + $0x428] sm:$0xff]
      %v487 = vld [vmem:[%s1 + $0x430] sm:$0xff]
      %v488 = vld [vmem:[%s1 + $0x438] sm:$0xff]
      %v489 = vld [vmem:[%s1 + $0x440] sm:$0xff]
      %v490 = vld [vmem:[%s1 + $0x448] sm:$0xff]
      %v491 = vld [vmem:[%s1 + $0x450] sm:$0xff]
      %v492 = vld [vmem:[%s1 + $0x458] sm:$0xff]
      %v493 = vld [vmem:[%s1 + $0x460] sm:$0xff]
      %v494 = vld [vmem:[%s1 + $0x468] sm:$0xff]
      %v495 = vld [vmem:[%s1 + $0x470] sm:$0xff]
      %v496 = vld [vmem:[%s1 + $0x478] sm:$0xff]
      %v497 = vld [vmem:[%s1 + $0x480] sm:$0xff]
      %v498 = vld [vmem:[%s1 + $0x488] sm:$0xff]
      %v499 = vld [vmem:[%s1 + $0x490] sm:$0xff]
      %v500 = vld [vmem:[%s1 + $0x498] sm:$0xff]
      %v501 = vld [vmem:[%s1 + $0x4a0] sm:$0xff]
      %v502 = vld [vmem:[%s1 + $0x4a8] sm:$0xff]
      %v503 = vld [vmem:[%s1 + $0x4b0] sm:$0xff]
      %v504 = vld [vmem:[%s1 + $0x4b8] sm:$0xff]
      %v505 = vld [vmem:[%s1 + $0x4c0] sm:$0xff]
      %v506 = vld [vmem:[%s1 + $0x4c8] sm:$0xff]
      %v507 = vld [vmem:[%s1 + $0x4d0] sm:$0xff]
      %v508 = vld [vmem:[%s1 + $0x4d8] sm:$0xff]
      %v509 = vld [vmem:[%s1 + $0x4e0] sm:$0xff]
      %v510 = vld [vmem:[%s1 + $0x4e8] sm:$0xff]
      %v511 = vld [vmem:[%s1 + $0x4f0] sm:$0xff]
      %v512 = vld [vmem:[%s1 + $0x4f8] sm:$0xff]
      %v513 = vld [vmem:[%s2] sm:$0xf]
      %v515 = vlaneseq
      %v516 = vshrl.u32 %v515, 7
      %v517 = vsub.s32 0, %v516
      %v518 = vrot.slane %v513, %v517
      %v519 = vlaneseq
      %v520 = vshrl.u32 %v519, 7
      %v521 = vsub.s32 1, %v520
      %v522 = vrot.slane %v513, %v521
      %v523 = vlaneseq
      %v524 = vshrl.u32 %v523, 7
      %v525 = vsub.s32 2, %v524
      %v526 = vrot.slane %v513, %v525
      %v527 = vlaneseq
      %v528 = vshrl.u32 %v527, 7
      %v529 = vsub.s32 3, %v528
      %v530 = vrot.slane %v513, %v529
      %v695 = vunpack.c.l.b16 %v353
      %v696 = vunpack.c.h.b16 %v353
      %v697 = vunpack.c.l.b16 %v354
      %v698 = vunpack.c.h.b16 %v354
      %v699 = vunpack.c.l.b16 %v355
      %v700 = vunpack.c.h.b16 %v355
      %v701 = vunpack.c.l.b16 %v356
      %v702 = vunpack.c.h.b16 %v356
      %v703 = vunpack.c.l.b16 %v357
      %v704 = vunpack.c.h.b16 %v357
      %v705 = vunpack.c.l.b16 %v358
      %v706 = vunpack.c.h.b16 %v358
      %v707 = vunpack.c.l.b16 %v359
      %v708 = vunpack.c.h.b16 %v359
      %v709 = vunpack.c.l.b16 %v360
      %v710 = vunpack.c.h.b16 %v360
      %v711 = vunpack.c.l.b16 %v361
      %v712 = vunpack.c.h.b16 %v361
      %v713 = vunpack.c.l.b16 %v362
      %v714 = vunpack.c.h.b16 %v362
      %v715 = vunpack.c.l.b16 %v363
      %v716 = vunpack.c.h.b16 %v363
      %v717 = vunpack.c.l.b16 %v364
      %v718 = vunpack.c.h.b16 %v364
      %v719 = vunpack.c.l.b16 %v365
      %v720 = vunpack.c.h.b16 %v365
      %v721 = vunpack.c.l.b16 %v366
      %v722 = vunpack.c.h.b16 %v366
      %v723 = vunpack.c.l.b16 %v367
      %v724 = vunpack.c.h.b16 %v367
      %v725 = vunpack.c.l.b16 %v368
      %v726 = vunpack.c.h.b16 %v368
      %v727 = vunpack.c.l.b16 %v369
      %v728 = vunpack.c.h.b16 %v369
      %v729 = vunpack.c.l.b16 %v370
      %v730 = vunpack.c.h.b16 %v370
      %v731 = vunpack.c.l.b16 %v371
      %v732 = vunpack.c.h.b16 %v371
      %v733 = vunpack.c.l.b16 %v372
      %v734 = vunpack.c.h.b16 %v372
      %v735 = vunpack.c.l.b16 %v373
      %v736 = vunpack.c.h.b16 %v373
      %v737 = vunpack.c.l.b16 %v374
      %v738 = vunpack.c.h.b16 %v374
      %v739 = vunpack.c.l.b16 %v375
      %v740 = vunpack.c.h.b16 %v375
      %v741 = vunpack.c.l.b16 %v376
      %v742 = vunpack.c.h.b16 %v376
      %v743 = vunpack.c.l.b16 %v377
      %v744 = vunpack.c.h.b16 %v377
      %v745 = vunpack.c.l.b16 %v378
      %v746 = vunpack.c.h.b16 %v378
      %v747 = vunpack.c.l.b16 %v379
      %v748 = vunpack.c.h.b16 %v379
      %v749 = vunpack.c.l.b16 %v380
      %v750 = vunpack.c.h.b16 %v380
      %v751 = vunpack.c.l.b16 %v381
      %v752 = vunpack.c.h.b16 %v381
      %v753 = vunpack.c.l.b16 %v382
      %v754 = vunpack.c.h.b16 %v382
      %v755 = vunpack.c.l.b16 %v383
      %v756 = vunpack.c.h.b16 %v383
      %v757 = vunpack.c.l.b16 %v384
      %v758 = vunpack.c.h.b16 %v384
      %v759 = vunpack.c.l.b16 %v385
      %v760 = vunpack.c.h.b16 %v385
      %v761 = vunpack.c.l.b16 %v386
      %v762 = vunpack.c.h.b16 %v386
      %v763 = vunpack.c.l.b16 %v387
      %v764 = vunpack.c.h.b16 %v387
      %v765 = vunpack.c.l.b16 %v388
      %v766 = vunpack.c.h.b16 %v388
      %v767 = vunpack.c.l.b16 %v389
      %v768 = vunpack.c.h.b16 %v389
      %v769 = vunpack.c.l.b16 %v390
      %v770 = vunpack.c.h.b16 %v390
      %v771 = vunpack.c.l.b16 %v391
      %v772 = vunpack.c.h.b16 %v391
      %v773 = vunpack.c.l.b16 %v392
      %v774 = vunpack.c.h.b16 %v392
      %v775 = vunpack.c.l.b16 %v393
      %v776 = vunpack.c.h.b16 %v393
      %v777 = vunpack.c.l.b16 %v394
      %v778 = vunpack.c.h.b16 %v394
      %v779 = vunpack.c.l.b16 %v395
      %v780 = vunpack.c.h.b16 %v395
      %v781 = vunpack.c.l.b16 %v396
      %v782 = vunpack.c.h.b16 %v396
      %v783 = vunpack.c.l.b16 %v397
      %v784 = vunpack.c.h.b16 %v397
      %v785 = vunpack.c.l.b16 %v398
      %v786 = vunpack.c.h.b16 %v398
      %v787 = vunpack.c.l.b16 %v399
      %v788 = vunpack.c.h.b16 %v399
      %v789 = vunpack.c.l.b16 %v400
      %v790 = vunpack.c.h.b16 %v400
      %v791 = vunpack.c.l.b16 %v401
      %v792 = vunpack.c.h.b16 %v401
      %v793 = vunpack.c.l.b16 %v402
      %v794 = vunpack.c.h.b16 %v402
      %v795 = vunpack.c.l.b16 %v403
      %v796 = vunpack.c.h.b16 %v403
      %v797 = vunpack.c.l.b16 %v404
      %v798 = vunpack.c.h.b16 %v404
      %v799 = vunpack.c.l.b16 %v405
      %v800 = vunpack.c.h.b16 %v405
      %v801 = vunpack.c.l.b16 %v406
      %v802 = vunpack.c.h.b16 %v406
      %v803 = vunpack.c.l.b16 %v407
      %v804 = vunpack.c.h.b16 %v407
      %v805 = vunpack.c.l.b16 %v408
      %v806 = vunpack.c.h.b16 %v408
      %v807 = vunpack.c.l.b16 %v409
      %v808 = vunpack.c.h.b16 %v409
      %v809 = vunpack.c.l.b16 %v410
      %v810 = vunpack.c.h.b16 %v410
      %v811 = vunpack.c.l.b16 %v411
      %v812 = vunpack.c.h.b16 %v411
      %v813 = vunpack.c.l.b16 %v412
      %v814 = vunpack.c.h.b16 %v412
      %v815 = vunpack.c.l.b16 %v413
      %v816 = vunpack.c.h.b16 %v413
      %v817 = vunpack.c.l.b16 %v414
      %v818 = vunpack.c.h.b16 %v414
      %v819 = vunpack.c.l.b16 %v415
      %v820 = vunpack.c.h.b16 %v415
      %v821 = vunpack.c.l.b16 %v416
      %v822 = vunpack.c.h.b16 %v416
      %v823 = vunpack.c.l.b16 %v417
      %v824 = vunpack.c.h.b16 %v417
      %v825 = vunpack.c.l.b16 %v418
      %v826 = vunpack.c.h.b16 %v418
      %v827 = vunpack.c.l.b16 %v419
      %v828 = vunpack.c.h.b16 %v419
      %v829 = vunpack.c.l.b16 %v420
      %v830 = vunpack.c.h.b16 %v420
      %v831 = vunpack.c.l.b16 %v421
      %v832 = vunpack.c.h.b16 %v421
      %v833 = vunpack.c.l.b16 %v422
      %v834 = vunpack.c.h.b16 %v422
      %v835 = vunpack.c.l.b16 %v423
      %v836 = vunpack.c.h.b16 %v423
      %v837 = vunpack.c.l.b16 %v424
      %v838 = vunpack.c.h.b16 %v424
      %v839 = vunpack.c.l.b16 %v425
      %v840 = vunpack.c.h.b16 %v425
      %v841 = vunpack.c.l.b16 %v426
      %v842 = vunpack.c.h.b16 %v426
      %v843 = vunpack.c.l.b16 %v427
      %v844 = vunpack.c.h.b16 %v427
      %v845 = vunpack.c.l.b16 %v428
      %v846 = vunpack.c.h.b16 %v428
      %v847 = vunpack.c.l.b16 %v429
      %v848 = vunpack.c.h.b16 %v429
      %v849 = vunpack.c.l.b16 %v430
      %v850 = vunpack.c.h.b16 %v430
      %v851 = vunpack.c.l.b16 %v431
      %v852 = vunpack.c.h.b16 %v431
      %v853 = vunpack.c.l.b16 %v432
      %v854 = vunpack.c.h.b16 %v432
      %v855 = vunpack.c.l.b16 %v433
      %v856 = vunpack.c.h.b16 %v433
      %v857 = vunpack.c.l.b16 %v434
      %v858 = vunpack.c.h.b16 %v434
      %v859 = vunpack.c.l.b16 %v435
      %v860 = vunpack.c.h.b16 %v435
      %v861 = vunpack.c.l.b16 %v436
      %v862 = vunpack.c.h.b16 %v436
      %v863 = vunpack.c.l.b16 %v437
      %v864 = vunpack.c.h.b16 %v437
      %v865 = vunpack.c.l.b16 %v438
      %v866 = vunpack.c.h.b16 %v438
      %v867 = vunpack.c.l.b16 %v439
      %v868 = vunpack.c.h.b16 %v439
      %v869 = vunpack.c.l.b16 %v440
      %v870 = vunpack.c.h.b16 %v440
      %v871 = vunpack.c.l.b16 %v441
      %v872 = vunpack.c.h.b16 %v441
      %v873 = vunpack.c.l.b16 %v442
      %v874 = vunpack.c.h.b16 %v442
      %v875 = vunpack.c.l.b16 %v443
      %v876 = vunpack.c.h.b16 %v443
      %v877 = vunpack.c.l.b16 %v444
      %v878 = vunpack.c.h.b16 %v444
      %v879 = vunpack.c.l.b16 %v445
      %v880 = vunpack.c.h.b16 %v445
      %v881 = vunpack.c.l.b16 %v446
      %v882 = vunpack.c.h.b16 %v446
      %v883 = vunpack.c.l.b16 %v447
      %v884 = vunpack.c.h.b16 %v447
      %v885 = vunpack.c.l.b16 %v448
      %v886 = vunpack.c.h.b16 %v448
      %v887 = vunpack.c.l.b16 %v449
      %v888 = vunpack.c.h.b16 %v449
      %v889 = vunpack.c.l.b16 %v450
      %v890 = vunpack.c.h.b16 %v450
      %v891 = vunpack.c.l.b16 %v451
      %v892 = vunpack.c.h.b16 %v451
      %v893 = vunpack.c.l.b16 %v452
      %v894 = vunpack.c.h.b16 %v452
      %v895 = vunpack.c.l.b16 %v453
      %v896 = vunpack.c.h.b16 %v453
      %v897 = vunpack.c.l.b16 %v454
      %v898 = vunpack.c.h.b16 %v454
      %v899 = vunpack.c.l.b16 %v455
      %v900 = vunpack.c.h.b16 %v455
      %v901 = vunpack.c.l.b16 %v456
      %v902 = vunpack.c.h.b16 %v456
      %v903 = vunpack.c.l.b16 %v457
      %v904 = vunpack.c.h.b16 %v457
      %v905 = vunpack.c.l.b16 %v458
      %v906 = vunpack.c.h.b16 %v458
      %v907 = vunpack.c.l.b16 %v459
      %v908 = vunpack.c.h.b16 %v459
      %v909 = vunpack.c.l.b16 %v460
      %v910 = vunpack.c.h.b16 %v460
      %v911 = vunpack.c.l.b16 %v461
      %v912 = vunpack.c.h.b16 %v461
      %v913 = vunpack.c.l.b16 %v462
      %v914 = vunpack.c.h.b16 %v462
      %v915 = vunpack.c.l.b16 %v463
      %v916 = vunpack.c.h.b16 %v463
      %v917 = vunpack.c.l.b16 %v464
      %v918 = vunpack.c.h.b16 %v464
      %v919 = vunpack.c.l.b16 %v465
      %v920 = vunpack.c.h.b16 %v465
      %v921 = vunpack.c.l.b16 %v466
      %v922 = vunpack.c.h.b16 %v466
      %v923 = vunpack.c.l.b16 %v467
      %v924 = vunpack.c.h.b16 %v467
      %v925 = vunpack.c.l.b16 %v468
      %v926 = vunpack.c.h.b16 %v468
      %v927 = vunpack.c.l.b16 %v469
      %v928 = vunpack.c.h.b16 %v469
      %v929 = vunpack.c.l.b16 %v470
      %v930 = vunpack.c.h.b16 %v470
      %v931 = vunpack.c.l.b16 %v471
      %v932 = vunpack.c.h.b16 %v471
      %v933 = vunpack.c.l.b16 %v472
      %v934 = vunpack.c.h.b16 %v472
      %v935 = vunpack.c.l.b16 %v473
      %v936 = vunpack.c.h.b16 %v473
      %v937 = vunpack.c.l.b16 %v474
      %v938 = vunpack.c.h.b16 %v474
      %v939 = vunpack.c.l.b16 %v475
      %v940 = vunpack.c.h.b16 %v475
      %v941 = vunpack.c.l.b16 %v476
      %v942 = vunpack.c.h.b16 %v476
      %v943 = vunpack.c.l.b16 %v477
      %v944 = vunpack.c.h.b16 %v477
      %v945 = vunpack.c.l.b16 %v478
      %v946 = vunpack.c.h.b16 %v478
      %v947 = vunpack.c.l.b16 %v479
      %v948 = vunpack.c.h.b16 %v479
      %v949 = vunpack.c.l.b16 %v480
      %v950 = vunpack.c.h.b16 %v480
      %v951 = vunpack.c.l.b16 %v481
      %v952 = vunpack.c.h.b16 %v481
      %v953 = vunpack.c.l.b16 %v482
      %v954 = vunpack.c.h.b16 %v482
      %v955 = vunpack.c.l.b16 %v483
      %v956 = vunpack.c.h.b16 %v483
      %v957 = vunpack.c.l.b16 %v484
      %v958 = vunpack.c.h.b16 %v484
      %v959 = vunpack.c.l.b16 %v485
      %v960 = vunpack.c.h.b16 %v485
      %v961 = vunpack.c.l.b16 %v486
      %v962 = vunpack.c.h.b16 %v486
      %v963 = vunpack.c.l.b16 %v487
      %v964 = vunpack.c.h.b16 %v487
      %v965 = vunpack.c.l.b16 %v488
      %v966 = vunpack.c.h.b16 %v488
      %v967 = vunpack.c.l.b16 %v489
      %v968 = vunpack.c.h.b16 %v489
      %v969 = vunpack.c.l.b16 %v490
      %v970 = vunpack.c.h.b16 %v490
      %v971 = vunpack.c.l.b16 %v491
      %v972 = vunpack.c.h.b16 %v491
      %v973 = vunpack.c.l.b16 %v492
      %v974 = vunpack.c.h.b16 %v492
      %v975 = vunpack.c.l.b16 %v493
      %v976 = vunpack.c.h.b16 %v493
      %v977 = vunpack.c.l.b16 %v494
      %v978 = vunpack.c.h.b16 %v494
      %v979 = vunpack.c.l.b16 %v495
      %v980 = vunpack.c.h.b16 %v495
      %v981 = vunpack.c.l.b16 %v496
      %v982 = vunpack.c.h.b16 %v496
      %v983 = vunpack.c.l.b16 %v497
      %v984 = vunpack.c.h.b16 %v497
      %v985 = vunpack.c.l.b16 %v498
      %v986 = vunpack.c.h.b16 %v498
      %v987 = vunpack.c.l.b16 %v499
      %v988 = vunpack.c.h.b16 %v499
      %v989 = vunpack.c.l.b16 %v500
      %v990 = vunpack.c.h.b16 %v500
      %v991 = vunpack.c.l.b16 %v501
      %v992 = vunpack.c.h.b16 %v501
      %v993 = vunpack.c.l.b16 %v502
      %v994 = vunpack.c.h.b16 %v502
      %v995 = vunpack.c.l.b16 %v503
      %v996 = vunpack.c.h.b16 %v503
      %v997 = vunpack.c.l.b16 %v504
      %v998 = vunpack.c.h.b16 %v504
      %v999 = vunpack.c.l.b16 %v505
      %v1000 = vunpack.c.h.b16 %v505
      %v1001 = vunpack.c.l.b16 %v506
      %v1002 = vunpack.c.h.b16 %v506
      %v1003 = vunpack.c.l.b16 %v507
      %v1004 = vunpack.c.h.b16 %v507
      %v1005 = vunpack.c.l.b16 %v508
      %v1006 = vunpack.c.h.b16 %v508
      %v1007 = vunpack.c.l.b16 %v509
      %v1008 = vunpack.c.h.b16 %v509
      %v1009 = vunpack.c.l.b16 %v510
      %v1010 = vunpack.c.h.b16 %v510
      %v1011 = vunpack.c.l.b16 %v511
      %v1012 = vunpack.c.h.b16 %v511
      %v1013 = vunpack.c.l.b16 %v512
      %v1014 = vunpack.c.h.b16 %v512
      %v1015 = vpack.c.b16 %v699, %v695
      %v1016 = vpack.c.b16 %v700, %v696
      %v1017 = vpack.c.b16 %v701, %v697
      %v1018 = vpack.c.b16 %v702, %v698
      %v1019 = vpack.c.b16 %v707, %v703
      %v1020 = vpack.c.b16 %v708, %v704
      %v1021 = vpack.c.b16 %v709, %v705
      %v1022 = vpack.c.b16 %v710, %v706
      %v1023 = vpack.c.b16 %v715, %v711
      %v1024 = vpack.c.b16 %v716, %v712
      %v1025 = vpack.c.b16 %v717, %v713
      %v1026 = vpack.c.b16 %v718, %v714
      %v1027 = vpack.c.b16 %v723, %v719
      %v1028 = vpack.c.b16 %v724, %v720
      %v1029 = vpack.c.b16 %v725, %v721
      %v1030 = vpack.c.b16 %v726, %v722
      %v1031 = vpack.c.b16 %v731, %v727
      %v1032 = vpack.c.b16 %v732, %v728
      %v1033 = vpack.c.b16 %v733, %v729
      %v1034 = vpack.c.b16 %v734, %v730
      %v1035 = vpack.c.b16 %v739, %v735
      %v1036 = vpack.c.b16 %v740, %v736
      %v1037 = vpack.c.b16 %v741, %v737
      %v1038 = vpack.c.b16 %v742, %v738
      %v1039 = vpack.c.b16 %v747, %v743
      %v1040 = vpack.c.b16 %v748, %v744
      %v1041 = vpack.c.b16 %v749, %v745
      %v1042 = vpack.c.b16 %v750, %v746
      %v1043 = vpack.c.b16 %v755, %v751
      %v1044 = vpack.c.b16 %v756, %v752
      %v1045 = vpack.c.b16 %v757, %v753
      %v1046 = vpack.c.b16 %v758, %v754
      %v1047 = vpack.c.b16 %v763, %v759
      %v1048 = vpack.c.b16 %v764, %v760
      %v1049 = vpack.c.b16 %v765, %v761
      %v1050 = vpack.c.b16 %v766, %v762
      %v1051 = vpack.c.b16 %v771, %v767
      %v1052 = vpack.c.b16 %v772, %v768
      %v1053 = vpack.c.b16 %v773, %v769
      %v1054 = vpack.c.b16 %v774, %v770
      %v1055 = vpack.c.b16 %v779, %v775
      %v1056 = vpack.c.b16 %v780, %v776
      %v1057 = vpack.c.b16 %v781, %v777
      %v1058 = vpack.c.b16 %v782, %v778
      %v1059 = vpack.c.b16 %v787, %v783
      %v1060 = vpack.c.b16 %v788, %v784
      %v1061 = vpack.c.b16 %v789, %v785
      %v1062 = vpack.c.b16 %v790, %v786
      %v1063 = vpack.c.b16 %v795, %v791
      %v1064 = vpack.c.b16 %v796, %v792
      %v1065 = vpack.c.b16 %v797, %v793
      %v1066 = vpack.c.b16 %v798, %v794
      %v1067 = vpack.c.b16 %v803, %v799
      %v1068 = vpack.c.b16 %v804, %v800
      %v1069 = vpack.c.b16 %v805, %v801
      %v1070 = vpack.c.b16 %v806, %v802
      %v1071 = vpack.c.b16 %v811, %v807
      %v1072 = vpack.c.b16 %v812, %v808
      %v1073 = vpack.c.b16 %v813, %v809
      %v1074 = vpack.c.b16 %v814, %v810
      %v1075 = vpack.c.b16 %v819, %v815
      %v1076 = vpack.c.b16 %v820, %v816
      %v1077 = vpack.c.b16 %v821, %v817
      %v1078 = vpack.c.b16 %v822, %v818
      %v1079 = vpack.c.b16 %v827, %v823
      %v1080 = vpack.c.b16 %v828, %v824
      %v1081 = vpack.c.b16 %v829, %v825
      %v1082 = vpack.c.b16 %v830, %v826
      %v1083 = vpack.c.b16 %v835, %v831
      %v1084 = vpack.c.b16 %v836, %v832
      %v1085 = vpack.c.b16 %v837, %v833
      %v1086 = vpack.c.b16 %v838, %v834
      %v1087 = vpack.c.b16 %v843, %v839
      %v1088 = vpack.c.b16 %v844, %v840
      %v1089 = vpack.c.b16 %v845, %v841
      %v1090 = vpack.c.b16 %v846, %v842
      %v1091 = vpack.c.b16 %v851, %v847
      %v1092 = vpack.c.b16 %v852, %v848
      %v1093 = vpack.c.b16 %v853, %v849
      %v1094 = vpack.c.b16 %v854, %v850
      %v1095 = vpack.c.b16 %v859, %v855
      %v1096 = vpack.c.b16 %v860, %v856
      %v1097 = vpack.c.b16 %v861, %v857
      %v1098 = vpack.c.b16 %v862, %v858
      %v1099 = vpack.c.b16 %v867, %v863
      %v1100 = vpack.c.b16 %v868, %v864
      %v1101 = vpack.c.b16 %v869, %v865
      %v1102 = vpack.c.b16 %v870, %v866
      %v1103 = vpack.c.b16 %v875, %v871
      %v1104 = vpack.c.b16 %v876, %v872
      %v1105 = vpack.c.b16 %v877, %v873
      %v1106 = vpack.c.b16 %v878, %v874
      %v1107 = vpack.c.b16 %v883, %v879
      %v1108 = vpack.c.b16 %v884, %v880
      %v1109 = vpack.c.b16 %v885, %v881
      %v1110 = vpack.c.b16 %v886, %v882
      %v1111 = vpack.c.b16 %v891, %v887
      %v1112 = vpack.c.b16 %v892, %v888
      %v1113 = vpack.c.b16 %v893, %v889
      %v1114 = vpack.c.b16 %v894, %v890
      %v1115 = vpack.c.b16 %v899, %v895
      %v1116 = vpack.c.b16 %v900, %v896
      %v1117 = vpack.c.b16 %v901, %v897
      %v1118 = vpack.c.b16 %v902, %v898
      %v1119 = vpack.c.b16 %v907, %v903
      %v1120 = vpack.c.b16 %v908, %v904
      %v1121 = vpack.c.b16 %v909, %v905
      %v1122 = vpack.c.b16 %v910, %v906
      %v1123 = vpack.c.b16 %v915, %v911
      %v1124 = vpack.c.b16 %v916, %v912
      %v1125 = vpack.c.b16 %v917, %v913
      %v1126 = vpack.c.b16 %v918, %v914
      %v1127 = vpack.c.b16 %v923, %v919
      %v1128 = vpack.c.b16 %v924, %v920
      %v1129 = vpack.c.b16 %v925, %v921
      %v1130 = vpack.c.b16 %v926, %v922
      %v1131 = vpack.c.b16 %v931, %v927
      %v1132 = vpack.c.b16 %v932, %v928
      %v1133 = vpack.c.b16 %v933, %v929
      %v1134 = vpack.c.b16 %v934, %v930
      %v1135 = vpack.c.b16 %v939, %v935
      %v1136 = vpack.c.b16 %v940, %v936
      %v1137 = vpack.c.b16 %v941, %v937
      %v1138 = vpack.c.b16 %v942, %v938
      %v1139 = vpack.c.b16 %v947, %v943
      %v1140 = vpack.c.b16 %v948, %v944
      %v1141 = vpack.c.b16 %v949, %v945
      %v1142 = vpack.c.b16 %v950, %v946
      %v1143 = vpack.c.b16 %v955, %v951
      %v1144 = vpack.c.b16 %v956, %v952
      %v1145 = vpack.c.b16 %v957, %v953
      %v1146 = vpack.c.b16 %v958, %v954
      %v1147 = vpack.c.b16 %v963, %v959
      %v1148 = vpack.c.b16 %v964, %v960
      %v1149 = vpack.c.b16 %v965, %v961
      %v1150 = vpack.c.b16 %v966, %v962
      %v1151 = vpack.c.b16 %v971, %v967
      %v1152 = vpack.c.b16 %v972, %v968
      %v1153 = vpack.c.b16 %v973, %v969
      %v1154 = vpack.c.b16 %v974, %v970
      %v1155 = vpack.c.b16 %v979, %v975
      %v1156 = vpack.c.b16 %v980, %v976
      %v1157 = vpack.c.b16 %v981, %v977
      %v1158 = vpack.c.b16 %v982, %v978
      %v1159 = vpack.c.b16 %v987, %v983
      %v1160 = vpack.c.b16 %v988, %v984
      %v1161 = vpack.c.b16 %v989, %v985
      %v1162 = vpack.c.b16 %v990, %v986
      %v1163 = vpack.c.b16 %v995, %v991
      %v1164 = vpack.c.b16 %v996, %v992
      %v1165 = vpack.c.b16 %v997, %v993
      %v1166 = vpack.c.b16 %v998, %v994
      %v1167 = vpack.c.b16 %v1003, %v999
      %v1168 = vpack.c.b16 %v1004, %v1000
      %v1169 = vpack.c.b16 %v1005, %v1001
      %v1170 = vpack.c.b16 %v1006, %v1002
      %v1171 = vpack.c.b16 %v1011, %v1007
      %v1172 = vpack.c.b16 %v1012, %v1008
      %v1173 = vpack.c.b16 %v1013, %v1009
      %v1174 = vpack.c.b16 %v1014, %v1010
      %1335 = vmatprep.subr.bf16.mxu0 %v1016
      %1336 = vmatpush1.bf16.msra.mxu0 %v1015
      %1337 = vmatprep.subr.bf16.mxu0 %v1020
      %1338 = vmatpush1.bf16.msra.mxu0 %v1019
      %1339 = vmatprep.subr.bf16.mxu0 %v1024
      %1340 = vmatpush1.bf16.msra.mxu0 %v1023
      %1341 = vmatprep.subr.bf16.mxu0 %v1028
      %1342 = vmatpush1.bf16.msra.mxu0 %v1027
      %1343 = vmatprep.subr.bf16.mxu0 %v1032
      %1344 = vmatpush1.bf16.msra.mxu0 %v1031
      %1345 = vmatprep.subr.bf16.mxu0 %v1036
      %1346 = vmatpush1.bf16.msra.mxu0 %v1035
      %1347 = vmatprep.subr.bf16.mxu0 %v1040
      %1348 = vmatpush1.bf16.msra.mxu0 %v1039
      %1349 = vmatprep.subr.bf16.mxu0 %v1044
      %1350 = vmatpush1.bf16.msra.mxu0 %v1043
      %1351 = vmatprep.subr.bf16.mxu0 %v1048
      %1352 = vmatpush1.bf16.msra.mxu0 %v1047
      %1353 = vmatprep.subr.bf16.mxu0 %v1052
      %1354 = vmatpush1.bf16.msra.mxu0 %v1051
      %1355 = vmatprep.subr.bf16.mxu0 %v1056
      %1356 = vmatpush1.bf16.msra.mxu0 %v1055
      %1357 = vmatprep.subr.bf16.mxu0 %v1060
      %1358 = vmatpush1.bf16.msra.mxu0 %v1059
      %1359 = vmatprep.subr.bf16.mxu0 %v1064
      %1360 = vmatpush1.bf16.msra.mxu0 %v1063
      %1361 = vmatprep.subr.bf16.mxu0 %v1068
      %1362 = vmatpush1.bf16.msra.mxu0 %v1067
      %1363 = vmatprep.subr.bf16.mxu0 %v1072
      %1364 = vmatpush1.bf16.msra.mxu0 %v1071
      %1365 = vmatprep.subr.bf16.mxu0 %v1076
      %1366 = vmatpush1.bf16.msra.mxu0 %v1075
      %1367 = vmatprep.mubr.bf16.mxu0 %v344
      %1368 = vmatmul.mubr.bf16.gmra.mrb[0].mxu0 %v343
      %v1369 = vpop.f32.mrb[0].mxu0
      %v1370 = vadd.f32 %v518, %v1369
      %v1371 = vpop.f32.mrb[0].mxu0
      %v1372 = vadd.f32 %v522, %v1371
      %v1373 = vpop.f32.mrb[0].mxu0
      %v1374 = vadd.f32 %v518, %v1373
      %v1375 = vpop.f32.mrb[0].mxu0
      %v1376 = vadd.f32 %v522, %v1375
      %1377 = vmatprep.mubr.bf16.mxu0 %v349
      %1378 = vmatmul.mubr.bf16.gmra.mrb[0].mxu0 %v348
      %v1379 = vpop.f32.mrb[0].mxu0
      %v1380 = vadd.f32 %v518, %v1379
      %v1381 = vpop.f32.mrb[0].mxu0
      %v1382 = vadd.f32 %v522, %v1381
      %v1383 = vpop.f32.mrb[0].mxu0
      %v1384 = vadd.f32 %v518, %v1383
      %v1385 = vpop.f32.mrb[0].mxu0
      %v1386 = vadd.f32 %v522, %v1385
      %1387 = vdwg.mxu0
      %1388 = vmatprep.subr.bf16.mxu0 %v1080
      %1389 = vmatpush1.bf16.msra.mxu0 %v1079
      %1390 = vmatprep.subr.bf16.mxu0 %v1084
      %1391 = vmatpush1.bf16.msra.mxu0 %v1083
      %1392 = vmatprep.subr.bf16.mxu0 %v1088
      %1393 = vmatpush1.bf16.msra.mxu0 %v1087
      %1394 = vmatprep.subr.bf16.mxu0 %v1092
      %1395 = vmatpush1.bf16.msra.mxu0 %v1091
      %1396 = vmatprep.subr.bf16.mxu0 %v1096
      %1397 = vmatpush1.bf16.msra.mxu0 %v1095
      %1398 = vmatprep.subr.bf16.mxu0 %v1100
      %1399 = vmatpush1.bf16.msra.mxu0 %v1099
      %1400 = vmatprep.subr.bf16.mxu0 %v1104
      %1401 = vmatpush1.bf16.msra.mxu0 %v1103
      %1402 = vmatprep.subr.bf16.mxu0 %v1108
      %1403 = vmatpush1.bf16.msra.mxu0 %v1107
      %1404 = vmatprep.subr.bf16.mxu0 %v1112
      %1405 = vmatpush1.bf16.msra.mxu0 %v1111
      %1406 = vmatprep.subr.bf16.mxu0 %v1116
      %1407 = vmatpush1.bf16.msra.mxu0 %v1115
      %1408 = vmatprep.subr.bf16.mxu0 %v1120
      %1409 = vmatpush1.bf16.msra.mxu0 %v1119
      %1410 = vmatprep.subr.bf16.mxu0 %v1124
      %1411 = vmatpush1.bf16.msra.mxu0 %v1123
      %1412 = vmatprep.subr.bf16.mxu0 %v1128
      %1413 = vmatpush1.bf16.msra.mxu0 %v1127
      %1414 = vmatprep.subr.bf16.mxu0 %v1132
      %1415 = vmatpush1.bf16.msra.mxu0 %v1131
      %1416 = vmatprep.subr.bf16.mxu0 %v1136
      %1417 = vmatpush1.bf16.msra.mxu0 %v1135
      %1418 = vmatprep.subr.bf16.mxu0 %v1140
      %1419 = vmatpush1.bf16.msra.mxu0 %v1139
      %1420 = vmatprep.mubr.bf16.mxu0 %v346
      %1421 = vmatmul.mubr.bf16.gmra.mrb[0].mxu0 %v345
      %v1422 = vpop.f32.mrb[0].mxu0
      %v1423 = vadd.f32 %v1370, %v1422
      %v1424 = vpop.f32.mrb[0].mxu0
      %v1425 = vadd.f32 %v1372, %v1424
      %v1426 = vpop.f32.mrb[0].mxu0
      %v1427 = vadd.f32 %v1374, %v1426
      %v1428 = vpop.f32.mrb[0].mxu0
      %v1429 = vadd.f32 %v1376, %v1428
      %1430 = vmatprep.mubr.bf16.mxu0 %v351
      %1431 = vmatmul.mubr.bf16.gmra.mrb[0].mxu0 %v350
      %v1432 = vpop.f32.mrb[0].mxu0
      %v1433 = vadd.f32 %v1380, %v1432
      %v1434 = vpop.f32.mrb[0].mxu0
      %v1435 = vadd.f32 %v1382, %v1434
      %v1436 = vpop.f32.mrb[0].mxu0
      %v1437 = vadd.f32 %v1384, %v1436
      %v1438 = vpop.f32.mrb[0].mxu0
      %v1439 = vadd.f32 %v1386, %v1438
      %1440 = vdwg.mxu0
      %1441 = vmatprep.subr.bf16.mxu0 %v1144
      %1442 = vmatpush1.bf16.msra.mxu0 %v1143
      %1443 = vmatprep.subr.bf16.mxu0 %v1148
      %1444 = vmatpush1.bf16.msra.mxu0 %v1147
      %1445 = vmatprep.subr.bf16.mxu0 %v1152
      %1446 = vmatpush1.bf16.msra.mxu0 %v1151
      %1447 = vmatprep.subr.bf16.mxu0 %v1156
      %1448 = vmatpush1.bf16.msra.mxu0 %v1155
      %1449 = vmatprep.subr.bf16.mxu0 %v1160
      %1450 = vmatpush1.bf16.msra.mxu0 %v1159
      %1451 = vmatprep.subr.bf16.mxu0 %v1164
      %1452 = vmatpush1.bf16.msra.mxu0 %v1163
      %1453 = vmatprep.subr.bf16.mxu0 %v1168
      %1454 = vmatpush1.bf16.msra.mxu0 %v1167
      %1455 = vmatprep.subr.bf16.mxu0 %v1172
      %1456 = vmatpush1.bf16.msra.mxu0 %v1171
      %1457 = vmatprep.subr.bf16.mxu0 0
      %1458 = vmatpush1.bf16.msra.mxu0 0
      %1459 = vmatprep.subr.bf16.mxu0 0
      %1460 = vmatpush1.bf16.msra.mxu0 0
      %1461 = vmatprep.subr.bf16.mxu0 0
      %1462 = vmatpush1.bf16.msra.mxu0 0
      %1463 = vmatprep.subr.bf16.mxu0 0
      %1464 = vmatpush1.bf16.msra.mxu0 0
      %1465 = vmatprep.subr.bf16.mxu0 0
      %1466 = vmatpush1.bf16.msra.mxu0 0
      %1467 = vmatprep.subr.bf16.mxu0 0
      %1468 = vmatpush1.bf16.msra.mxu0 0
      %1469 = vmatprep.subr.bf16.mxu0 0
      %1470 = vmatpush1.bf16.msra.mxu0 0
      %1471 = vmatprep.subr.bf16.mxu0 0
      %1472 = vmatpush1.bf16.msra.mxu0 0
      %1473 = vmatprep.mubr.bf16.mxu0 0
      %1474 = vmatmul.mubr.bf16.gmra.mrb[0].mxu0 %v347
      %v1475 = vpop.f32.mrb[0].mxu0
      %v1476 = vadd.f32 %v1423, %v1475
      %v1477 = vpop.f32.mrb[0].mxu0
      %v1478 = vadd.f32 %v1425, %v1477
      %v1479 = vpop.f32.mrb[0].mxu0
      %v1480 = vadd.f32 %v1427, %v1479
      %v1481 = vpop.f32.mrb[0].mxu0
      %v1482 = vadd.f32 %v1429, %v1481
      %1483 = vmatprep.mubr.bf16.mxu0 0
      %1484 = vmatmul.mubr.bf16.gmra.mrb[0].mxu0 %v352
      %v1485 = vpop.f32.mrb[0].mxu0
      %v1486 = vadd.f32 %v1433, %v1485
      %v1487 = vpop.f32.mrb[0].mxu0
      %v1488 = vadd.f32 %v1435, %v1487
      %v1489 = vpop.f32.mrb[0].mxu0
      %v1490 = vadd.f32 %v1437, %v1489
      %v1491 = vpop.f32.mrb[0].mxu0
      %v1492 = vadd.f32 %v1439, %v1491
      %1493 = vdwg.mxu0
      %1494 = vmatprep.subr.bf16.mxu0 %v1018
      %1495 = vmatpush1.bf16.msra.mxu0 %v1017
      %1496 = vmatprep.subr.bf16.mxu0 %v1022
      %1497 = vmatpush1.bf16.msra.mxu0 %v1021
      %1498 = vmatprep.subr.bf16.mxu0 %v1026
      %1499 = vmatpush1.bf16.msra.mxu0 %v1025
      %1500 = vmatprep.subr.bf16.mxu0 %v1030
      %1501 = vmatpush1.bf16.msra.mxu0 %v1029
      %1502 = vmatprep.subr.bf16.mxu0 %v1034
      %1503 = vmatpush1.bf16.msra.mxu0 %v1033
      %1504 = vmatprep.subr.bf16.mxu0 %v1038
      %1505 = vmatpush1.bf16.msra.mxu0 %v1037
      %1506 = vmatprep.subr.bf16.mxu0 %v1042
      %1507 = vmatpush1.bf16.msra.mxu0 %v1041
      %1508 = vmatprep.subr.bf16.mxu0 %v1046
      %1509 = vmatpush1.bf16.msra.mxu0 %v1045
      %1510 = vmatprep.subr.bf16.mxu0 %v1050
      %1511 = vmatpush1.bf16.msra.mxu0 %v1049
      %1512 = vmatprep.subr.bf16.mxu0 %v1054
      %1513 = vmatpush1.bf16.msra.mxu0 %v1053
      %1514 = vmatprep.subr.bf16.mxu0 %v1058
      %1515 = vmatpush1.bf16.msra.mxu0 %v1057
      %1516 = vmatprep.subr.bf16.mxu0 %v1062
      %1517 = vmatpush1.bf16.msra.mxu0 %v1061
      %1518 = vmatprep.subr.bf16.mxu0 %v1066
      %1519 = vmatpush1.bf16.msra.mxu0 %v1065
      %1520 = vmatprep.subr.bf16.mxu0 %v1070
      %1521 = vmatpush1.bf16.msra.mxu0 %v1069
      %1522 = vmatprep.subr.bf16.mxu0 %v1074
      %1523 = vmatpush1.bf16.msra.mxu0 %v1073
      %1524 = vmatprep.subr.bf16.mxu0 %v1078
      %1525 = vmatpush1.bf16.msra.mxu0 %v1077
      %1526 = vmatprep.mubr.bf16.mxu0 %v344
      %1527 = vmatmul.mubr.bf16.gmra.mrb[0].mxu0 %v343
      %v1528 = vpop.f32.mrb[0].mxu0
      %v1529 = vadd.f32 %v526, %v1528
      %v1530 = vpop.f32.mrb[0].mxu0
      %v1531 = vadd.f32 %v530, %v1530
      %v1532 = vpop.f32.mrb[0].mxu0
      %v1533 = vadd.f32 %v526, %v1532
      %v1534 = vpop.f32.mrb[0].mxu0
      %v1535 = vadd.f32 %v530, %v1534
      %1536 = vmatprep.mubr.bf16.mxu0 %v349
      %1537 = vmatmul.mubr.bf16.gmra.mrb[0].mxu0 %v348
      %v1538 = vpop.f32.mrb[0].mxu0
      %v1539 = vadd.f32 %v526, %v1538
      %v1540 = vpop.f32.mrb[0].mxu0
      %v1541 = vadd.f32 %v530, %v1540
      %v1542 = vpop.f32.mrb[0].mxu0
      %v1543 = vadd.f32 %v526, %v1542
      %v1544 = vpop.f32.mrb[0].mxu0
      %v1545 = vadd.f32 %v530, %v1544
      %1546 = vdwg.mxu0
      %1547 = vmatprep.subr.bf16.mxu0 %v1082
      %1548 = vmatpush1.bf16.msra.mxu0 %v1081
      %1549 = vmatprep.subr.bf16.mxu0 %v1086
      %1550 = vmatpush1.bf16.msra.mxu0 %v1085
      %1551 = vmatprep.subr.bf16.mxu0 %v1090
      %1552 = vmatpush1.bf16.msra.mxu0 %v1089
      %1553 = vmatprep.subr.bf16.mxu0 %v1094
      %1554 = vmatpush1.bf16.msra.mxu0 %v1093
      %1555 = vmatprep.subr.bf16.mxu0 %v1098
      %1556 = vmatpush1.bf16.msra.mxu0 %v1097
      %1557 = vmatprep.subr.bf16.mxu0 %v1102
      %1558 = vmatpush1.bf16.msra.mxu0 %v1101
      %1559 = vmatprep.subr.bf16.mxu0 %v1106
      %1560 = vmatpush1.bf16.msra.mxu0 %v1105
      %1561 = vmatprep.subr.bf16.mxu0 %v1110
      %1562 = vmatpush1.bf16.msra.mxu0 %v1109
      %1563 = vmatprep.subr.bf16.mxu0 %v1114
      %1564 = vmatpush1.bf16.msra.mxu0 %v1113
      %1565 = vmatprep.subr.bf16.mxu0 %v1118
      %1566 = vmatpush1.bf16.msra.mxu0 %v1117
      %1567 = vmatprep.subr.bf16.mxu0 %v1122
      %1568 = vmatpush1.bf16.msra.mxu0 %v1121
      %1569 = vmatprep.subr.bf16.mxu0 %v1126
      %1570 = vmatpush1.bf16.msra.mxu0 %v1125
      %1571 = vmatprep.subr.bf16.mxu0 %v1130
      %1572 = vmatpush1.bf16.msra.mxu0 %v1129
      %1573 = vmatprep.subr.bf16.mxu0 %v1134
      %1574 = vmatpush1.bf16.msra.mxu0 %v1133
      %1575 = vmatprep.subr.bf16.mxu0 %v1138
      %1576 = vmatpush1.bf16.msra.mxu0 %v1137
      %1577 = vmatprep.subr.bf16.mxu0 %v1142
      %1578 = vmatpush1.bf16.msra.mxu0 %v1141
      %1579 = vmatprep.mubr.bf16.mxu0 %v346
      %1580 = vmatmul.mubr.bf16.gmra.mrb[0].mxu0 %v345
      %v1581 = vpop.f32.mrb[0].mxu0
      %v1582 = vadd.f32 %v1529, %v1581
      %v1583 = vpop.f32.mrb[0].mxu0
      %v1584 = vadd.f32 %v1531, %v1583
      %v1585 = vpop.f32.mrb[0].mxu0
      %v1586 = vadd.f32 %v1533, %v1585
      %v1587 = vpop.f32.mrb[0].mxu0
      %v1588 = vadd.f32 %v1535, %v1587
      %1589 = vmatprep.mubr.bf16.mxu0 %v351
      %1590 = vmatmul.mubr.bf16.gmra.mrb[0].mxu0 %v350
      %v1591 = vpop.f32.mrb[0].mxu0
      %v1592 = vadd.f32 %v1539, %v1591
      %v1593 = vpop.f32.mrb[0].mxu0
      %v1594 = vadd.f32 %v1541, %v1593
      %v1595 = vpop.f32.mrb[0].mxu0
      %v1596 = vadd.f32 %v1543, %v1595
      %v1597 = vpop.f32.mrb[0].mxu0
      %v1598 = vadd.f32 %v1545, %v1597
      %1599 = vdwg.mxu0
      %1600 = vmatprep.subr.bf16.mxu0 %v1146
      %1601 = vmatpush1.bf16.msra.mxu0 %v1145
      %1602 = vmatprep.subr.bf16.mxu0 %v1150
      %1603 = vmatpush1.bf16.msra.mxu0 %v1149
      %1604 = vmatprep.subr.bf16.mxu0 %v1154
      %1605 = vmatpush1.bf16.msra.mxu0 %v1153
      %1606 = vmatprep.subr.bf16.mxu0 %v1158
      %1607 = vmatpush1.bf16.msra.mxu0 %v1157
      %1608 = vmatprep.subr.bf16.mxu0 %v1162
      %1609 = vmatpush1.bf16.msra.mxu0 %v1161
      %1610 = vmatprep.subr.bf16.mxu0 %v1166
      %1611 = vmatpush1.bf16.msra.mxu0 %v1165
      %1612 = vmatprep.subr.bf16.mxu0 %v1170
      %1613 = vmatpush1.bf16.msra.mxu0 %v1169
      %1614 = vmatprep.subr.bf16.mxu0 %v1174
      %1615 = vmatpush1.bf16.msra.mxu0 %v1173
      %1616 = vmatprep.subr.bf16.mxu0 0
      %1617 = vmatpush1.bf16.msra.mxu0 0
      %1618 = vmatprep.subr.bf16.mxu0 0
      %1619 = vmatpush1.bf16.msra.mxu0 0
      %1620 = vmatprep.subr.bf16.mxu0 0
      %1621 = vmatpush1.bf16.msra.mxu0 0
      %1622 = vmatprep.subr.bf16.mxu0 0
      %1623 = vmatpush1.bf16.msra.mxu0 0
      %1624 = vmatprep.subr.bf16.mxu0 0
      %1625 = vmatpush1.bf16.msra.mxu0 0
      %1626 = vmatprep.subr.bf16.mxu0 0
      %1627 = vmatpush1.bf16.msra.mxu0 0
      %1628 = vmatprep.subr.bf16.mxu0 0
      %1629 = vmatpush1.bf16.msra.mxu0 0
      %1630 = vmatprep.subr.bf16.mxu0 0
      %1631 = vmatpush1.bf16.msra.mxu0 0
      %1632 = vmatprep.mubr.bf16.mxu0 0
      %1633 = vmatmul.mubr.bf16.gmra.mrb[0].mxu0 %v347
      %v1634 = vpop.f32.mrb[0].mxu0
      %v1635 = vadd.f32 %v1582, %v1634
      %v1636 = vpop.f32.mrb[0].mxu0
      %v1637 = vadd.f32 %v1584, %v1636
      %v1638 = vpop.f32.mrb[0].mxu0
      %v1639 = vadd.f32 %v1586, %v1638
      %v1640 = vpop.f32.mrb[0].mxu0
      %v1641 = vadd.f32 %v1588, %v1640
      %1642 = vmatprep.mubr.bf16.mxu0 0
      %1643 = vmatmul.mubr.bf16.gmra.mrb[0].mxu0 %v352
      %v1644 = vpop.f32.mrb[0].mxu0
      %v1645 = vadd.f32 %v1592, %v1644
      %v1646 = vpop.f32.mrb[0].mxu0
      %v1647 = vadd.f32 %v1594, %v1646
      %v1648 = vpop.f32.mrb[0].mxu0
      %v1649 = vadd.f32 %v1596, %v1648
      %v1650 = vpop.f32.mrb[0].mxu0
      %v1651 = vadd.f32 %v1598, %v1650
      %1652 = vdwg.mxu0
      %v1653 = vmax.f32 %v1476, 0.0
      %v1654 = vmax.f32 %v1478, 0.0
      %v1655 = vmax.f32 %v1635, 0.0
      %v1656 = vmax.f32 %v1637, 0.0
      %v1657 = vmax.f32 %v1480, 0.0
      %v1658 = vmax.f32 %v1482, 0.0
      %v1659 = vmax.f32 %v1639, 0.0
      %v1660 = vmax.f32 %v1641, 0.0
      %v1661 = vmax.f32 %v1486, 0.0
      %v1662 = vmax.f32 %v1488, 0.0
      %v1663 = vmax.f32 %v1645, 0.0
      %v1664 = vmax.f32 %v1647, 0.0
      %v1665 = vmax.f32 %v1490, 0.0
      %v1666 = vmax.f32 %v1492, 0.0
      %v1667 = vmax.f32 %v1649, 0.0
      %v1668 = vmax.f32 %v1651, 0.0
      %v1669 = vpack.c.bf16 %v1657, %v1653
      %v1670 = vpack.c.bf16 %v1658, %v1654
      %v1671 = vpack.c.bf16 %v1659, %v1655
      %v1672 = vpack.c.bf16 %v1660, %v1656
      %v1673 = vpack.c.bf16 %v1665, %v1661
      %v1674 = vpack.c.bf16 %v1666, %v1662
      %v1675 = vpack.c.bf16 %v1667, %v1663
      %v1676 = vpack.c.bf16 %v1668, %v1664
      %v1685 = vunpack.c.l.b16 %v1669
      %v1686 = vunpack.c.l.b16 %v1670
      %v1687 = vunpack.c.l.b16 %v1671
      %v1688 = vunpack.c.l.b16 %v1672
      %v1689 = vunpack.c.h.b16 %v1669
      %v1690 = vunpack.c.h.b16 %v1670
      %v1691 = vunpack.c.h.b16 %v1671
      %v1692 = vunpack.c.h.b16 %v1672
      %v1693 = vunpack.c.l.b16 %v1673
      %v1694 = vunpack.c.l.b16 %v1674
      %v1695 = vunpack.c.l.b16 %v1675
      %v1696 = vunpack.c.l.b16 %v1676
      %v1697 = vunpack.c.h.b16 %v1673
      %v1698 = vunpack.c.h.b16 %v1674
      %v1699 = vunpack.c.h.b16 %v1675
      %v1700 = vunpack.c.h.b16 %v1676
      %v1701 = vpack.c.b16 %v1686, %v1685
      %v1702 = vpack.c.b16 %v1688, %v1687
      %v1703 = vpack.c.b16 %v1690, %v1689
      %v1704 = vpack.c.b16 %v1692, %v1691
      %v1705 = vpack.c.b16 %v1694, %v1693
      %v1706 = vpack.c.b16 %v1696, %v1695
      %v1707 = vpack.c.b16 %v1698, %v1697
      %v1708 = vpack.c.b16 %v1700, %v1699
      %1717 = vst [vmem:[%s174] sm:$0xff] %v1701
      %1718 = vst [vmem:[%s174 + $0x8] sm:$0xff] %v1702
      %1719 = vst [vmem:[%s174 + $0x10] sm:$0xff] %v1703
      %1720 = vst [vmem:[%s174 + $0x18] sm:$0xff] %v1704
      %1721 = vst [vmem:[%s174 + $0x20] sm:$0xff] %v1705
      %1722 = vst [vmem:[%s174 + $0x28] sm:$0xff] %v1706
      %1723 = vst [vmem:[%s174 + $0x30] sm:$0xff] %v1707
      %1724 = vst [vmem:[%s174 + $0x38] sm:$0xff] %v1708
      %s1725 = smul.u32 4, %s14
      %p1726 = scmp.lt.s32.totalorder %s1725, 7
      %s1727 = scalar_select %p1726, %s1725, 7
      %s1728 = smul.addr %s1727, 4
      %s1729 = smul.addr %s1728, 4
      %s1730 = scalar_lea.vmem %s3, %s1729
      // Predicated region
      $region33: #{cnn_forward.3} parent=31 // pred_check
        %p1731 = pneg %p100
      $region34: #{cnn_forward.3} parent=31 // pred_check_branch
        %1733 = sbr.rel (%p1731) target = $region36
      $region35: #{cnn_forward.3} parent=31 // pred_region
        %s1734 = smul.u32 4, %s14
      $region36: #{cnn_forward.3} parent=31 // pred_fallthru
        _
    $region32: #{cnn_forward.3} parent=5 // pred_fallthru
      _
    %p1735 = scmp.le.s32.totalorder 2, %s9
    // Predicated region
    $region37: #{cnn_forward.3} parent=5 // pred_check
      %p1736 = pneg %p1735
    $region38: #{cnn_forward.3} parent=5 // pred_check_branch
      %1738 = sbr.rel (%p1736) target = $region40
    $region39: #{cnn_forward.3} parent=5 // pred_region
      %s1739 = ssub.s32 %s9, 2
      // Predicated region
      $region41: #{cnn_forward.3} parent=39 // pred_check
        %p1740 = pneg %p106
      $region42: #{cnn_forward.3} parent=39 // pred_check_branch
        %1742 = sbr.rel (%p1740) target = $region44
      $region43: #{cnn_forward.3} parent=39 // pred_region
        %s1743 = smul.u32 4, %s15
        %p1744 = scmp.lt.s32.totalorder %s1743, 7
        %s1745 = scalar_select %p1744, %s1743, 7
        %s1746 = smul.addr %s1745, 4
        %s1747 = smul.addr %s1746, 4
        %s1748 = scalar_lea.vmem %s3, %s1747
      $region44: #{cnn_forward.3} parent=39 // pred_fallthru
        _
    $region40: #{cnn_forward.3} parent=5 // pred_fallthru
      _
  $region6: #{cnn_forward.3} parent=0 // loop_footer
    %s13 = sadd.s32 1, %s9
  $region7: #{cnn_forward.3} parent=0 // loop_footer_branch
    %8 = sbr.rel target = $region3
  $region8: #{cnn_forward.3} parent=0 // loop_exit
    _

// kernel: tile.18
$region0: #{tile.18}
  #allocation0 [shape = 's32[1]{0}', space=sflag, size = 0x4, scoped, tag = 'scoped memory for tile.18']
  %s0 = inlined_call_operand.vmem [shape: f32[32], index: 0, kind: input, shape index: {}]
  %s1 = inlined_call_operand.vmem [shape: f32[14,32], index: 1, kind: output, shape index: {}]
  // Predicated region
  $region2: #{tile.18} parent=0 // pred_check
    _
  $region3: #{tile.18} parent=0 // pred_check_branch
    %3 = sbr.rel (0) target = $region5
  $region4: #{tile.18} parent=0 // pred_region
    _
  $region5: #{tile.18} parent=0 // pred_fallthru
    _
  %v4 = vld [vmem:[%s0] ss:$0 sm:$0xff]
  %5 = vst [vmem:[%s1] sm:$0xff] %v4
  %s6 = scalar_lea.vmem %s1, 8
  %7 = vst [vmem:[%s6] sm:$0xff] %v4

// kernel: tile.19
$region0: #{tile.19}
  %s0 = inlined_call_operand.vmem [shape: f32[14,32], index: 0, kind: input, shape index: {}]
  %s1 = inlined_call_operand.vmem [shape: f32[448], index: 1, kind: output, shape index: {}]
  $region1: #{tile.19} parent=0
    #allocation0 [shape = 'u8[4096]{0}', space=vmem, size = 0x1000, scoped, tag = 'scoped mem for output reshape']
    %v2 = vld [vmem:[%s0] ss:$4 sm:$0xf]
    %vm3 = vcmask 261120
    %4 = vst.msk [vmem:[#allocation0] sm:$0xf] %vm3, %v2
    %s5 = scalar_lea.vmem %s0, 3
    %v6 = vld [vmem:[%s5] ss:$4 sm:$0x7]
    %7 = vrot.lane.b32.xlu0 %v6, 96
    %v8 = vpop.permute.xlu0 %7
    %vm9 = vcmask 1048320
    %10 = vst.msk [vmem:[#allocation0] sm:$0x7] %vm9, %v8
    %s11 = scalar_lea.vmem %s0, 2
    %v12 = vld [vmem:[%s11] ss:$4 sm:$0x7]
    %13 = vrot.lane.b32.xlu0 %v12, 64
    %v14 = vpop.permute.xlu0 %13
    %vm15 = vcmask 785920
    %16 = vst.msk [vmem:[#allocation0] sm:$0x7] %vm15, %v14
    %s17 = scalar_lea.vmem %s0, 1
    %v18 = vld [vmem:[%s17] ss:$4 sm:$0xf]
    %19 = vrot.lane.b32.xlu0 %v18, 32
    %v20 = vpop.permute.xlu0 %19
    %vm21 = vcmask 523520
    %22 = vst.msk [vmem:[#allocation0] sm:$0xf] %vm21, %v20
    %s24 = sshllo.u32 0, 4
    %v26 = vld [vmem:[#allocation0] sm:%s24]
    %s27 = sshllo.u32 0, 4
    %28 = vst [vmem:[%s1] sm:%s27] %v26

// kernel: cnn_forward.4
$region0: #{cnn_forward.4}
  #allocation0 [shape = 'u32[]', space=smem, size = 0x4, offset = 0x4, fixed_abs, tag = 'smem constant byte address 0x4 - core index']
  #allocation1 [shape = 'u32[144,128]{1,0:T(1,128)}', space=vmem, size = 0x12000, scoped, tag = 'internal scratch']
  #allocation2 [shape = 'bf16[32,1920]{1,0:T(16,128)(2,1)}', space=vmem, size = 0x1e000, scoped, tag = 'scratch operand']
  %s0 = inlined_call_operand.vmem [shape: bf16[96,384], index: 0, kind: input, shape index: {}]
  %s1 = inlined_call_operand.vmem [shape: bf16[1920,512], index: 1, kind: input, shape index: {}]
  %s2 = inlined_call_operand.vmem [shape: f32[1,512], index: 2, kind: input, shape index: {}]
  %s3 = inlined_call_operand.vmem [shape: bf16[64,512], index: 3, kind: output, shape index: {}]
  %s4 = sld [smem:[#allocation0]]
  $region45: #{cnn_forward.4} parent=0
    _
  %s6 = ssub.s32 1, %s4
  %s7 = scalar_select 0, %s6, %s4
  loop: start=0, step=1, limit=4
  $region2: #{cnn_forward.4} parent=0 // loop_pre_header
    _
  $region3: #{cnn_forward.4} parent=0 // loop_header
    %s9 = sphi 0, %s13
    %p10 = scmp.ge.s32.totalorder %s9, 4
    %s19 = sphi 0, %s21
    %s22 = sphi 0, %s19
    %s23 = sphi 0, %s22
    %s39 = sphi 0, %s23
    %s43 = sphi 0, %s43
    %s45 = sphi 0, %s43
    %s46 = sphi 0, %s45
    %s60 = sphi 0, %s46
    %s64 = sphi 0, %s64
    %s66 = sphi 0, %s64
    %s67 = sphi 0, %s66
    %s81 = sphi 0, %s67
    %s87 = sphi 0, %s89
    %s90 = sphi 0, %s87
    %s91 = sphi 0, %s90
    %s107 = sphi 0, %s91
  $region4: #{cnn_forward.4} parent=0 // loop_header_branch
    %12 = sbr.rel (%p10) target = $region8
  $region5: #{cnn_forward.4} parent=0 // loop_body
    %s14 = ssub.s32 %s9, 1
    %s15 = ssub.s32 %s9, 2
    %s16 = sadd.s32 %s9, 1
    %s17 = ssub.s32 %s9, %s16
    %p18 = scmp.eq.s32.totalorder %s17, 0
    %s20 = sadd.s32 %s19, 1
    %s21 = scalar_select %p18, %s19, %s20
    %p24 = pneg %p18
    %p25 = scmp.eq.s32.totalorder %s9, 1
    %p26 = por %p24, %p25
    %p27 = scmp.ne.s32.totalorder %s19, %s22
    %p28 = scmp.eq.s32.totalorder %s9, 0
    %p29 = por %p27, %p28
    %p30 = scmp.ne.s32.totalorder %s19, %s22
    %p31 = scmp.eq.s32.totalorder %s14, 1
    %p32 = por %p30, %p31
    %p33 = scmp.ne.s32.totalorder %s22, %s23
    %p34 = scmp.eq.s32.totalorder %s14, 0
    %p35 = por %p33, %p34
    %p36 = scmp.ne.s32.totalorder %s22, %s23
    %p37 = scmp.eq.s32.totalorder %s15, 1
    %p38 = por %p36, %p37
    %p40 = scmp.ne.s32.totalorder %s23, %s39
    %p41 = scmp.eq.s32.totalorder %s15, 0
    %p42 = por %p40, %p41
    %s44 = sadd.s32 %s43, 1
    %p47 = scmp.eq.s32.totalorder %s9, 1
    %p48 = scmp.ne.s32.totalorder %s43, %s45
    %p49 = scmp.eq.s32.totalorder %s9, 0
    %p50 = por %p48, %p49
    %p51 = scmp.ne.s32.totalorder %s43, %s45
    %p52 = scmp.eq.s32.totalorder %s14, 1
    %p53 = por %p51, %p52
    %p54 = scmp.ne.s32.totalorder %s45, %s46
    %p55 = scmp.eq.s32.totalorder %s14, 0
    %p56 = por %p54, %p55
    %p57 = scmp.ne.s32.totalorder %s45, %s46
    %p58 = scmp.eq.s32.totalorder %s15, 1
    %p59 = por %p57, %p58
    %p61 = scmp.ne.s32.totalorder %s46, %s60
    %p62 = scmp.eq.s32.totalorder %s15, 0
    %p63 = por %p61, %p62
    %s65 = sadd.s32 %s64, 1
    %p68 = scmp.eq.s32.totalorder %s9, 1
    %p69 = scmp.ne.s32.totalorder %s64, %s66
    %p70 = scmp.eq.s32.totalorder %s9, 0
    %p71 = por %p69, %p70
    %p72 = scmp.ne.s32.totalorder %s64, %s66
    %p73 = scmp.eq.s32.totalorder %s14, 1
    %p74 = por %p72, %p73
    %p75 = scmp.ne.s32.totalorder %s66, %s67
    %p76 = scmp.eq.s32.totalorder %s14, 0
    %p77 = por %p75, %p76
    %p78 = scmp.ne.s32.totalorder %s66, %s67
    %p79 = scmp.eq.s32.totalorder %s15, 1
    %p80 = por %p78, %p79
    %p82 = scmp.ne.s32.totalorder %s67, %s81
    %p83 = scmp.eq.s32.totalorder %s15, 0
    %p84 = por %p82, %p83
    %s85 = ssub.s32 %s9, %s16
    %p86 = scmp.eq.s32.totalorder %s85, 0
    %s88 = sadd.s32 %s87, 1
    %s89 = scalar_select %p86, %s87, %s88
    %p92 = pneg %p86
    %p93 = scmp.eq.s32.totalorder %s9, 1
    %p94 = por %p92, %p93
    %p95 = scmp.ne.s32.totalorder %s87, %s90
    %p96 = scmp.eq.s32.totalorder %s9, 0
    %p97 = por %p95, %p96
    %p98 = scmp.ne.s32.totalorder %s87, %s90
    %p99 = scmp.eq.s32.totalorder %s14, 1
    %p100 = por %p98, %p99
    %p101 = scmp.ne.s32.totalorder %s90, %s91
    %p102 = scmp.eq.s32.totalorder %s14, 0
    %p103 = por %p101, %p102
    %p104 = scmp.ne.s32.totalorder %s90, %s91
    %p105 = scmp.eq.s32.totalorder %s15, 1
    %p106 = por %p104, %p105
    %p108 = scmp.ne.s32.totalorder %s91, %s107
    %p109 = scmp.eq.s32.totalorder %s15, 0
    %p110 = por %p108, %p109
    %p111 = scmp.le.s32.totalorder 1, %s9
    %p112 = scmp.lt.s32.totalorder %s9, 3
    %p113 = pnand %p111, %p112
    %p114 = pneg %p113
    // Predicated region
    $region9: #{cnn_forward.4} parent=5 // pred_check
      _
    $region10: #{cnn_forward.4} parent=5 // pred_check_branch
      %116 = sbr.rel (%p113) target = $region12
    $region11: #{cnn_forward.4} parent=5 // pred_region
      %s117 = ssub.s32 %s9, 1
      // Predicated region
      $region13: #{cnn_forward.4} parent=11 // pred_check
        %p118 = pneg %p56
      $region14: #{cnn_forward.4} parent=11 // pred_check_branch
        %120 = sbr.rel (%p118) target = $region16
      $region15: #{cnn_forward.4} parent=11 // pred_region
        _
      $region16: #{cnn_forward.4} parent=11 // pred_fallthru
        _
      // Predicated region
      $region17: #{cnn_forward.4} parent=11 // pred_check
        %p121 = pneg %p77
      $region18: #{cnn_forward.4} parent=11 // pred_check_branch
        %123 = sbr.rel (%p121) target = $region20
      $region19: #{cnn_forward.4} parent=11 // pred_region
        _
      $region20: #{cnn_forward.4} parent=11 // pred_fallthru
        _
    $region12: #{cnn_forward.4} parent=5 // pred_fallthru
      _
    %p124 = scmp.lt.s32.totalorder %s9, 2
    // Predicated region
    $region21: #{cnn_forward.4} parent=5 // pred_check
      %p125 = pneg %p124
    $region22: #{cnn_forward.4} parent=5 // pred_check_branch
      %127 = sbr.rel (%p125) target = $region24
    $region23: #{cnn_forward.4} parent=5 // pred_region
      // Predicated region
      $region25: #{cnn_forward.4} parent=23 // pred_check
        %p128 = pneg %p29
      $region26: #{cnn_forward.4} parent=23 // pred_check_branch
        %130 = sbr.rel (%p128) target = $region28
      $region27: #{cnn_forward.4} parent=23 // pred_region
        %s131 = smul.u32 6, %s9
        %p132 = scmp.lt.s32.totalorder %s131, 11
        %s133 = scalar_select %p132, %s131, 11
        %s134 = smul.addr %s133, 3
        %s135 = smul.addr %s134, 4
        %s136 = scalar_lea.vmem %s0, %s135
        %s137 = smul.u32 6, %s9
      $region28: #{cnn_forward.4} parent=23 // pred_fallthru
        _
    $region24: #{cnn_forward.4} parent=5 // pred_fallthru
      _
    %p138 = scmp.le.s32.totalorder 1, %s9
    %p139 = scmp.lt.s32.totalorder %s9, 3
    %p140 = pnand %p138, %p139
    %p141 = pneg %p140
    // Predicated region
    $region29: #{cnn_forward.4} parent=5 // pred_check
      _
    $region30: #{cnn_forward.4} parent=5 // pred_check_branch
      %143 = sbr.rel (%p140) target = $region32
    $region31: #{cnn_forward.4} parent=5 // pred_region
      %s144 = ssub.s32 %s9, 1
      %s145 = smul.u32 6, %s14
      %p146 = scmp.lt.s32.totalorder %s145, 11
      %s147 = scalar_select %p146, %s145, 11
      %s148 = smul.addr %s147, 3
      %s149 = smul.addr %s148, 4
      %s150 = scalar_lea.vmem %s0, %s149
      %p151 = pneg %p35
      %p152 = pneg %p32
      %p153 = pneg %p56
      %p154 = pneg %p53
      %p155 = pneg %p77
      %p156 = pneg %p74
      %p157 = pneg %p103
      %p158 = pneg %p100
      %s159 = smul.u32 4, %s14
      %p160 = scmp.lt.s32.totalorder %s159, 7
      %s161 = scalar_select %p160, %s159, 7
      %s162 = smul.addr %s161, 4
      %s163 = smul.addr %s162, 4
      %s164 = scalar_lea.vmem %s3, %s163
      %s165 = smul.u32 6, %s14
      %p166 = scmp.lt.s32.totalorder %s165, 11
      %s167 = scalar_select %p166, %s165, 11
      %s168 = smul.addr %s167, 3
      %s169 = smul.addr %s168, 4
      %s170 = scalar_lea.vmem %s0, %s169
      %s171 = smul.u32 6, %s14
      %s172 = smul.u32 4, %s14
      %p173 = scmp.lt.s32.totalorder %s172, 7
      %s174 = scalar_select %p173, %s172, 7
      %s175 = smul.addr %s174, 4
      %s176 = smul.addr %s175, 4
      %s177 = scalar_lea.vmem %s3, %s176
      %s178 = smul.u32 4, %s14
      %v180 = vld [vmem:[%s170] sm:$0xff]
      %v181 = vld [vmem:[%s170 + $0x8] sm:$0xf]
      %v182 = vld [vmem:[%s170 + $0xc] sm:$0xff]
      %v183 = vld [vmem:[%s170 + $0x14] sm:$0xf]
      %v184 = vld [vmem:[%s170 + $0x18] sm:$0xff]
      %v185 = vld [vmem:[%s170 + $0x20] sm:$0xf]
      %v186 = vld [vmem:[%s170 + $0x24] sm:$0xff]
      %v187 = vld [vmem:[%s170 + $0x2c] sm:$0xf]
      %v196 = vunpack.c.l.b16 %v180
      %v197 = vunpack.c.h.b16 %v180
      %v198 = vunpack.c.l.b16 %v181
      %v199 = vunpack.c.l.b16 %v182
      %v200 = vunpack.c.h.b16 %v182
      %v201 = vunpack.c.l.b16 %v183
      %v202 = vunpack.c.l.b16 %v184
      %v203 = vunpack.c.h.b16 %v184
      %v204 = vunpack.c.l.b16 %v185
      %v205 = vunpack.c.l.b16 %v186
      %v206 = vunpack.c.h.b16 %v186
      %v207 = vunpack.c.l.b16 %v187
      %v208 = vpack.c.b16 %v199, %v196
      %v209 = vpack.c.b16 %v200, %v197
      %v210 = vpack.c.b16 %v201, %v198
      %v211 = vpack.c.b16 %v205, %v202
      %v212 = vpack.c.b16 %v206, %v203
      %v213 = vpack.c.b16 %v207, %v204
      %220 = vst [vmem:[#allocation2] sm:$0xff] %v208
      %221 = vst [vmem:[#allocation2 + $0x8] sm:$0xff] %v209
      %222 = vst [vmem:[#allocation2 + $0x10] sm:$0xff] %v210
      %223 = vst [vmem:[#allocation2 + $0x78] sm:$0xff] %v211
      %224 = vst [vmem:[#allocation2 + $0x80] sm:$0xff] %v212
      %225 = vst [vmem:[#allocation2 + $0x88] sm:$0xff] %v213
      %v226 = vld [vmem:[%s170] sm:$0xff]
      %v227 = vld [vmem:[%s170 + $0x8] sm:$0xf]
      %v228 = vld [vmem:[%s170 + $0xc] sm:$0xff]
      %v229 = vld [vmem:[%s170 + $0x14] sm:$0xf]
      %v230 = vld [vmem:[%s170 + $0x18] sm:$0xff]
      %v231 = vld [vmem:[%s170 + $0x20] sm:$0xf]
      %v232 = vld [vmem:[%s170 + $0x24] sm:$0xff]
      %v233 = vld [vmem:[%s170 + $0x2c] sm:$0xf]
      %v234 = vld [vmem:[%s170 + $0x30] sm:$0x11]
      %v235 = vld [vmem:[%s170 + $0x38] sm:$0x1]
      %v246 = vunpack.c.l.b16 %v226
      %v247 = vunpack.c.h.b16 %v226
      %v248 = vunpack.c.l.b16 %v227
      %v249 = vunpack.c.l.b16 %v228
      %v250 = vunpack.c.h.b16 %v228
      %v251 = vunpack.c.l.b16 %v229
      %v252 = vunpack.c.l.b16 %v230
      %v253 = vunpack.c.h.b16 %v230
      %v254 = vunpack.c.l.b16 %v231
      %v255 = vunpack.c.l.b16 %v232
      %v256 = vunpack.c.h.b16 %v232
      %v257 = vunpack.c.l.b16 %v233
      %v258 = vunpack.c.l.b16 %v234
      %v259 = vunpack.c.h.b16 %v234
      %v260 = vunpack.c.l.b16 %v235
      %v261 = vpack.c.b16 %v249, %v246
      %v262 = vpack.c.b16 %v250, %v247
      %v263 = vpack.c.b16 %v251, %v248
      %v264 = vpack.c.b16 %v255, %v252
      %v265 = vpack.c.b16 %v256, %v253
      %v266 = vpack.c.b16 %v257, %v254
      %v267 = vpack.c.b16 %v258, %v258
      %v268 = vpack.c.b16 %v259, %v259
      %v269 = vpack.c.b16 %v260, %v260
      %vm270 = vsmask.f32 7424
      %v272 = vshrl.u32 %v261, 16
      %v274 = vshll.u32 %v261, 16
      %v276 = vrot.slane %v274, 1
      %v277 = vor.u32 %v272, %v276
      %v279 = vshll.u32 %v264, 16
      %v281 = vrot.slane %v279, 1
      %v282 = vsel %vm270, %v277, %v281
      %v284 = vshrl.u32 %v262, 16
      %v286 = vshll.u32 %v262, 16
      %v288 = vrot.slane %v286, 1
      %v289 = vor.u32 %v284, %v288
      %v291 = vshll.u32 %v265, 16
      %v293 = vrot.slane %v291, 1
      %v294 = vsel %vm270, %v289, %v293
      %v296 = vshrl.u32 %v263, 16
      %v298 = vshll.u32 %v263, 16
      %v300 = vrot.slane %v298, 1
      %v301 = vor.u32 %v296, %v300
      %v303 = vshll.u32 %v266, 16
      %v305 = vrot.slane %v303, 1
      %v306 = vsel %vm270, %v301, %v305
      %v307 = vshrl.u32 %v264, 16
      %v309 = vor.u32 %v307, %v281
      %v311 = vshll.u32 %v267, 16
      %v313 = vrot.slane %v311, 1
      %v314 = vsel %vm270, %v309, %v313
      %v315 = vshrl.u32 %v265, 16
      %v317 = vor.u32 %v315, %v293
      %v319 = vshll.u32 %v268, 16
      %v321 = vrot.slane %v319, 1
      %v322 = vsel %vm270, %v317, %v321
      %v323 = vshrl.u32 %v266, 16
      %v325 = vor.u32 %v323, %v305
      %v327 = vshll.u32 %v269, 16
      %v329 = vrot.slane %v327, 1
      %v330 = vsel %vm270, %v325, %v329
      %337 = vst [vmem:[#allocation2 + $0x18] sm:$0xff] %v282
      %338 = vst [vmem:[#allocation2 + $0x20] sm:$0xff] %v294
      %339 = vst [vmem:[#allocation2 + $0x28] sm:$0xff] %v306
      %340 = vst [vmem:[#allocation2 + $0x90] sm:$0xff] %v314
      %341 = vst [vmem:[#allocation2 + $0x98] sm:$0xff] %v322
      %342 = vst [vmem:[#allocation2 + $0xa0] sm:$0xff] %v330
      %v343 = vld [vmem:[%s170] sm:$0xee]
      %v344 = vld [vmem:[%s170 + $0x8] sm:$0xe]
      %v345 = vld [vmem:[%s170 + $0xc] sm:$0xff]
      %v346 = vld [vmem:[%s170 + $0x14] sm:$0xf]
      %v347 = vld [vmem:[%s170 + $0x18] sm:$0xff]
      %v348 = vld [vmem:[%s170 + $0x20] sm:$0xf]
      %v349 = vld [vmem:[%s170 + $0x24] sm:$0xff]
      %v350 = vld [vmem:[%s170 + $0x2c] sm:$0xf]
      %v351 = vld [vmem:[%s170 + $0x30] sm:$0x11]
      %v352 = vld [vmem:[%s170 + $0x38] sm:$0x1]
      %v363 = vunpack.c.l.b16 %v343
      %v364 = vunpack.c.h.b16 %v343
      %v365 = vunpack.c.l.b16 %v344
      %v366 = vunpack.c.l.b16 %v345
      %v367 = vunpack.c.h.b16 %v345
      %v368 = vunpack.c.l.b16 %v346
      %v369 = vunpack.c.l.b16 %v347
      %v370 = vunpack.c.h.b16 %v347
      %v371 = vunpack.c.l.b16 %v348
      %v372 = vunpack.c.l.b16 %v349
      %v373 = vunpack.c.h.b16 %v349
      %v374 = vunpack.c.l.b16 %v350
      %v375 = vunpack.c.l.b16 %v351
      %v376 = vunpack.c.h.b16 %v351
      %v377 = vunpack.c.l.b16 %v352
      %v378 = vpack.c.b16 %v366, %v363
      %v379 = vpack.c.b16 %v367, %v364
      %v380 = vpack.c.b16 %v368, %v365
      %v381 = vpack.c.b16 %v372, %v369
      %v382 = vpack.c.b16 %v373, %v370
      %v383 = vpack.c.b16 %v374, %v371
      %v384 = vpack.c.b16 %v375, %v375
      %v385 = vpack.c.b16 %v376, %v376
      %v386 = vpack.c.b16 %v377, %v377
      %vm387 = vcmask 1046528
      %v388 = vrot.slane %v378, 1
      %v389 = vrot.slane %v381, 1
      %v390 = vsel %vm387, %v388, %v389
      %v391 = vrot.slane %v379, 1
      %v392 = vrot.slane %v382, 1
      %v393 = vsel %vm387, %v391, %v392
      %v394 = vrot.slane %v380, 1
      %v395 = vrot.slane %v383, 1
      %v396 = vsel %vm387, %v394, %v395
      %v397 = vrot.slane %v384, 1
      %v398 = vsel %vm387, %v389, %v397
      %v399 = vrot.slane %v385, 1
      %v400 = vsel %vm387, %v392, %v399
      %v401 = vrot.slane %v386, 1
      %v402 = vsel %vm387, %v395, %v401
      %409 = vst [vmem:[#allocation2 + $0x30] sm:$0xff] %v390
      %410 = vst [vmem:[#allocation2 + $0x38] sm:$0xff] %v393
      %411 = vst [vmem:[#allocation2 + $0x40] sm:$0xff] %v396
      %412 = vst [vmem:[#allocation2 + $0xa8] sm:$0xff] %v398
      %413 = vst [vmem:[#allocation2 + $0xb0] sm:$0xff] %v400
      %414 = vst [vmem:[#allocation2 + $0xb8] sm:$0xff] %v402
      %v415 = vld [vmem:[%s170] sm:$0xee]
      %v416 = vld [vmem:[%s170 + $0x8] sm:$0xe]
      %v417 = vld [vmem:[%s170 + $0xc] sm:$0xff]
      %v418 = vld [vmem:[%s170 + $0x14] sm:$0xf]
      %v419 = vld [vmem:[%s170 + $0x18] sm:$0xff]
      %v420 = vld [vmem:[%s170 + $0x20] sm:$0xf]
      %v421 = vld [vmem:[%s170 + $0x24] sm:$0xff]
      %v422 = vld [vmem:[%s170 + $0x2c] sm:$0xf]
      %v423 = vld [vmem:[%s170 + $0x30] sm:$0x33]
      %v424 = vld [vmem:[%s170 + $0x38] sm:$0x3]
      %v435 = vunpack.c.l.b16 %v415
      %v436 = vunpack.c.h.b16 %v415
      %v437 = vunpack.c.l.b16 %v416
      %v438 = vunpack.c.l.b16 %v417
      %v439 = vunpack.c.h.b16 %v417
      %v440 = vunpack.c.l.b16 %v418
      %v441 = vunpack.c.l.b16 %v419
      %v442 = vunpack.c.h.b16 %v419
      %v443 = vunpack.c.l.b16 %v420
      %v444 = vunpack.c.l.b16 %v421
      %v445 = vunpack.c.h.b16 %v421
      %v446 = vunpack.c.l.b16 %v422
      %v447 = vunpack.c.l.b16 %v423
      %v448 = vunpack.c.h.b16 %v423
      %v449 = vunpack.c.l.b16 %v424
      %v450 = vpack.c.b16 %v438, %v435
      %v451 = vpack.c.b16 %v439, %v436
      %v452 = vpack.c.b16 %v440, %v437
      %v453 = vpack.c.b16 %v444, %v441
      %v454 = vpack.c.b16 %v445, %v442
      %v455 = vpack.c.b16 %v446, %v443
      %v456 = vpack.c.b16 %v447, %v447
      %v457 = vpack.c.b16 %v448, %v448
      %v458 = vpack.c.b16 %v449, %v449
      %vm459 = vsmask.f32 6400
      %v461 = vshrl.u32 %v450, 16
      %v463 = vrot.slane %v461, 1
      %v464 = vshll.u32 %v450, 16
      %v466 = vrot.slane %v464, 2
      %v467 = vor.u32 %v463, %v466
      %v469 = vshrl.u32 %v453, 16
      %v471 = vrot.slane %v469, 1
      %v472 = vshll.u32 %v453, 16
      %v474 = vrot.slane %v472, 2
      %v475 = vor.u32 %v471, %v474
      %v476 = vsel %vm459, %v467, %v475
      %v478 = vshrl.u32 %v451, 16
      %v480 = vrot.slane %v478, 1
      %v481 = vshll.u32 %v451, 16
      %v483 = vrot.slane %v481, 2
      %v484 = vor.u32 %v480, %v483
      %v486 = vshrl.u32 %v454, 16
      %v488 = vrot.slane %v486, 1
      %v489 = vshll.u32 %v454, 16
      %v491 = vrot.slane %v489, 2
      %v492 = vor.u32 %v488, %v491
      %v493 = vsel %vm459, %v484, %v492
      %v495 = vshrl.u32 %v452, 16
      %v497 = vrot.slane %v495, 1
      %v498 = vshll.u32 %v452, 16
      %v500 = vrot.slane %v498, 2
      %v501 = vor.u32 %v497, %v500
      %v503 = vshrl.u32 %v455, 16
      %v505 = vrot.slane %v503, 1
      %v506 = vshll.u32 %v455, 16
      %v508 = vrot.slane %v506, 2
      %v509 = vor.u32 %v505, %v508
      %v510 = vsel %vm459, %v501, %v509
      %v512 = vshrl.u32 %v456, 16
      %v514 = vrot.slane %v512, 1
      %v515 = vshll.u32 %v456, 16
      %v517 = vrot.slane %v515, 2
      %v518 = vor.u32 %v514, %v517
      %v519 = vsel %vm459, %v475, %v518
      %v521 = vshrl.u32 %v457, 16
      %v523 = vrot.slane %v521, 1
      %v524 = vshll.u32 %v457, 16
      %v526 = vrot.slane %v524, 2
      %v527 = vor.u32 %v523, %v526
      %v528 = vsel %vm459, %v492, %v527
      %v530 = vshrl.u32 %v458, 16
      %v532 = vrot.slane %v530, 1
      %v533 = vshll.u32 %v458, 16
      %v535 = vrot.slane %v533, 2
      %v536 = vor.u32 %v532, %v535
      %v537 = vsel %vm459, %v509, %v536
      %544 = vst [vmem:[#allocation2 + $0x48] sm:$0xff] %v476
      %545 = vst [vmem:[#allocation2 + $0x50] sm:$0xff] %v493
      %546 = vst [vmem:[#allocation2 + $0x58] sm:$0xff] %v510
      %547 = vst [vmem:[#allocation2 + $0xc0] sm:$0xff] %v519
      %548 = vst [vmem:[#allocation2 + $0xc8] sm:$0xff] %v528
      %549 = vst [vmem:[#allocation2 + $0xd0] sm:$0xff] %v537
      %v550 = vld [vmem:[%s170] sm:$0xcc]
      %v551 = vld [vmem:[%s170 + $0x8] sm:$0xc]
      %v552 = vld [vmem:[%s170 + $0xc] sm:$0xff]
      %v553 = vld [vmem:[%s170 + $0x14] sm:$0xf]
      %v554 = vld [vmem:[%s170 + $0x18] sm:$0xff]
      %v555 = vld [vmem:[%s170 + $0x20] sm:$0xf]
      %v556 = vld [vmem:[%s170 + $0x24] sm:$0xff]
      %v557 = vld [vmem:[%s170 + $0x2c] sm:$0xf]
      %v558 = vld [vmem:[%s170 + $0x30] sm:$0x33]
      %v559 = vld [vmem:[%s170 + $0x38] sm:$0x3]
      %v570 = vunpack.c.l.b16 %v550
      %v571 = vunpack.c.h.b16 %v550
      %v572 = vunpack.c.l.b16 %v551
      %v573 = vunpack.c.l.b16 %v552
      %v574 = vunpack.c.h.b16 %v552
      %v575 = vunpack.c.l.b16 %v553
      %v576 = vunpack.c.l.b16 %v554
      %v577 = vunpack.c.h.b16 %v554
      %v578 = vunpack.c.l.b16 %v555
      %v579 = vunpack.c.l.b16 %v556
      %v580 = vunpack.c.h.b16 %v556
      %v581 = vunpack.c.l.b16 %v557
      %v582 = vunpack.c.l.b16 %v558
      %v583 = vunpack.c.h.b16 %v558
      %v584 = vunpack.c.l.b16 %v559
      %v585 = vpack.c.b16 %v573, %v570
      %v586 = vpack.c.b16 %v574, %v571
      %v587 = vpack.c.b16 %v575, %v572
      %v588 = vpack.c.b16 %v579, %v576
      %v589 = vpack.c.b16 %v580, %v577
      %v590 = vpack.c.b16 %v581, %v578
      %v591 = vpack.c.b16 %v582, %v582
      %v592 = vpack.c.b16 %v583, %v583
      %v593 = vpack.c.b16 %v584, %v584
      %vm594 = vcmask 1045504
      %v595 = vrot.slane %v585, 2
      %v596 = vrot.slane %v588, 2
      %v597 = vsel %vm594, %v595, %v596
      %v598 = vrot.slane %v586, 2
      %v599 = vrot.slane %v589, 2
      %v600 = vsel %vm594, %v598, %v599
      %v601 = vrot.slane %v587, 2
      %v602 = vrot.slane %v590, 2
      %v603 = vsel %vm594, %v601, %v602
      %v604 = vrot.slane %v591, 2
      %v605 = vsel %vm594, %v596, %v604
      %v606 = vrot.slane %v592, 2
      %v607 = vsel %vm594, %v599, %v606
      %v608 = vrot.slane %v593, 2
      %v609 = vsel %vm594, %v602, %v608
      %616 = vst [vmem:[#allocation2 + $0x60] sm:$0xff] %v597
      %617 = vst [vmem:[#allocation2 + $0x68] sm:$0xff] %v600
      %618 = vst [vmem:[#allocation2 + $0x70] sm:$0xff] %v603
      %619 = vst [vmem:[#allocation2 + $0xd8] sm:$0xff] %v605
      %620 = vst [vmem:[#allocation2 + $0xe0] sm:$0xff] %v607
      %621 = vst [vmem:[#allocation2 + $0xe8] sm:$0xff] %v609
      %v622 = vld [vmem:[#allocation2] sm:$0xff]
      %v623 = vld [vmem:[#allocation2 + $0x8] sm:$0xff]
      %v624 = vld [vmem:[#allocation2 + $0x10] sm:$0xff]
      %v625 = vld [vmem:[#allocation2 + $0x18] sm:$0xff]
      %v626 = vld [vmem:[#allocation2 + $0x20] sm:$0xff]
      %v627 = vld [vmem:[#allocation2 + $0x28] sm:$0xff]
      %v628 = vld [vmem:[#allocation2 + $0x30] sm:$0xff]
      %v629 = vld [vmem:[#allocation2 + $0x38] sm:$0xff]
      %v630 = vld [vmem:[#allocation2 + $0x40] sm:$0xff]
      %v631 = vld [vmem:[#allocation2 + $0x48] sm:$0xff]
      %v632 = vld [vmem:[#allocation2 + $0x50] sm:$0xff]
      %v633 = vld [vmem:[#allocation2 + $0x58] sm:$0xff]
      %v634 = vld [vmem:[#allocation2 + $0x60] sm:$0xff]
      %v635 = vld [vmem:[#allocation2 + $0x68] sm:$0xff]
      %v636 = vld [vmem:[#allocation2 + $0x70] sm:$0xff]
      %v637 = vld [vmem:[#allocation2 + $0x78] sm:$0xff]
      %v638 = vld [vmem:[#allocation2 + $0x80] sm:$0xff]
      %v639 = vld [vmem:[#allocation2 + $0x88] sm:$0xff]
      %v640 = vld [vmem:[#allocation2 + $0x90] sm:$0xff]
      %v641 = vld [vmem:[#allocation2 + $0x98] sm:$0xff]
      %v642 = vld [vmem:[#allocation2 + $0xa0] sm:$0xff]
      %v643 = vld [vmem:[#allocation2 + $0xa8] sm:$0xff]
      %v644 = vld [vmem:[#allocation2 + $0xb0] sm:$0xff]
      %v645 = vld [vmem:[#allocation2 + $0xb8] sm:$0xff]
      %v646 = vld [vmem:[#allocation2 + $0xc0] sm:$0xff]
      %v647 = vld [vmem:[#allocation2 + $0xc8] sm:$0xff]
      %v648 = vld [vmem:[#allocation2 + $0xd0] sm:$0xff]
      %v649 = vld [vmem:[#allocation2 + $0xd8] sm:$0xff]
      %v650 = vld [vmem:[#allocation2 + $0xe0] sm:$0xff]
      %v651 = vld [vmem:[#allocation2 + $0xe8] sm:$0xff]
      %v652 = vld [vmem:[%s1] sm:$0xff]
      %v653 = vld [vmem:[%s1 + $0x8] sm:$0xff]
      %v654 = vld [vmem:[%s1 + $0x10] sm:$0xff]
      %v655 = vld [vmem:[%s1 + $0x18] sm:$0xff]
      %v656 = vld [vmem:[%s1 + $0x20] sm:$0xff]
      %v657 = vld [vmem:[%s1 + $0x28] sm:$0xff]
      %v658 = vld [vmem:[%s1 + $0x30] sm:$0xff]
      %v659 = vld [vmem:[%s1 + $0x38] sm:$0xff]
      %v660 = vld [vmem:[%s1 + $0x40] sm:$0xff]
      %v661 = vld [vmem:[%s1 + $0x48] sm:$0xff]
      %v662 = vld [vmem:[%s1 + $0x50] sm:$0xff]
      %v663 = vld [vmem:[%s1 + $0x58] sm:$0xff]
      %v664 = vld [vmem:[%s1 + $0x60] sm:$0xff]
      %v665 = vld [vmem:[%s1 + $0x68] sm:$0xff]
      %v666 = vld [vmem:[%s1 + $0x70] sm:$0xff]
      %v667 = vld [vmem:[%s1 + $0x78] sm:$0xff]
      %v668 = vld [vmem:[%s1 + $0x80] sm:$0xff]
      %v669 = vld [vmem:[%s1 + $0x88] sm:$0xff]
      %v670 = vld [vmem:[%s1 + $0x90] sm:$0xff]
      %v671 = vld [vmem:[%s1 + $0x98] sm:$0xff]
      %v672 = vld [vmem:[%s1 + $0xa0] sm:$0xff]
      %v673 = vld [vmem:[%s1 + $0xa8] sm:$0xff]
      %v674 = vld [vmem:[%s1 + $0xb0] sm:$0xff]
      %v675 = vld [vmem:[%s1 + $0xb8] sm:$0xff]
      %v676 = vld [vmem:[%s1 + $0xc0] sm:$0xff]
      %v677 = vld [vmem:[%s1 + $0xc8] sm:$0xff]
      %v678 = vld [vmem:[%s1 + $0xd0] sm:$0xff]
      %v679 = vld [vmem:[%s1 + $0xd8] sm:$0xff]
      %v680 = vld [vmem:[%s1 + $0xe0] sm:$0xff]
      %v681 = vld [vmem:[%s1 + $0xe8] sm:$0xff]
      %v682 = vld [vmem:[%s1 + $0xf0] sm:$0xff]
      %v683 = vld [vmem:[%s1 + $0xf8] sm:$0xff]
      %v684 = vld [vmem:[%s1 + $0x100] sm:$0xff]
      %v685 = vld [vmem:[%s1 + $0x108] sm:$0xff]
      %v686 = vld [vmem:[%s1 + $0x110] sm:$0xff]
      %v687 = vld [vmem:[%s1 + $0x118] sm:$0xff]
      %v688 = vld [vmem:[%s1 + $0x120] sm:$0xff]
      %v689 = vld [vmem:[%s1 + $0x128] sm:$0xff]
      %v690 = vld [vmem:[%s1 + $0x130] sm:$0xff]
      %v691 = vld [vmem:[%s1 + $0x138] sm:$0xff]
      %v692 = vld [vmem:[%s1 + $0x140] sm:$0xff]
      %v693 = vld [vmem:[%s1 + $0x148] sm:$0xff]
      %v694 = vld [vmem:[%s1 + $0x150] sm:$0xff]
      %v695 = vld [vmem:[%s1 + $0x158] sm:$0xff]
      %v696 = vld [vmem:[%s1 + $0x160] sm:$0xff]
      %v697 = vld [vmem:[%s1 + $0x168] sm:$0xff]
      %v698 = vld [vmem:[%s1 + $0x170] sm:$0xff]
      %v699 = vld [vmem:[%s1 + $0x178] sm:$0xff]
      %v700 = vld [vmem:[%s1 + $0x180] sm:$0xff]
      %v701 = vld [vmem:[%s1 + $0x188] sm:$0xff]
      %v702 = vld [vmem:[%s1 + $0x190] sm:$0xff]
      %v703 = vld [vmem:[%s1 + $0x198] sm:$0xff]
      %v704 = vld [vmem:[%s1 + $0x1a0] sm:$0xff]
      %v705 = vld [vmem:[%s1 + $0x1a8] sm:$0xff]
      %v706 = vld [vmem:[%s1 + $0x1b0] sm:$0xff]
      %v707 = vld [vmem:[%s1 + $0x1b8] sm:$0xff]
      %v708 = vld [vmem:[%s1 + $0x1c0] sm:$0xff]
      %v709 = vld [vmem:[%s1 + $0x1c8] sm:$0xff]
      %v710 = vld [vmem:[%s1 + $0x1d0] sm:$0xff]
      %v711 = vld [vmem:[%s1 + $0x1d8] sm:$0xff]
      %v712 = vld [vmem:[%s1 + $0x1e0] sm:$0xff]
      %v713 = vld [vmem:[%s1 + $0x1e8] sm:$0xff]
      %v714 = vld [vmem:[%s1 + $0x1f0] sm:$0xff]
      %v715 = vld [vmem:[%s1 + $0x1f8] sm:$0xff]
      %v716 = vld [vmem:[%s1 + $0x200] sm:$0xff]
      %v717 = vld [vmem:[%s1 + $0x208] sm:$0xff]
      %v718 = vld [vmem:[%s1 + $0x210] sm:$0xff]
      %v719 = vld [vmem:[%s1 + $0x218] sm:$0xff]
      %v720 = vld [vmem:[%s1 + $0x220] sm:$0xff]
      %v721 = vld [vmem:[%s1 + $0x228] sm:$0xff]
      %v722 = vld [vmem:[%s1 + $0x230] sm:$0xff]
      %v723 = vld [vmem:[%s1 + $0x238] sm:$0xff]
      %v724 = vld [vmem:[%s1 + $0x240] sm:$0xff]
      %v725 = vld [vmem:[%s1 + $0x248] sm:$0xff]
      %v726 = vld [vmem:[%s1 + $0x250] sm:$0xff]
      %v727 = vld [vmem:[%s1 + $0x258] sm:$0xff]
      %v728 = vld [vmem:[%s1 + $0x260] sm:$0xff]
      %v729 = vld [vmem:[%s1 + $0x268] sm:$0xff]
      %v730 = vld [vmem:[%s1 + $0x270] sm:$0xff]
      %v731 = vld [vmem:[%s1 + $0x278] sm:$0xff]
      %v732 = vld [vmem:[%s1 + $0x280] sm:$0xff]
      %v733 = vld [vmem:[%s1 + $0x288] sm:$0xff]
      %v734 = vld [vmem:[%s1 + $0x290] sm:$0xff]
      %v735 = vld [vmem:[%s1 + $0x298] sm:$0xff]
      %v736 = vld [vmem:[%s1 + $0x2a0] sm:$0xff]
      %v737 = vld [vmem:[%s1 + $0x2a8] sm:$0xff]
      %v738 = vld [vmem:[%s1 + $0x2b0] sm:$0xff]
      %v739 = vld [vmem:[%s1 + $0x2b8] sm:$0xff]
      %v740 = vld [vmem:[%s1 + $0x2c0] sm:$0xff]
      %v741 = vld [vmem:[%s1 + $0x2c8] sm:$0xff]
      %v742 = vld [vmem:[%s1 + $0x2d0] sm:$0xff]
      %v743 = vld [vmem:[%s1 + $0x2d8] sm:$0xff]
      %v744 = vld [vmem:[%s1 + $0x2e0] sm:$0xff]
      %v745 = vld [vmem:[%s1 + $0x2e8] sm:$0xff]
      %v746 = vld [vmem:[%s1 + $0x2f0] sm:$0xff]
      %v747 = vld [vmem:[%s1 + $0x2f8] sm:$0xff]
      %v748 = vld [vmem:[%s1 + $0x300] sm:$0xff]
      %v749 = vld [vmem:[%s1 + $0x308] sm:$0xff]
      %v750 = vld [vmem:[%s1 + $0x310] sm:$0xff]
      %v751 = vld [vmem:[%s1 + $0x318] sm:$0xff]
      %v752 = vld [vmem:[%s1 + $0x320] sm:$0xff]
      %v753 = vld [vmem:[%s1 + $0x328] sm:$0xff]
      %v754 = vld [vmem:[%s1 + $0x330] sm:$0xff]
      %v755 = vld [vmem:[%s1 + $0x338] sm:$0xff]
      %v756 = vld [vmem:[%s1 + $0x340] sm:$0xff]
      %v757 = vld [vmem:[%s1 + $0x348] sm:$0xff]
      %v758 = vld [vmem:[%s1 + $0x350] sm:$0xff]
      %v759 = vld [vmem:[%s1 + $0x358] sm:$0xff]
      %v760 = vld [vmem:[%s1 + $0x360] sm:$0xff]
      %v761 = vld [vmem:[%s1 + $0x368] sm:$0xff]
      %v762 = vld [vmem:[%s1 + $0x370] sm:$0xff]
      %v763 = vld [vmem:[%s1 + $0x378] sm:$0xff]
      %v764 = vld [vmem:[%s1 + $0x380] sm:$0xff]
      %v765 = vld [vmem:[%s1 + $0x388] sm:$0xff]
      %v766 = vld [vmem:[%s1 + $0x390] sm:$0xff]
      %v767 = vld [vmem:[%s1 + $0x398] sm:$0xff]
      %v768 = vld [vmem:[%s1 + $0x3a0] sm:$0xff]
      %v769 = vld [vmem:[%s1 + $0x3a8] sm:$0xff]
      %v770 = vld [vmem:[%s1 + $0x3b0] sm:$0xff]
      %v771 = vld [vmem:[%s1 + $0x3b8] sm:$0xff]
      %v772 = vld [vmem:[%s1 + $0x3c0] sm:$0xff]
      %v773 = vld [vmem:[%s1 + $0x3c8] sm:$0xff]
      %v774 = vld [vmem:[%s1 + $0x3d0] sm:$0xff]
      %v775 = vld [vmem:[%s1 + $0x3d8] sm:$0xff]
      %v776 = vld [vmem:[%s1 + $0x3e0] sm:$0xff]
      %v777 = vld [vmem:[%s1 + $0x3e8] sm:$0xff]
      %v778 = vld [vmem:[%s1 + $0x3f0] sm:$0xff]
      %v779 = vld [vmem:[%s1 + $0x3f8] sm:$0xff]
      %v780 = vld [vmem:[%s1 + $0x400] sm:$0xff]
      %v781 = vld [vmem:[%s1 + $0x408] sm:$0xff]
      %v782 = vld [vmem:[%s1 + $0x410] sm:$0xff]
      %v783 = vld [vmem:[%s1 + $0x418] sm:$0xff]
      %v784 = vld [vmem:[%s1 + $0x420] sm:$0xff]
      %v785 = vld [vmem:[%s1 + $0x428] sm:$0xff]
      %v786 = vld [vmem:[%s1 + $0x430] sm:$0xff]
      %v787 = vld [vmem:[%s1 + $0x438] sm:$0xff]
      %v788 = vld [vmem:[%s1 + $0x440] sm:$0xff]
      %v789 = vld [vmem:[%s1 + $0x448] sm:$0xff]
      %v790 = vld [vmem:[%s1 + $0x450] sm:$0xff]
      %v791 = vld [vmem:[%s1 + $0x458] sm:$0xff]
      %v792 = vld [vmem:[%s1 + $0x460] sm:$0xff]
      %v793 = vld [vmem:[%s1 + $0x468] sm:$0xff]
      %v794 = vld [vmem:[%s1 + $0x470] sm:$0xff]
      %v795 = vld [vmem:[%s1 + $0x478] sm:$0xff]
      %v796 = vld [vmem:[%s1 + $0x480] sm:$0xff]
      %v797 = vld [vmem:[%s1 + $0x488] sm:$0xff]
      %v798 = vld [vmem:[%s1 + $0x490] sm:$0xff]
      %v799 = vld [vmem:[%s1 + $0x498] sm:$0xff]
      %v800 = vld [vmem:[%s1 + $0x4a0] sm:$0xff]
      %v801 = vld [vmem:[%s1 + $0x4a8] sm:$0xff]
      %v802 = vld [vmem:[%s1 + $0x4b0] sm:$0xff]
      %v803 = vld [vmem:[%s1 + $0x4b8] sm:$0xff]
      %v804 = vld [vmem:[%s1 + $0x4c0] sm:$0xff]
      %v805 = vld [vmem:[%s1 + $0x4c8] sm:$0xff]
      %v806 = vld [vmem:[%s1 + $0x4d0] sm:$0xff]
      %v807 = vld [vmem:[%s1 + $0x4d8] sm:$0xff]
      %v808 = vld [vmem:[%s1 + $0x4e0] sm:$0xff]
      %v809 = vld [vmem:[%s1 + $0x4e8] sm:$0xff]
      %v810 = vld [vmem:[%s1 + $0x4f0] sm:$0xff]
      %v811 = vld [vmem:[%s1 + $0x4f8] sm:$0xff]
      %v812 = vld [vmem:[%s1 + $0x500] sm:$0xff]
      %v813 = vld [vmem:[%s1 + $0x508] sm:$0xff]
      %v814 = vld [vmem:[%s1 + $0x510] sm:$0xff]
      %v815 = vld [vmem:[%s1 + $0x518] sm:$0xff]
      %v816 = vld [vmem:[%s1 + $0x520] sm:$0xff]
      %v817 = vld [vmem:[%s1 + $0x528] sm:$0xff]
      %v818 = vld [vmem:[%s1 + $0x530] sm:$0xff]
      %v819 = vld [vmem:[%s1 + $0x538] sm:$0xff]
      %v820 = vld [vmem:[%s1 + $0x540] sm:$0xff]
      %v821 = vld [vmem:[%s1 + $0x548] sm:$0xff]
      %v822 = vld [vmem:[%s1 + $0x550] sm:$0xff]
      %v823 = vld [vmem:[%s1 + $0x558] sm:$0xff]
      %v824 = vld [vmem:[%s1 + $0x560] sm:$0xff]
      %v825 = vld [vmem:[%s1 + $0x568] sm:$0xff]
      %v826 = vld [vmem:[%s1 + $0x570] sm:$0xff]
      %v827 = vld [vmem:[%s1 + $0x578] sm:$0xff]
      %v828 = vld [vmem:[%s1 + $0x580] sm:$0xff]
      %v829 = vld [vmem:[%s1 + $0x588] sm:$0xff]
      %v830 = vld [vmem:[%s1 + $0x590] sm:$0xff]
      %v831 = vld [vmem:[%s1 + $0x598] sm:$0xff]
      %v832 = vld [vmem:[%s1 + $0x5a0] sm:$0xff]
      %v833 = vld [vmem:[%s1 + $0x5a8] sm:$0xff]
      %v834 = vld [vmem:[%s1 + $0x5b0] sm:$0xff]
      %v835 = vld [vmem:[%s1 + $0x5b8] sm:$0xff]
      %v836 = vld [vmem:[%s1 + $0x5c0] sm:$0xff]
      %v837 = vld [vmem:[%s1 + $0x5c8] sm:$0xff]
      %v838 = vld [vmem:[%s1 + $0x5d0] sm:$0xff]
      %v839 = vld [vmem:[%s1 + $0x5d8] sm:$0xff]
      %v840 = vld [vmem:[%s1 + $0x5e0] sm:$0xff]
      %v841 = vld [vmem:[%s1 + $0x5e8] sm:$0xff]
      %v842 = vld [vmem:[%s1 + $0x5f0] sm:$0xff]
      %v843 = vld [vmem:[%s1 + $0x5f8] sm:$0xff]
      %v844 = vld [vmem:[%s1 + $0x600] sm:$0xff]
      %v845 = vld [vmem:[%s1 + $0x608] sm:$0xff]
      %v846 = vld [vmem:[%s1 + $0x610] sm:$0xff]
      %v847 = vld [vmem:[%s1 + $0x618] sm:$0xff]
      %v848 = vld [vmem:[%s1 + $0x620] sm:$0xff]
      %v849 = vld [vmem:[%s1 + $0x628] sm:$0xff]
      %v850 = vld [vmem:[%s1 + $0x630] sm:$0xff]
      %v851 = vld [vmem:[%s1 + $0x638] sm:$0xff]
      %v852 = vld [vmem:[%s1 + $0x640] sm:$0xff]
      %v853 = vld [vmem:[%s1 + $0x648] sm:$0xff]
      %v854 = vld [vmem:[%s1 + $0x650] sm:$0xff]
      %v855 = vld [vmem:[%s1 + $0x658] sm:$0xff]
      %v856 = vld [vmem:[%s1 + $0x660] sm:$0xff]
      %v857 = vld [vmem:[%s1 + $0x668] sm:$0xff]
      %v858 = vld [vmem:[%s1 + $0x670] sm:$0xff]
      %v859 = vld [vmem:[%s1 + $0x678] sm:$0xff]
      %v860 = vld [vmem:[%s1 + $0x680] sm:$0xff]
      %v861 = vld [vmem:[%s1 + $0x688] sm:$0xff]
      %v862 = vld [vmem:[%s1 + $0x690] sm:$0xff]
      %v863 = vld [vmem:[%s1 + $0x698] sm:$0xff]
      %v864 = vld [vmem:[%s1 + $0x6a0] sm:$0xff]
      %v865 = vld [vmem:[%s1 + $0x6a8] sm:$0xff]
      %v866 = vld [vmem:[%s1 + $0x6b0] sm:$0xff]
      %v867 = vld [vmem:[%s1 + $0x6b8] sm:$0xff]
      %v868 = vld [vmem:[%s1 + $0x6c0] sm:$0xff]
      %v869 = vld [vmem:[%s1 + $0x6c8] sm:$0xff]
      %v870 = vld [vmem:[%s1 + $0x6d0] sm:$0xff]
      %v871 = vld [vmem:[%s1 + $0x6d8] sm:$0xff]
      %v872 = vld [vmem:[%s1 + $0x6e0] sm:$0xff]
      %v873 = vld [vmem:[%s1 + $0x6e8] sm:$0xff]
      %v874 = vld [vmem:[%s1 + $0x6f0] sm:$0xff]
      %v875 = vld [vmem:[%s1 + $0x6f8] sm:$0xff]
      %v876 = vld [vmem:[%s1 + $0x700] sm:$0xff]
      %v877 = vld [vmem:[%s1 + $0x708] sm:$0xff]
      %v878 = vld [vmem:[%s1 + $0x710] sm:$0xff]
      %v879 = vld [vmem:[%s1 + $0x718] sm:$0xff]
      %v880 = vld [vmem:[%s1 + $0x720] sm:$0xff]
      %v881 = vld [vmem:[%s1 + $0x728] sm:$0xff]
      %v882 = vld [vmem:[%s1 + $0x730] sm:$0xff]
      %v883 = vld [vmem:[%s1 + $0x738] sm:$0xff]
      %v884 = vld [vmem:[%s1 + $0x740] sm:$0xff]
      %v885 = vld [vmem:[%s1 + $0x748] sm:$0xff]
      %v886 = vld [vmem:[%s1 + $0x750] sm:$0xff]
      %v887 = vld [vmem:[%s1 + $0x758] sm:$0xff]
      %v888 = vld [vmem:[%s1 + $0x760] sm:$0xff]
      %v889 = vld [vmem:[%s1 + $0x768] sm:$0xff]
      %v890 = vld [vmem:[%s1 + $0x770] sm:$0xff]
      %v891 = vld [vmem:[%s1 + $0x778] sm:$0xff]
      %v892 = vld [vmem:[%s1 + $0x780] sm:$0xff]
      %v893 = vld [vmem:[%s1 + $0x788] sm:$0xff]
      %v894 = vld [vmem:[%s1 + $0x790] sm:$0xff]
      %v895 = vld [vmem:[%s1 + $0x798] sm:$0xff]
      %v896 = vld [vmem:[%s1 + $0x7a0] sm:$0xff]
      %v897 = vld [vmem:[%s1 + $0x7a8] sm:$0xff]
      %v898 = vld [vmem:[%s1 + $0x7b0] sm:$0xff]
      %v899 = vld [vmem:[%s1 + $0x7b8] sm:$0xff]
      %v900 = vld [vmem:[%s1 + $0x7c0] sm:$0xff]
      %v901 = vld [vmem:[%s1 + $0x7c8] sm:$0xff]
      %v902 = vld [vmem:[%s1 + $0x7d0] sm:$0xff]
      %v903 = vld [vmem:[%s1 + $0x7d8] sm:$0xff]
      %v904 = vld [vmem:[%s1 + $0x7e0] sm:$0xff]
      %v905 = vld [vmem:[%s1 + $0x7e8] sm:$0xff]
      %v906 = vld [vmem:[%s1 + $0x7f0] sm:$0xff]
      %v907 = vld [vmem:[%s1 + $0x7f8] sm:$0xff]
      %v908 = vld [vmem:[%s1 + $0x800] sm:$0xff]
      %v909 = vld [vmem:[%s1 + $0x808] sm:$0xff]
      %v910 = vld [vmem:[%s1 + $0x810] sm:$0xff]
      %v911 = vld [vmem:[%s1 + $0x818] sm:$0xff]
      %v912 = vld [vmem:[%s1 + $0x820] sm:$0xff]
      %v913 = vld [vmem:[%s1 + $0x828] sm:$0xff]
      %v914 = vld [vmem:[%s1 + $0x830] sm:$0xff]
      %v915 = vld [vmem:[%s1 + $0x838] sm:$0xff]
      %v916 = vld [vmem:[%s1 + $0x840] sm:$0xff]
      %v917 = vld [vmem:[%s1 + $0x848] sm:$0xff]
      %v918 = vld [vmem:[%s1 + $0x850] sm:$0xff]
      %v919 = vld [vmem:[%s1 + $0x858] sm:$0xff]
      %v920 = vld [vmem:[%s1 + $0x860] sm:$0xff]
      %v921 = vld [vmem:[%s1 + $0x868] sm:$0xff]
      %v922 = vld [vmem:[%s1 + $0x870] sm:$0xff]
      %v923 = vld [vmem:[%s1 + $0x878] sm:$0xff]
      %v924 = vld [vmem:[%s1 + $0x880] sm:$0xff]
      %v925 = vld [vmem:[%s1 + $0x888] sm:$0xff]
      %v926 = vld [vmem:[%s1 + $0x890] sm:$0xff]
      %v927 = vld [vmem:[%s1 + $0x898] sm:$0xff]
      %v928 = vld [vmem:[%s1 + $0x8a0] sm:$0xff]
      %v929 = vld [vmem:[%s1 + $0x8a8] sm:$0xff]
      %v930 = vld [vmem:[%s1 + $0x8b0] sm:$0xff]
      %v931 = vld [vmem:[%s1 + $0x8b8] sm:$0xff]
      %v932 = vld [vmem:[%s1 + $0x8c0] sm:$0xff]
      %v933 = vld [vmem:[%s1 + $0x8c8] sm:$0xff]
      %v934 = vld [vmem:[%s1 + $0x8d0] sm:$0xff]
      %v935 = vld [vmem:[%s1 + $0x8d8] sm:$0xff]
      %v936 = vld [vmem:[%s1 + $0x8e0] sm:$0xff]
      %v937 = vld [vmem:[%s1 + $0x8e8] sm:$0xff]
      %v938 = vld [vmem:[%s1 + $0x8f0] sm:$0xff]
      %v939 = vld [vmem:[%s1 + $0x8f8] sm:$0xff]
      %v940 = vld [vmem:[%s1 + $0x900] sm:$0xff]
      %v941 = vld [vmem:[%s1 + $0x908] sm:$0xff]
      %v942 = vld [vmem:[%s1 + $0x910] sm:$0xff]
      %v943 = vld [vmem:[%s1 + $0x918] sm:$0xff]
      %v944 = vld [vmem:[%s1 + $0x920] sm:$0xff]
      %v945 = vld [vmem:[%s1 + $0x928] sm:$0xff]
      %v946 = vld [vmem:[%s1 + $0x930] sm:$0xff]
      %v947 = vld [vmem:[%s1 + $0x938] sm:$0xff]
      %v948 = vld [vmem:[%s1 + $0x940] sm:$0xff]
      %v949 = vld [vmem:[%s1 + $0x948] sm:$0xff]
      %v950 = vld [vmem:[%s1 + $0x950] sm:$0xff]
      %v951 = vld [vmem:[%s1 + $0x958] sm:$0xff]
      %v952 = vld [vmem:[%s1 + $0x960] sm:$0xff]
      %v953 = vld [vmem:[%s1 + $0x968] sm:$0xff]
      %v954 = vld [vmem:[%s1 + $0x970] sm:$0xff]
      %v955 = vld [vmem:[%s1 + $0x978] sm:$0xff]
      %v956 = vld [vmem:[%s1 + $0x980] sm:$0xff]
      %v957 = vld [vmem:[%s1 + $0x988] sm:$0xff]
      %v958 = vld [vmem:[%s1 + $0x990] sm:$0xff]
      %v959 = vld [vmem:[%s1 + $0x998] sm:$0xff]
      %v960 = vld [vmem:[%s1 + $0x9a0] sm:$0xff]
      %v961 = vld [vmem:[%s1 + $0x9a8] sm:$0xff]
      %v962 = vld [vmem:[%s1 + $0x9b0] sm:$0xff]
      %v963 = vld [vmem:[%s1 + $0x9b8] sm:$0xff]
      %v964 = vld [vmem:[%s1 + $0x9c0] sm:$0xff]
      %v965 = vld [vmem:[%s1 + $0x9c8] sm:$0xff]
      %v966 = vld [vmem:[%s1 + $0x9d0] sm:$0xff]
      %v967 = vld [vmem:[%s1 + $0x9d8] sm:$0xff]
      %v968 = vld [vmem:[%s1 + $0x9e0] sm:$0xff]
      %v969 = vld [vmem:[%s1 + $0x9e8] sm:$0xff]
      %v970 = vld [vmem:[%s1 + $0x9f0] sm:$0xff]
      %v971 = vld [vmem:[%s1 + $0x9f8] sm:$0xff]
      %v972 = vld [vmem:[%s1 + $0xa00] sm:$0xff]
      %v973 = vld [vmem:[%s1 + $0xa08] sm:$0xff]
      %v974 = vld [vmem:[%s1 + $0xa10] sm:$0xff]
      %v975 = vld [vmem:[%s1 + $0xa18] sm:$0xff]
      %v976 = vld [vmem:[%s1 + $0xa20] sm:$0xff]
      %v977 = vld [vmem:[%s1 + $0xa28] sm:$0xff]
      %v978 = vld [vmem:[%s1 + $0xa30] sm:$0xff]
      %v979 = vld [vmem:[%s1 + $0xa38] sm:$0xff]
      %v980 = vld [vmem:[%s1 + $0xa40] sm:$0xff]
      %v981 = vld [vmem:[%s1 + $0xa48] sm:$0xff]
      %v982 = vld [vmem:[%s1 + $0xa50] sm:$0xff]
      %v983 = vld [vmem:[%s1 + $0xa58] sm:$0xff]
      %v984 = vld [vmem:[%s1 + $0xa60] sm:$0xff]
      %v985 = vld [vmem:[%s1 + $0xa68] sm:$0xff]
      %v986 = vld [vmem:[%s1 + $0xa70] sm:$0xff]
      %v987 = vld [vmem:[%s1 + $0xa78] sm:$0xff]
      %v988 = vld [vmem:[%s1 + $0xa80] sm:$0xff]
      %v989 = vld [vmem:[%s1 + $0xa88] sm:$0xff]
      %v990 = vld [vmem:[%s1 + $0xa90] sm:$0xff]
      %v991 = vld [vmem:[%s1 + $0xa98] sm:$0xff]
      %v992 = vld [vmem:[%s1 + $0xaa0] sm:$0xff]
      %v993 = vld [vmem:[%s1 + $0xaa8] sm:$0xff]
      %v994 = vld [vmem:[%s1 + $0xab0] sm:$0xff]
      %v995 = vld [vmem:[%s1 + $0xab8] sm:$0xff]
      %v996 = vld [vmem:[%s1 + $0xac0] sm:$0xff]
      %v997 = vld [vmem:[%s1 + $0xac8] sm:$0xff]
      %v998 = vld [vmem:[%s1 + $0xad0] sm:$0xff]
      %v999 = vld [vmem:[%s1 + $0xad8] sm:$0xff]
      %v1000 = vld [vmem:[%s1 + $0xae0] sm:$0xff]
      %v1001 = vld [vmem:[%s1 + $0xae8] sm:$0xff]
      %v1002 = vld [vmem:[%s1 + $0xaf0] sm:$0xff]
      %v1003 = vld [vmem:[%s1 + $0xaf8] sm:$0xff]
      %v1004 = vld [vmem:[%s1 + $0xb00] sm:$0xff]
      %v1005 = vld [vmem:[%s1 + $0xb08] sm:$0xff]
      %v1006 = vld [vmem:[%s1 + $0xb10] sm:$0xff]
      %v1007 = vld [vmem:[%s1 + $0xb18] sm:$0xff]
      %v1008 = vld [vmem:[%s1 + $0xb20] sm:$0xff]
      %v1009 = vld [vmem:[%s1 + $0xb28] sm:$0xff]
      %v1010 = vld [vmem:[%s1 + $0xb30] sm:$0xff]
      %v1011 = vld [vmem:[%s1 + $0xb38] sm:$0xff]
      %v1012 = vld [vmem:[%s1 + $0xb40] sm:$0xff]
      %v1013 = vld [vmem:[%s1 + $0xb48] sm:$0xff]
      %v1014 = vld [vmem:[%s1 + $0xb50] sm:$0xff]
      %v1015 = vld [vmem:[%s1 + $0xb58] sm:$0xff]
      %v1016 = vld [vmem:[%s1 + $0xb60] sm:$0xff]
      %v1017 = vld [vmem:[%s1 + $0xb68] sm:$0xff]
      %v1018 = vld [vmem:[%s1 + $0xb70] sm:$0xff]
      %v1019 = vld [vmem:[%s1 + $0xb78] sm:$0xff]
      %v1020 = vld [vmem:[%s1 + $0xb80] sm:$0xff]
      %v1021 = vld [vmem:[%s1 + $0xb88] sm:$0xff]
      %v1022 = vld [vmem:[%s1 + $0xb90] sm:$0xff]
      %v1023 = vld [vmem:[%s1 + $0xb98] sm:$0xff]
      %v1024 = vld [vmem:[%s1 + $0xba0] sm:$0xff]
      %v1025 = vld [vmem:[%s1 + $0xba8] sm:$0xff]
      %v1026 = vld [vmem:[%s1 + $0xbb0] sm:$0xff]
      %v1027 = vld [vmem:[%s1 + $0xbb8] sm:$0xff]
      %v1028 = vld [vmem:[%s1 + $0xbc0] sm:$0xff]
      %v1029 = vld [vmem:[%s1 + $0xbc8] sm:$0xff]
      %v1030 = vld [vmem:[%s1 + $0xbd0] sm:$0xff]
      %v1031 = vld [vmem:[%s1 + $0xbd8] sm:$0xff]
      %v1032 = vld [vmem:[%s1 + $0xbe0] sm:$0xff]
      %v1033 = vld [vmem:[%s1 + $0xbe8] sm:$0xff]
      %v1034 = vld [vmem:[%s1 + $0xbf0] sm:$0xff]
      %v1035 = vld [vmem:[%s1 + $0xbf8] sm:$0xff]
      %v1036 = vld [vmem:[%s1 + $0xc00] sm:$0xff]
      %v1037 = vld [vmem:[%s1 + $0xc08] sm:$0xff]
      %v1038 = vld [vmem:[%s1 + $0xc10] sm:$0xff]
      %v1039 = vld [vmem:[%s1 + $0xc18] sm:$0xff]
      %v1040 = vld [vmem:[%s1 + $0xc20] sm:$0xff]
      %v1041 = vld [vmem:[%s1 + $0xc28] sm:$0xff]
      %v1042 = vld [vmem:[%s1 + $0xc30] sm:$0xff]
      %v1043 = vld [vmem:[%s1 + $0xc38] sm:$0xff]
      %v1044 = vld [vmem:[%s1 + $0xc40] sm:$0xff]
      %v1045 = vld [vmem:[%s1 + $0xc48] sm:$0xff]
      %v1046 = vld [vmem:[%s1 + $0xc50] sm:$0xff]
      %v1047 = vld [vmem:[%s1 + $0xc58] sm:$0xff]
      %v1048 = vld [vmem:[%s1 + $0xc60] sm:$0xff]
      %v1049 = vld [vmem:[%s1 + $0xc68] sm:$0xff]
      %v1050 = vld [vmem:[%s1 + $0xc70] sm:$0xff]
      %v1051 = vld [vmem:[%s1 + $0xc78] sm:$0xff]
      %v1052 = vld [vmem:[%s1 + $0xc80] sm:$0xff]
      %v1053 = vld [vmem:[%s1 + $0xc88] sm:$0xff]
      %v1054 = vld [vmem:[%s1 + $0xc90] sm:$0xff]
      %v1055 = vld [vmem:[%s1 + $0xc98] sm:$0xff]
      %v1056 = vld [vmem:[%s1 + $0xca0] sm:$0xff]
      %v1057 = vld [vmem:[%s1 + $0xca8] sm:$0xff]
      %v1058 = vld [vmem:[%s1 + $0xcb0] sm:$0xff]
      %v1059 = vld [vmem:[%s1 + $0xcb8] sm:$0xff]
      %v1060 = vld [vmem:[%s1 + $0xcc0] sm:$0xff]
      %v1061 = vld [vmem:[%s1 + $0xcc8] sm:$0xff]
      %v1062 = vld [vmem:[%s1 + $0xcd0] sm:$0xff]
      %v1063 = vld [vmem:[%s1 + $0xcd8] sm:$0xff]
      %v1064 = vld [vmem:[%s1 + $0xce0] sm:$0xff]
      %v1065 = vld [vmem:[%s1 + $0xce8] sm:$0xff]
      %v1066 = vld [vmem:[%s1 + $0xcf0] sm:$0xff]
      %v1067 = vld [vmem:[%s1 + $0xcf8] sm:$0xff]
      %v1068 = vld [vmem:[%s1 + $0xd00] sm:$0xff]
      %v1069 = vld [vmem:[%s1 + $0xd08] sm:$0xff]
      %v1070 = vld [vmem:[%s1 + $0xd10] sm:$0xff]
      %v1071 = vld [vmem:[%s1 + $0xd18] sm:$0xff]
      %v1072 = vld [vmem:[%s1 + $0xd20] sm:$0xff]
      %v1073 = vld [vmem:[%s1 + $0xd28] sm:$0xff]
      %v1074 = vld [vmem:[%s1 + $0xd30] sm:$0xff]
      %v1075 = vld [vmem:[%s1 + $0xd38] sm:$0xff]
      %v1076 = vld [vmem:[%s1 + $0xd40] sm:$0xff]
      %v1077 = vld [vmem:[%s1 + $0xd48] sm:$0xff]
      %v1078 = vld [vmem:[%s1 + $0xd50] sm:$0xff]
      %v1079 = vld [vmem:[%s1 + $0xd58] sm:$0xff]
      %v1080 = vld [vmem:[%s1 + $0xd60] sm:$0xff]
      %v1081 = vld [vmem:[%s1 + $0xd68] sm:$0xff]
      %v1082 = vld [vmem:[%s1 + $0xd70] sm:$0xff]
      %v1083 = vld [vmem:[%s1 + $0xd78] sm:$0xff]
      %v1084 = vld [vmem:[%s1 + $0xd80] sm:$0xff]
      %v1085 = vld [vmem:[%s1 + $0xd88] sm:$0xff]
      %v1086 = vld [vmem:[%s1 + $0xd90] sm:$0xff]
      %v1087 = vld [vmem:[%s1 + $0xd98] sm:$0xff]
      %v1088 = vld [vmem:[%s1 + $0xda0] sm:$0xff]
      %v1089 = vld [vmem:[%s1 + $0xda8] sm:$0xff]
      %v1090 = vld [vmem:[%s1 + $0xdb0] sm:$0xff]
      %v1091 = vld [vmem:[%s1 + $0xdb8] sm:$0xff]
      %v1092 = vld [vmem:[%s1 + $0xdc0] sm:$0xff]
      %v1093 = vld [vmem:[%s1 + $0xdc8] sm:$0xff]
      %v1094 = vld [vmem:[%s1 + $0xdd0] sm:$0xff]
      %v1095 = vld [vmem:[%s1 + $0xdd8] sm:$0xff]
      %v1096 = vld [vmem:[%s1 + $0xde0] sm:$0xff]
      %v1097 = vld [vmem:[%s1 + $0xde8] sm:$0xff]
      %v1098 = vld [vmem:[%s1 + $0xdf0] sm:$0xff]
      %v1099 = vld [vmem:[%s1 + $0xdf8] sm:$0xff]
      %v1100 = vld [vmem:[%s1 + $0xe00] sm:$0xff]
      %v1101 = vld [vmem:[%s1 + $0xe08] sm:$0xff]
      %v1102 = vld [vmem:[%s1 + $0xe10] sm:$0xff]
      %v1103 = vld [vmem:[%s1 + $0xe18] sm:$0xff]
      %v1104 = vld [vmem:[%s1 + $0xe20] sm:$0xff]
      %v1105 = vld [vmem:[%s1 + $0xe28] sm:$0xff]
      %v1106 = vld [vmem:[%s1 + $0xe30] sm:$0xff]
      %v1107 = vld [vmem:[%s1 + $0xe38] sm:$0xff]
      %v1108 = vld [vmem:[%s1 + $0xe40] sm:$0xff]
      %v1109 = vld [vmem:[%s1 + $0xe48] sm:$0xff]
      %v1110 = vld [vmem:[%s1 + $0xe50] sm:$0xff]
      %v1111 = vld [vmem:[%s1 + $0xe58] sm:$0xff]
      %v1112 = vld [vmem:[%s1 + $0xe60] sm:$0xff]
      %v1113 = vld [vmem:[%s1 + $0xe68] sm:$0xff]
      %v1114 = vld [vmem:[%s1 + $0xe70] sm:$0xff]
      %v1115 = vld [vmem:[%s1 + $0xe78] sm:$0xff]
      %v1116 = vld [vmem:[%s1 + $0xe80] sm:$0xff]
      %v1117 = vld [vmem:[%s1 + $0xe88] sm:$0xff]
      %v1118 = vld [vmem:[%s1 + $0xe90] sm:$0xff]
      %v1119 = vld [vmem:[%s1 + $0xe98] sm:$0xff]
      %v1120 = vld [vmem:[%s1 + $0xea0] sm:$0xff]
      %v1121 = vld [vmem:[%s1 + $0xea8] sm:$0xff]
      %v1122 = vld [vmem:[%s1 + $0xeb0] sm:$0xff]
      %v1123 = vld [vmem:[%s1 + $0xeb8] sm:$0xff]
      %v1124 = vld [vmem:[%s1 + $0xec0] sm:$0xff]
      %v1125 = vld [vmem:[%s1 + $0xec8] sm:$0xff]
      %v1126 = vld [vmem:[%s1 + $0xed0] sm:$0xff]
      %v1127 = vld [vmem:[%s1 + $0xed8] sm:$0xff]
      %v1128 = vld [vmem:[%s1 + $0xee0] sm:$0xff]
      %v1129 = vld [vmem:[%s1 + $0xee8] sm:$0xff]
      %v1130 = vld [vmem:[%s1 + $0xef0] sm:$0xff]
      %v1131 = vld [vmem:[%s1 + $0xef8] sm:$0xff]
      %v1132 = vld [vmem:[%s2] sm:$0xf]
      %v1134 = vlaneseq
      %v1135 = vshrl.u32 %v1134, 7
      %v1136 = vsub.s32 0, %v1135
      %v1137 = vrot.slane %v1132, %v1136
      %v1138 = vlaneseq
      %v1139 = vshrl.u32 %v1138, 7
      %v1140 = vsub.s32 1, %v1139
      %v1141 = vrot.slane %v1132, %v1140
      %v1142 = vlaneseq
      %v1143 = vshrl.u32 %v1142, 7
      %v1144 = vsub.s32 2, %v1143
      %v1145 = vrot.slane %v1132, %v1144
      %v1146 = vlaneseq
      %v1147 = vshrl.u32 %v1146, 7
      %v1148 = vsub.s32 3, %v1147
      %v1149 = vrot.slane %v1132, %v1148
      %v1634 = vunpack.c.l.b16 %v652
      %v1635 = vunpack.c.h.b16 %v652
      %v1636 = vunpack.c.l.b16 %v653
      %v1637 = vunpack.c.h.b16 %v653
      %v1638 = vunpack.c.l.b16 %v654
      %v1639 = vunpack.c.h.b16 %v654
      %v1640 = vunpack.c.l.b16 %v655
      %v1641 = vunpack.c.h.b16 %v655
      %v1642 = vunpack.c.l.b16 %v656
      %v1643 = vunpack.c.h.b16 %v656
      %v1644 = vunpack.c.l.b16 %v657
      %v1645 = vunpack.c.h.b16 %v657
      %v1646 = vunpack.c.l.b16 %v658
      %v1647 = vunpack.c.h.b16 %v658
      %v1648 = vunpack.c.l.b16 %v659
      %v1649 = vunpack.c.h.b16 %v659
      %v1650 = vunpack.c.l.b16 %v660
      %v1651 = vunpack.c.h.b16 %v660
      %v1652 = vunpack.c.l.b16 %v661
      %v1653 = vunpack.c.h.b16 %v661
      %v1654 = vunpack.c.l.b16 %v662
      %v1655 = vunpack.c.h.b16 %v662
      %v1656 = vunpack.c.l.b16 %v663
      %v1657 = vunpack.c.h.b16 %v663
      %v1658 = vunpack.c.l.b16 %v664
      %v1659 = vunpack.c.h.b16 %v664
      %v1660 = vunpack.c.l.b16 %v665
      %v1661 = vunpack.c.h.b16 %v665
      %v1662 = vunpack.c.l.b16 %v666
      %v1663 = vunpack.c.h.b16 %v666
      %v1664 = vunpack.c.l.b16 %v667
      %v1665 = vunpack.c.h.b16 %v667
      %v1666 = vunpack.c.l.b16 %v668
      %v1667 = vunpack.c.h.b16 %v668
      %v1668 = vunpack.c.l.b16 %v669
      %v1669 = vunpack.c.h.b16 %v669
      %v1670 = vunpack.c.l.b16 %v670
      %v1671 = vunpack.c.h.b16 %v670
      %v1672 = vunpack.c.l.b16 %v671
      %v1673 = vunpack.c.h.b16 %v671
      %v1674 = vunpack.c.l.b16 %v672
      %v1675 = vunpack.c.h.b16 %v672
      %v1676 = vunpack.c.l.b16 %v673
      %v1677 = vunpack.c.h.b16 %v673
      %v1678 = vunpack.c.l.b16 %v674
      %v1679 = vunpack.c.h.b16 %v674
      %v1680 = vunpack.c.l.b16 %v675
      %v1681 = vunpack.c.h.b16 %v675
      %v1682 = vunpack.c.l.b16 %v676
      %v1683 = vunpack.c.h.b16 %v676
      %v1684 = vunpack.c.l.b16 %v677
      %v1685 = vunpack.c.h.b16 %v677
      %v1686 = vunpack.c.l.b16 %v678
      %v1687 = vunpack.c.h.b16 %v678
      %v1688 = vunpack.c.l.b16 %v679
      %v1689 = vunpack.c.h.b16 %v679
      %v1690 = vunpack.c.l.b16 %v680
      %v1691 = vunpack.c.h.b16 %v680
      %v1692 = vunpack.c.l.b16 %v681
      %v1693 = vunpack.c.h.b16 %v681
      %v1694 = vunpack.c.l.b16 %v682
      %v1695 = vunpack.c.h.b16 %v682
      %v1696 = vunpack.c.l.b16 %v683
      %v1697 = vunpack.c.h.b16 %v683
      %v1698 = vunpack.c.l.b16 %v684
      %v1699 = vunpack.c.h.b16 %v684
      %v1700 = vunpack.c.l.b16 %v685
      %v1701 = vunpack.c.h.b16 %v685
      %v1702 = vunpack.c.l.b16 %v686
      %v1703 = vunpack.c.h.b16 %v686
      %v1704 = vunpack.c.l.b16 %v687
      %v1705 = vunpack.c.h.b16 %v687
      %v1706 = vunpack.c.l.b16 %v688
      %v1707 = vunpack.c.h.b16 %v688
      %v1708 = vunpack.c.l.b16 %v689
      %v1709 = vunpack.c.h.b16 %v689
      %v1710 = vunpack.c.l.b16 %v690
      %v1711 = vunpack.c.h.b16 %v690
      %v1712 = vunpack.c.l.b16 %v691
      %v1713 = vunpack.c.h.b16 %v691
      %v1714 = vunpack.c.l.b16 %v692
      %v1715 = vunpack.c.h.b16 %v692
      %v1716 = vunpack.c.l.b16 %v693
      %v1717 = vunpack.c.h.b16 %v693
      %v1718 = vunpack.c.l.b16 %v694
      %v1719 = vunpack.c.h.b16 %v694
      %v1720 = vunpack.c.l.b16 %v695
      %v1721 = vunpack.c.h.b16 %v695
      %v1722 = vunpack.c.l.b16 %v696
      %v1723 = vunpack.c.h.b16 %v696
      %v1724 = vunpack.c.l.b16 %v697
      %v1725 = vunpack.c.h.b16 %v697
      %v1726 = vunpack.c.l.b16 %v698
      %v1727 = vunpack.c.h.b16 %v698
      %v1728 = vunpack.c.l.b16 %v699
      %v1729 = vunpack.c.h.b16 %v699
      %v1730 = vunpack.c.l.b16 %v700
      %v1731 = vunpack.c.h.b16 %v700
      %v1732 = vunpack.c.l.b16 %v701
      %v1733 = vunpack.c.h.b16 %v701
      %v1734 = vunpack.c.l.b16 %v702
      %v1735 = vunpack.c.h.b16 %v702
      %v1736 = vunpack.c.l.b16 %v703
      %v1737 = vunpack.c.h.b16 %v703
      %v1738 = vunpack.c.l.b16 %v704
      %v1739 = vunpack.c.h.b16 %v704
      %v1740 = vunpack.c.l.b16 %v705
      %v1741 = vunpack.c.h.b16 %v705
      %v1742 = vunpack.c.l.b16 %v706
      %v1743 = vunpack.c.h.b16 %v706
      %v1744 = vunpack.c.l.b16 %v707
      %v1745 = vunpack.c.h.b16 %v707
      %v1746 = vunpack.c.l.b16 %v708
      %v1747 = vunpack.c.h.b16 %v708
      %v1748 = vunpack.c.l.b16 %v709
      %v1749 = vunpack.c.h.b16 %v709
      %v1750 = vunpack.c.l.b16 %v710
      %v1751 = vunpack.c.h.b16 %v710
      %v1752 = vunpack.c.l.b16 %v711
      %v1753 = vunpack.c.h.b16 %v711
      %v1754 = vunpack.c.l.b16 %v712
      %v1755 = vunpack.c.h.b16 %v712
      %v1756 = vunpack.c.l.b16 %v713
      %v1757 = vunpack.c.h.b16 %v713
      %v1758 = vunpack.c.l.b16 %v714
      %v1759 = vunpack.c.h.b16 %v714
      %v1760 = vunpack.c.l.b16 %v715
      %v1761 = vunpack.c.h.b16 %v715
      %v1762 = vunpack.c.l.b16 %v716
      %v1763 = vunpack.c.h.b16 %v716
      %v1764 = vunpack.c.l.b16 %v717
      %v1765 = vunpack.c.h.b16 %v717
      %v1766 = vunpack.c.l.b16 %v718
      %v1767 = vunpack.c.h.b16 %v718
      %v1768 = vunpack.c.l.b16 %v719
      %v1769 = vunpack.c.h.b16 %v719
      %v1770 = vunpack.c.l.b16 %v720
      %v1771 = vunpack.c.h.b16 %v720
      %v1772 = vunpack.c.l.b16 %v721
      %v1773 = vunpack.c.h.b16 %v721
      %v1774 = vunpack.c.l.b16 %v722
      %v1775 = vunpack.c.h.b16 %v722
      %v1776 = vunpack.c.l.b16 %v723
      %v1777 = vunpack.c.h.b16 %v723
      %v1778 = vunpack.c.l.b16 %v724
      %v1779 = vunpack.c.h.b16 %v724
      %v1780 = vunpack.c.l.b16 %v725
      %v1781 = vunpack.c.h.b16 %v725
      %v1782 = vunpack.c.l.b16 %v726
      %v1783 = vunpack.c.h.b16 %v726
      %v1784 = vunpack.c.l.b16 %v727
      %v1785 = vunpack.c.h.b16 %v727
      %v1786 = vunpack.c.l.b16 %v728
      %v1787 = vunpack.c.h.b16 %v728
      %v1788 = vunpack.c.l.b16 %v729
      %v1789 = vunpack.c.h.b16 %v729
      %v1790 = vunpack.c.l.b16 %v730
      %v1791 = vunpack.c.h.b16 %v730
      %v1792 = vunpack.c.l.b16 %v731
      %v1793 = vunpack.c.h.b16 %v731
      %v1794 = vunpack.c.l.b16 %v732
      %v1795 = vunpack.c.h.b16 %v732
      %v1796 = vunpack.c.l.b16 %v733
      %v1797 = vunpack.c.h.b16 %v733
      %v1798 = vunpack.c.l.b16 %v734
      %v1799 = vunpack.c.h.b16 %v734
      %v1800 = vunpack.c.l.b16 %v735
      %v1801 = vunpack.c.h.b16 %v735
      %v1802 = vunpack.c.l.b16 %v736
      %v1803 = vunpack.c.h.b16 %v736
      %v1804 = vunpack.c.l.b16 %v737
      %v1805 = vunpack.c.h.b16 %v737
      %v1806 = vunpack.c.l.b16 %v738
      %v1807 = vunpack.c.h.b16 %v738
      %v1808 = vunpack.c.l.b16 %v739
      %v1809 = vunpack.c.h.b16 %v739
      %v1810 = vunpack.c.l.b16 %v740
      %v1811 = vunpack.c.h.b16 %v740
      %v1812 = vunpack.c.l.b16 %v741
      %v1813 = vunpack.c.h.b16 %v741
      %v1814 = vunpack.c.l.b16 %v742
      %v1815 = vunpack.c.h.b16 %v742
      %v1816 = vunpack.c.l.b16 %v743
      %v1817 = vunpack.c.h.b16 %v743
      %v1818 = vunpack.c.l.b16 %v744
      %v1819 = vunpack.c.h.b16 %v744
      %v1820 = vunpack.c.l.b16 %v745
      %v1821 = vunpack.c.h.b16 %v745
      %v1822 = vunpack.c.l.b16 %v746
      %v1823 = vunpack.c.h.b16 %v746
      %v1824 = vunpack.c.l.b16 %v747
      %v1825 = vunpack.c.h.b16 %v747
      %v1826 = vunpack.c.l.b16 %v748
      %v1827 = vunpack.c.h.b16 %v748
      %v1828 = vunpack.c.l.b16 %v749
      %v1829 = vunpack.c.h.b16 %v749
      %v1830 = vunpack.c.l.b16 %v750
      %v1831 = vunpack.c.h.b16 %v750
      %v1832 = vunpack.c.l.b16 %v751
      %v1833 = vunpack.c.h.b16 %v751
      %v1834 = vunpack.c.l.b16 %v752
      %v1835 = vunpack.c.h.b16 %v752
      %v1836 = vunpack.c.l.b16 %v753
      %v1837 = vunpack.c.h.b16 %v753
      %v1838 = vunpack.c.l.b16 %v754
      %v1839 = vunpack.c.h.b16 %v754
      %v1840 = vunpack.c.l.b16 %v755
      %v1841 = vunpack.c.h.b16 %v755
      %v1842 = vunpack.c.l.b16 %v756
      %v1843 = vunpack.c.h.b16 %v756
      %v1844 = vunpack.c.l.b16 %v757
      %v1845 = vunpack.c.h.b16 %v757
      %v1846 = vunpack.c.l.b16 %v758
      %v1847 = vunpack.c.h.b16 %v758
      %v1848 = vunpack.c.l.b16 %v759
      %v1849 = vunpack.c.h.b16 %v759
      %v1850 = vunpack.c.l.b16 %v760
      %v1851 = vunpack.c.h.b16 %v760
      %v1852 = vunpack.c.l.b16 %v761
      %v1853 = vunpack.c.h.b16 %v761
      %v1854 = vunpack.c.l.b16 %v762
      %v1855 = vunpack.c.h.b16 %v762
      %v1856 = vunpack.c.l.b16 %v763
      %v1857 = vunpack.c.h.b16 %v763
      %v1858 = vunpack.c.l.b16 %v764
      %v1859 = vunpack.c.h.b16 %v764
      %v1860 = vunpack.c.l.b16 %v765
      %v1861 = vunpack.c.h.b16 %v765
      %v1862 = vunpack.c.l.b16 %v766
      %v1863 = vunpack.c.h.b16 %v766
      %v1864 = vunpack.c.l.b16 %v767
      %v1865 = vunpack.c.h.b16 %v767
      %v1866 = vunpack.c.l.b16 %v768
      %v1867 = vunpack.c.h.b16 %v768
      %v1868 = vunpack.c.l.b16 %v769
      %v1869 = vunpack.c.h.b16 %v769
      %v1870 = vunpack.c.l.b16 %v770
      %v1871 = vunpack.c.h.b16 %v770
      %v1872 = vunpack.c.l.b16 %v771
      %v1873 = vunpack.c.h.b16 %v771
      %v1874 = vunpack.c.l.b16 %v772
      %v1875 = vunpack.c.h.b16 %v772
      %v1876 = vunpack.c.l.b16 %v773
      %v1877 = vunpack.c.h.b16 %v773
      %v1878 = vunpack.c.l.b16 %v774
      %v1879 = vunpack.c.h.b16 %v774
      %v1880 = vunpack.c.l.b16 %v775
      %v1881 = vunpack.c.h.b16 %v775
      %v1882 = vunpack.c.l.b16 %v776
      %v1883 = vunpack.c.h.b16 %v776
      %v1884 = vunpack.c.l.b16 %v777
      %v1885 = vunpack.c.h.b16 %v777
      %v1886 = vunpack.c.l.b16 %v778
      %v1887 = vunpack.c.h.b16 %v778
      %v1888 = vunpack.c.l.b16 %v779
      %v1889 = vunpack.c.h.b16 %v779
      %v1890 = vunpack.c.l.b16 %v780
      %v1891 = vunpack.c.h.b16 %v780
      %v1892 = vunpack.c.l.b16 %v781
      %v1893 = vunpack.c.h.b16 %v781
      %v1894 = vunpack.c.l.b16 %v782
      %v1895 = vunpack.c.h.b16 %v782
      %v1896 = vunpack.c.l.b16 %v783
      %v1897 = vunpack.c.h.b16 %v783
      %v1898 = vunpack.c.l.b16 %v784
      %v1899 = vunpack.c.h.b16 %v784
      %v1900 = vunpack.c.l.b16 %v785
      %v1901 = vunpack.c.h.b16 %v785
      %v1902 = vunpack.c.l.b16 %v786
      %v1903 = vunpack.c.h.b16 %v786
      %v1904 = vunpack.c.l.b16 %v787
      %v1905 = vunpack.c.h.b16 %v787
      %v1906 = vunpack.c.l.b16 %v788
      %v1907 = vunpack.c.h.b16 %v788
      %v1908 = vunpack.c.l.b16 %v789
      %v1909 = vunpack.c.h.b16 %v789
      %v1910 = vunpack.c.l.b16 %v790
      %v1911 = vunpack.c.h.b16 %v790
      %v1912 = vunpack.c.l.b16 %v791
      %v1913 = vunpack.c.h.b16 %v791
      %v1914 = vunpack.c.l.b16 %v792
      %v1915 = vunpack.c.h.b16 %v792
      %v1916 = vunpack.c.l.b16 %v793
      %v1917 = vunpack.c.h.b16 %v793
      %v1918 = vunpack.c.l.b16 %v794
      %v1919 = vunpack.c.h.b16 %v794
      %v1920 = vunpack.c.l.b16 %v795
      %v1921 = vunpack.c.h.b16 %v795
      %v1922 = vunpack.c.l.b16 %v796
      %v1923 = vunpack.c.h.b16 %v796
      %v1924 = vunpack.c.l.b16 %v797
      %v1925 = vunpack.c.h.b16 %v797
      %v1926 = vunpack.c.l.b16 %v798
      %v1927 = vunpack.c.h.b16 %v798
      %v1928 = vunpack.c.l.b16 %v799
      %v1929 = vunpack.c.h.b16 %v799
      %v1930 = vunpack.c.l.b16 %v800
      %v1931 = vunpack.c.h.b16 %v800
      %v1932 = vunpack.c.l.b16 %v801
      %v1933 = vunpack.c.h.b16 %v801
      %v1934 = vunpack.c.l.b16 %v802
      %v1935 = vunpack.c.h.b16 %v802
      %v1936 = vunpack.c.l.b16 %v803
      %v1937 = vunpack.c.h.b16 %v803
      %v1938 = vunpack.c.l.b16 %v804
      %v1939 = vunpack.c.h.b16 %v804
      %v1940 = vunpack.c.l.b16 %v805
      %v1941 = vunpack.c.h.b16 %v805
      %v1942 = vunpack.c.l.b16 %v806
      %v1943 = vunpack.c.h.b16 %v806
      %v1944 = vunpack.c.l.b16 %v807
      %v1945 = vunpack.c.h.b16 %v807
      %v1946 = vunpack.c.l.b16 %v808
      %v1947 = vunpack.c.h.b16 %v808
      %v1948 = vunpack.c.l.b16 %v809
      %v1949 = vunpack.c.h.b16 %v809
      %v1950 = vunpack.c.l.b16 %v810
      %v1951 = vunpack.c.h.b16 %v810
      %v1952 = vunpack.c.l.b16 %v811
      %v1953 = vunpack.c.h.b16 %v811
      %v1954 = vunpack.c.l.b16 %v812
      %v1955 = vunpack.c.h.b16 %v812
      %v1956 = vunpack.c.l.b16 %v813
      %v1957 = vunpack.c.h.b16 %v813
      %v1958 = vunpack.c.l.b16 %v814
      %v1959 = vunpack.c.h.b16 %v814
      %v1960 = vunpack.c.l.b16 %v815
      %v1961 = vunpack.c.h.b16 %v815
      %v1962 = vunpack.c.l.b16 %v816
      %v1963 = vunpack.c.h.b16 %v816
      %v1964 = vunpack.c.l.b16 %v817
      %v1965 = vunpack.c.h.b16 %v817
      %v1966 = vunpack.c.l.b16 %v818
      %v1967 = vunpack.c.h.b16 %v818
      %v1968 = vunpack.c.l.b16 %v819
      %v1969 = vunpack.c.h.b16 %v819
      %v1970 = vunpack.c.l.b16 %v820
      %v1971 = vunpack.c.h.b16 %v820
      %v1972 = vunpack.c.l.b16 %v821
      %v1973 = vunpack.c.h.b16 %v821
      %v1974 = vunpack.c.l.b16 %v822
      %v1975 = vunpack.c.h.b16 %v822
      %v1976 = vunpack.c.l.b16 %v823
      %v1977 = vunpack.c.h.b16 %v823
      %v1978 = vunpack.c.l.b16 %v824
      %v1979 = vunpack.c.h.b16 %v824
      %v1980 = vunpack.c.l.b16 %v825
      %v1981 = vunpack.c.h.b16 %v825
      %v1982 = vunpack.c.l.b16 %v826
      %v1983 = vunpack.c.h.b16 %v826
      %v1984 = vunpack.c.l.b16 %v827
      %v1985 = vunpack.c.h.b16 %v827
      %v1986 = vunpack.c.l.b16 %v828
      %v1987 = vunpack.c.h.b16 %v828
      %v1988 = vunpack.c.l.b16 %v829
      %v1989 = vunpack.c.h.b16 %v829
      %v1990 = vunpack.c.l.b16 %v830
      %v1991 = vunpack.c.h.b16 %v830
      %v1992 = vunpack.c.l.b16 %v831
      %v1993 = vunpack.c.h.b16 %v831
      %v1994 = vunpack.c.l.b16 %v832
      %v1995 = vunpack.c.h.b16 %v832
      %v1996 = vunpack.c.l.b16 %v833
      %v1997 = vunpack.c.h.b16 %v833
      %v1998 = vunpack.c.l.b16 %v834
      %v1999 = vunpack.c.h.b16 %v834
      %v2000 = vunpack.c.l.b16 %v835
      %v2001 = vunpack.c.h.b16 %v835
      %v2002 = vunpack.c.l.b16 %v836
      %v2003 = vunpack.c.h.b16 %v836
      %v2004 = vunpack.c.l.b16 %v837
      %v2005 = vunpack.c.h.b16 %v837
      %v2006 = vunpack.c.l.b16 %v838
      %v2007 = vunpack.c.h.b16 %v838
      %v2008 = vunpack.c.l.b16 %v839
      %v2009 = vunpack.c.h.b16 %v839
      %v2010 = vunpack.c.l.b16 %v840
      %v2011 = vunpack.c.h.b16 %v840
      %v2012 = vunpack.c.l.b16 %v841
      %v2013 = vunpack.c.h.b16 %v841
      %v2014 = vunpack.c.l.b16 %v842
      %v2015 = vunpack.c.h.b16 %v842
      %v2016 = vunpack.c.l.b16 %v843
      %v2017 = vunpack.c.h.b16 %v843
      %v2018 = vunpack.c.l.b16 %v844
      %v2019 = vunpack.c.h.b16 %v844
      %v2020 = vunpack.c.l.b16 %v845
      %v2021 = vunpack.c.h.b16 %v845
      %v2022 = vunpack.c.l.b16 %v846
      %v2023 = vunpack.c.h.b16 %v846
      %v2024 = vunpack.c.l.b16 %v847
      %v2025 = vunpack.c.h.b16 %v847
      %v2026 = vunpack.c.l.b16 %v848
      %v2027 = vunpack.c.h.b16 %v848
      %v2028 = vunpack.c.l.b16 %v849
      %v2029 = vunpack.c.h.b16 %v849
      %v2030 = vunpack.c.l.b16 %v850
      %v2031 = vunpack.c.h.b16 %v850
      %v2032 = vunpack.c.l.b16 %v851
      %v2033 = vunpack.c.h.b16 %v851
      %v2034 = vunpack.c.l.b16 %v852
      %v2035 = vunpack.c.h.b16 %v852
      %v2036 = vunpack.c.l.b16 %v853
      %v2037 = vunpack.c.h.b16 %v853
      %v2038 = vunpack.c.l.b16 %v854
      %v2039 = vunpack.c.h.b16 %v854
      %v2040 = vunpack.c.l.b16 %v855
      %v2041 = vunpack.c.h.b16 %v855
      %v2042 = vunpack.c.l.b16 %v856
      %v2043 = vunpack.c.h.b16 %v856
      %v2044 = vunpack.c.l.b16 %v857
      %v2045 = vunpack.c.h.b16 %v857
      %v2046 = vunpack.c.l.b16 %v858
      %v2047 = vunpack.c.h.b16 %v858
      %v2048 = vunpack.c.l.b16 %v859
      %v2049 = vunpack.c.h.b16 %v859
      %v2050 = vunpack.c.l.b16 %v860
      %v2051 = vunpack.c.h.b16 %v860
      %v2052 = vunpack.c.l.b16 %v861
      %v2053 = vunpack.c.h.b16 %v861
      %v2054 = vunpack.c.l.b16 %v862
      %v2055 = vunpack.c.h.b16 %v862
      %v2056 = vunpack.c.l.b16 %v863
      %v2057 = vunpack.c.h.b16 %v863
      %v2058 = vunpack.c.l.b16 %v864
      %v2059 = vunpack.c.h.b16 %v864
      %v2060 = vunpack.c.l.b16 %v865
      %v2061 = vunpack.c.h.b16 %v865
      %v2062 = vunpack.c.l.b16 %v866
      %v2063 = vunpack.c.h.b16 %v866
      %v2064 = vunpack.c.l.b16 %v867
      %v2065 = vunpack.c.h.b16 %v867
      %v2066 = vunpack.c.l.b16 %v868
      %v2067 = vunpack.c.h.b16 %v868
      %v2068 = vunpack.c.l.b16 %v869
      %v2069 = vunpack.c.h.b16 %v869
      %v2070 = vunpack.c.l.b16 %v870
      %v2071 = vunpack.c.h.b16 %v870
      %v2072 = vunpack.c.l.b16 %v871
      %v2073 = vunpack.c.h.b16 %v871
      %v2074 = vunpack.c.l.b16 %v872
      %v2075 = vunpack.c.h.b16 %v872
      %v2076 = vunpack.c.l.b16 %v873
      %v2077 = vunpack.c.h.b16 %v873
      %v2078 = vunpack.c.l.b16 %v874
      %v2079 = vunpack.c.h.b16 %v874
      %v2080 = vunpack.c.l.b16 %v875
      %v2081 = vunpack.c.h.b16 %v875
      %v2082 = vunpack.c.l.b16 %v876
      %v2083 = vunpack.c.h.b16 %v876
      %v2084 = vunpack.c.l.b16 %v877
      %v2085 = vunpack.c.h.b16 %v877
      %v2086 = vunpack.c.l.b16 %v878
      %v2087 = vunpack.c.h.b16 %v878
      %v2088 = vunpack.c.l.b16 %v879
      %v2089 = vunpack.c.h.b16 %v879
      %v2090 = vunpack.c.l.b16 %v880
      %v2091 = vunpack.c.h.b16 %v880
      %v2092 = vunpack.c.l.b16 %v881
      %v2093 = vunpack.c.h.b16 %v881
      %v2094 = vunpack.c.l.b16 %v882
      %v2095 = vunpack.c.h.b16 %v882
      %v2096 = vunpack.c.l.b16 %v883
      %v2097 = vunpack.c.h.b16 %v883
      %v2098 = vunpack.c.l.b16 %v884
      %v2099 = vunpack.c.h.b16 %v884
      %v2100 = vunpack.c.l.b16 %v885
      %v2101 = vunpack.c.h.b16 %v885
      %v2102 = vunpack.c.l.b16 %v886
      %v2103 = vunpack.c.h.b16 %v886
      %v2104 = vunpack.c.l.b16 %v887
      %v2105 = vunpack.c.h.b16 %v887
      %v2106 = vunpack.c.l.b16 %v888
      %v2107 = vunpack.c.h.b16 %v888
      %v2108 = vunpack.c.l.b16 %v889
      %v2109 = vunpack.c.h.b16 %v889
      %v2110 = vunpack.c.l.b16 %v890
      %v2111 = vunpack.c.h.b16 %v890
      %v2112 = vunpack.c.l.b16 %v891
      %v2113 = vunpack.c.h.b16 %v891
      %v2114 = vunpack.c.l.b16 %v892
      %v2115 = vunpack.c.h.b16 %v892
      %v2116 = vunpack.c.l.b16 %v893
      %v2117 = vunpack.c.h.b16 %v893
      %v2118 = vunpack.c.l.b16 %v894
      %v2119 = vunpack.c.h.b16 %v894
      %v2120 = vunpack.c.l.b16 %v895
      %v2121 = vunpack.c.h.b16 %v895
      %v2122 = vunpack.c.l.b16 %v896
      %v2123 = vunpack.c.h.b16 %v896
      %v2124 = vunpack.c.l.b16 %v897
      %v2125 = vunpack.c.h.b16 %v897
      %v2126 = vunpack.c.l.b16 %v898
      %v2127 = vunpack.c.h.b16 %v898
      %v2128 = vunpack.c.l.b16 %v899
      %v2129 = vunpack.c.h.b16 %v899
      %v2130 = vunpack.c.l.b16 %v900
      %v2131 = vunpack.c.h.b16 %v900
      %v2132 = vunpack.c.l.b16 %v901
      %v2133 = vunpack.c.h.b16 %v901
      %v2134 = vunpack.c.l.b16 %v902
      %v2135 = vunpack.c.h.b16 %v902
      %v2136 = vunpack.c.l.b16 %v903
      %v2137 = vunpack.c.h.b16 %v903
      %v2138 = vunpack.c.l.b16 %v904
      %v2139 = vunpack.c.h.b16 %v904
      %v2140 = vunpack.c.l.b16 %v905
      %v2141 = vunpack.c.h.b16 %v905
      %v2142 = vunpack.c.l.b16 %v906
      %v2143 = vunpack.c.h.b16 %v906
      %v2144 = vunpack.c.l.b16 %v907
      %v2145 = vunpack.c.h.b16 %v907
      %v2146 = vunpack.c.l.b16 %v908
      %v2147 = vunpack.c.h.b16 %v908
      %v2148 = vunpack.c.l.b16 %v909
      %v2149 = vunpack.c.h.b16 %v909
      %v2150 = vunpack.c.l.b16 %v910
      %v2151 = vunpack.c.h.b16 %v910
      %v2152 = vunpack.c.l.b16 %v911
      %v2153 = vunpack.c.h.b16 %v911
      %v2154 = vunpack.c.l.b16 %v912
      %v2155 = vunpack.c.h.b16 %v912
      %v2156 = vunpack.c.l.b16 %v913
      %v2157 = vunpack.c.h.b16 %v913
      %v2158 = vunpack.c.l.b16 %v914
      %v2159 = vunpack.c.h.b16 %v914
      %v2160 = vunpack.c.l.b16 %v915
      %v2161 = vunpack.c.h.b16 %v915
      %v2162 = vunpack.c.l.b16 %v916
      %v2163 = vunpack.c.h.b16 %v916
      %v2164 = vunpack.c.l.b16 %v917
      %v2165 = vunpack.c.h.b16 %v917
      %v2166 = vunpack.c.l.b16 %v918
      %v2167 = vunpack.c.h.b16 %v918
      %v2168 = vunpack.c.l.b16 %v919
      %v2169 = vunpack.c.h.b16 %v919
      %v2170 = vunpack.c.l.b16 %v920
      %v2171 = vunpack.c.h.b16 %v920
      %v2172 = vunpack.c.l.b16 %v921
      %v2173 = vunpack.c.h.b16 %v921
      %v2174 = vunpack.c.l.b16 %v922
      %v2175 = vunpack.c.h.b16 %v922
      %v2176 = vunpack.c.l.b16 %v923
      %v2177 = vunpack.c.h.b16 %v923
      %v2178 = vunpack.c.l.b16 %v924
      %v2179 = vunpack.c.h.b16 %v924
      %v2180 = vunpack.c.l.b16 %v925
      %v2181 = vunpack.c.h.b16 %v925
      %v2182 = vunpack.c.l.b16 %v926
      %v2183 = vunpack.c.h.b16 %v926
      %v2184 = vunpack.c.l.b16 %v927
      %v2185 = vunpack.c.h.b16 %v927
      %v2186 = vunpack.c.l.b16 %v928
      %v2187 = vunpack.c.h.b16 %v928
      %v2188 = vunpack.c.l.b16 %v929
      %v2189 = vunpack.c.h.b16 %v929
      %v2190 = vunpack.c.l.b16 %v930
      %v2191 = vunpack.c.h.b16 %v930
      %v2192 = vunpack.c.l.b16 %v931
      %v2193 = vunpack.c.h.b16 %v931
      %v2194 = vunpack.c.l.b16 %v932
      %v2195 = vunpack.c.h.b16 %v932
      %v2196 = vunpack.c.l.b16 %v933
      %v2197 = vunpack.c.h.b16 %v933
      %v2198 = vunpack.c.l.b16 %v934
      %v2199 = vunpack.c.h.b16 %v934
      %v2200 = vunpack.c.l.b16 %v935
      %v2201 = vunpack.c.h.b16 %v935
      %v2202 = vunpack.c.l.b16 %v936
      %v2203 = vunpack.c.h.b16 %v936
      %v2204 = vunpack.c.l.b16 %v937
      %v2205 = vunpack.c.h.b16 %v937
      %v2206 = vunpack.c.l.b16 %v938
      %v2207 = vunpack.c.h.b16 %v938
      %v2208 = vunpack.c.l.b16 %v939
      %v2209 = vunpack.c.h.b16 %v939
      %v2210 = vunpack.c.l.b16 %v940
      %v2211 = vunpack.c.h.b16 %v940
      %v2212 = vunpack.c.l.b16 %v941
      %v2213 = vunpack.c.h.b16 %v941
      %v2214 = vunpack.c.l.b16 %v942
      %v2215 = vunpack.c.h.b16 %v942
      %v2216 = vunpack.c.l.b16 %v943
      %v2217 = vunpack.c.h.b16 %v943
      %v2218 = vunpack.c.l.b16 %v944
      %v2219 = vunpack.c.h.b16 %v944
      %v2220 = vunpack.c.l.b16 %v945
      %v2221 = vunpack.c.h.b16 %v945
      %v2222 = vunpack.c.l.b16 %v946
      %v2223 = vunpack.c.h.b16 %v946
      %v2224 = vunpack.c.l.b16 %v947
      %v2225 = vunpack.c.h.b16 %v947
      %v2226 = vunpack.c.l.b16 %v948
      %v2227 = vunpack.c.h.b16 %v948
      %v2228 = vunpack.c.l.b16 %v949
      %v2229 = vunpack.c.h.b16 %v949
      %v2230 = vunpack.c.l.b16 %v950
      %v2231 = vunpack.c.h.b16 %v950
      %v2232 = vunpack.c.l.b16 %v951
      %v2233 = vunpack.c.h.b16 %v951
      %v2234 = vunpack.c.l.b16 %v952
      %v2235 = vunpack.c.h.b16 %v952
      %v2236 = vunpack.c.l.b16 %v953
      %v2237 = vunpack.c.h.b16 %v953
      %v2238 = vunpack.c.l.b16 %v954
      %v2239 = vunpack.c.h.b16 %v954
      %v2240 = vunpack.c.l.b16 %v955
      %v2241 = vunpack.c.h.b16 %v955
      %v2242 = vunpack.c.l.b16 %v956
      %v2243 = vunpack.c.h.b16 %v956
      %v2244 = vunpack.c.l.b16 %v957
      %v2245 = vunpack.c.h.b16 %v957
      %v2246 = vunpack.c.l.b16 %v958
      %v2247 = vunpack.c.h.b16 %v958
      %v2248 = vunpack.c.l.b16 %v959
      %v2249 = vunpack.c.h.b16 %v959
      %v2250 = vunpack.c.l.b16 %v960
      %v2251 = vunpack.c.h.b16 %v960
      %v2252 = vunpack.c.l.b16 %v961
      %v2253 = vunpack.c.h.b16 %v961
      %v2254 = vunpack.c.l.b16 %v962
      %v2255 = vunpack.c.h.b16 %v962
      %v2256 = vunpack.c.l.b16 %v963
      %v2257 = vunpack.c.h.b16 %v963
      %v2258 = vunpack.c.l.b16 %v964
      %v2259 = vunpack.c.h.b16 %v964
      %v2260 = vunpack.c.l.b16 %v965
      %v2261 = vunpack.c.h.b16 %v965
      %v2262 = vunpack.c.l.b16 %v966
      %v2263 = vunpack.c.h.b16 %v966
      %v2264 = vunpack.c.l.b16 %v967
      %v2265 = vunpack.c.h.b16 %v967
      %v2266 = vunpack.c.l.b16 %v968
      %v2267 = vunpack.c.h.b16 %v968
      %v2268 = vunpack.c.l.b16 %v969
      %v2269 = vunpack.c.h.b16 %v969
      %v2270 = vunpack.c.l.b16 %v970
      %v2271 = vunpack.c.h.b16 %v970
      %v2272 = vunpack.c.l.b16 %v971
      %v2273 = vunpack.c.h.b16 %v971
      %v2274 = vunpack.c.l.b16 %v972
      %v2275 = vunpack.c.h.b16 %v972
      %v2276 = vunpack.c.l.b16 %v973
      %v2277 = vunpack.c.h.b16 %v973
      %v2278 = vunpack.c.l.b16 %v974
      %v2279 = vunpack.c.h.b16 %v974
      %v2280 = vunpack.c.l.b16 %v975
      %v2281 = vunpack.c.h.b16 %v975
      %v2282 = vunpack.c.l.b16 %v976
      %v2283 = vunpack.c.h.b16 %v976
      %v2284 = vunpack.c.l.b16 %v977
      %v2285 = vunpack.c.h.b16 %v977
      %v2286 = vunpack.c.l.b16 %v978
      %v2287 = vunpack.c.h.b16 %v978
      %v2288 = vunpack.c.l.b16 %v979
      %v2289 = vunpack.c.h.b16 %v979
      %v2290 = vunpack.c.l.b16 %v980
      %v2291 = vunpack.c.h.b16 %v980
      %v2292 = vunpack.c.l.b16 %v981
      %v2293 = vunpack.c.h.b16 %v981
      %v2294 = vunpack.c.l.b16 %v982
      %v2295 = vunpack.c.h.b16 %v982
      %v2296 = vunpack.c.l.b16 %v983
      %v2297 = vunpack.c.h.b16 %v983
      %v2298 = vunpack.c.l.b16 %v984
      %v2299 = vunpack.c.h.b16 %v984
      %v2300 = vunpack.c.l.b16 %v985
      %v2301 = vunpack.c.h.b16 %v985
      %v2302 = vunpack.c.l.b16 %v986
      %v2303 = vunpack.c.h.b16 %v986
      %v2304 = vunpack.c.l.b16 %v987
      %v2305 = vunpack.c.h.b16 %v987
      %v2306 = vunpack.c.l.b16 %v988
      %v2307 = vunpack.c.h.b16 %v988
      %v2308 = vunpack.c.l.b16 %v989
      %v2309 = vunpack.c.h.b16 %v989
      %v2310 = vunpack.c.l.b16 %v990
      %v2311 = vunpack.c.h.b16 %v990
      %v2312 = vunpack.c.l.b16 %v991
      %v2313 = vunpack.c.h.b16 %v991
      %v2314 = vunpack.c.l.b16 %v992
      %v2315 = vunpack.c.h.b16 %v992
      %v2316 = vunpack.c.l.b16 %v993
      %v2317 = vunpack.c.h.b16 %v993
      %v2318 = vunpack.c.l.b16 %v994
      %v2319 = vunpack.c.h.b16 %v994
      %v2320 = vunpack.c.l.b16 %v995
      %v2321 = vunpack.c.h.b16 %v995
      %v2322 = vunpack.c.l.b16 %v996
      %v2323 = vunpack.c.h.b16 %v996
      %v2324 = vunpack.c.l.b16 %v997
      %v2325 = vunpack.c.h.b16 %v997
      %v2326 = vunpack.c.l.b16 %v998
      %v2327 = vunpack.c.h.b16 %v998
      %v2328 = vunpack.c.l.b16 %v999
      %v2329 = vunpack.c.h.b16 %v999
      %v2330 = vunpack.c.l.b16 %v1000
      %v2331 = vunpack.c.h.b16 %v1000
      %v2332 = vunpack.c.l.b16 %v1001
      %v2333 = vunpack.c.h.b16 %v1001
      %v2334 = vunpack.c.l.b16 %v1002
      %v2335 = vunpack.c.h.b16 %v1002
      %v2336 = vunpack.c.l.b16 %v1003
      %v2337 = vunpack.c.h.b16 %v1003
      %v2338 = vunpack.c.l.b16 %v1004
      %v2339 = vunpack.c.h.b16 %v1004
      %v2340 = vunpack.c.l.b16 %v1005
      %v2341 = vunpack.c.h.b16 %v1005
      %v2342 = vunpack.c.l.b16 %v1006
      %v2343 = vunpack.c.h.b16 %v1006
      %v2344 = vunpack.c.l.b16 %v1007
      %v2345 = vunpack.c.h.b16 %v1007
      %v2346 = vunpack.c.l.b16 %v1008
      %v2347 = vunpack.c.h.b16 %v1008
      %v2348 = vunpack.c.l.b16 %v1009
      %v2349 = vunpack.c.h.b16 %v1009
      %v2350 = vunpack.c.l.b16 %v1010
      %v2351 = vunpack.c.h.b16 %v1010
      %v2352 = vunpack.c.l.b16 %v1011
      %v2353 = vunpack.c.h.b16 %v1011
      %v2354 = vunpack.c.l.b16 %v1012
      %v2355 = vunpack.c.h.b16 %v1012
      %v2356 = vunpack.c.l.b16 %v1013
      %v2357 = vunpack.c.h.b16 %v1013
      %v2358 = vunpack.c.l.b16 %v1014
      %v2359 = vunpack.c.h.b16 %v1014
      %v2360 = vunpack.c.l.b16 %v1015
      %v2361 = vunpack.c.h.b16 %v1015
      %v2362 = vunpack.c.l.b16 %v1016
      %v2363 = vunpack.c.h.b16 %v1016
      %v2364 = vunpack.c.l.b16 %v1017
      %v2365 = vunpack.c.h.b16 %v1017
      %v2366 = vunpack.c.l.b16 %v1018
      %v2367 = vunpack.c.h.b16 %v1018
      %v2368 = vunpack.c.l.b16 %v1019
      %v2369 = vunpack.c.h.b16 %v1019
      %v2370 = vunpack.c.l.b16 %v1020
      %v2371 = vunpack.c.h.b16 %v1020
      %v2372 = vunpack.c.l.b16 %v1021
      %v2373 = vunpack.c.h.b16 %v1021
      %v2374 = vunpack.c.l.b16 %v1022
      %v2375 = vunpack.c.h.b16 %v1022
      %v2376 = vunpack.c.l.b16 %v1023
      %v2377 = vunpack.c.h.b16 %v1023
      %v2378 = vunpack.c.l.b16 %v1024
      %v2379 = vunpack.c.h.b16 %v1024
      %v2380 = vunpack.c.l.b16 %v1025
      %v2381 = vunpack.c.h.b16 %v1025
      %v2382 = vunpack.c.l.b16 %v1026
      %v2383 = vunpack.c.h.b16 %v1026
      %v2384 = vunpack.c.l.b16 %v1027
      %v2385 = vunpack.c.h.b16 %v1027
      %v2386 = vunpack.c.l.b16 %v1028
      %v2387 = vunpack.c.h.b16 %v1028
      %v2388 = vunpack.c.l.b16 %v1029
      %v2389 = vunpack.c.h.b16 %v1029
      %v2390 = vunpack.c.l.b16 %v1030
      %v2391 = vunpack.c.h.b16 %v1030
      %v2392 = vunpack.c.l.b16 %v1031
      %v2393 = vunpack.c.h.b16 %v1031
      %v2394 = vunpack.c.l.b16 %v1032
      %v2395 = vunpack.c.h.b16 %v1032
      %v2396 = vunpack.c.l.b16 %v1033
      %v2397 = vunpack.c.h.b16 %v1033
      %v2398 = vunpack.c.l.b16 %v1034
      %v2399 = vunpack.c.h.b16 %v1034
      %v2400 = vunpack.c.l.b16 %v1035
      %v2401 = vunpack.c.h.b16 %v1035
      %v2402 = vunpack.c.l.b16 %v1036
      %v2403 = vunpack.c.h.b16 %v1036
      %v2404 = vunpack.c.l.b16 %v1037
      %v2405 = vunpack.c.h.b16 %v1037
      %v2406 = vunpack.c.l.b16 %v1038
      %v2407 = vunpack.c.h.b16 %v1038
      %v2408 = vunpack.c.l.b16 %v1039
      %v2409 = vunpack.c.h.b16 %v1039
      %v2410 = vunpack.c.l.b16 %v1040
      %v2411 = vunpack.c.h.b16 %v1040
      %v2412 = vunpack.c.l.b16 %v1041
      %v2413 = vunpack.c.h.b16 %v1041
      %v2414 = vunpack.c.l.b16 %v1042
      %v2415 = vunpack.c.h.b16 %v1042
      %v2416 = vunpack.c.l.b16 %v1043
      %v2417 = vunpack.c.h.b16 %v1043
      %v2418 = vunpack.c.l.b16 %v1044
      %v2419 = vunpack.c.h.b16 %v1044
      %v2420 = vunpack.c.l.b16 %v1045
      %v2421 = vunpack.c.h.b16 %v1045
      %v2422 = vunpack.c.l.b16 %v1046
      %v2423 = vunpack.c.h.b16 %v1046
      %v2424 = vunpack.c.l.b16 %v1047
      %v2425 = vunpack.c.h.b16 %v1047
      %v2426 = vunpack.c.l.b16 %v1048
      %v2427 = vunpack.c.h.b16 %v1048
      %v2428 = vunpack.c.l.b16 %v1049
      %v2429 = vunpack.c.h.b16 %v1049
      %v2430 = vunpack.c.l.b16 %v1050
      %v2431 = vunpack.c.h.b16 %v1050
      %v2432 = vunpack.c.l.b16 %v1051
      %v2433 = vunpack.c.h.b16 %v1051
      %v2434 = vunpack.c.l.b16 %v1052
      %v2435 = vunpack.c.h.b16 %v1052
      %v2436 = vunpack.c.l.b16 %v1053
      %v2437 = vunpack.c.h.b16 %v1053
      %v2438 = vunpack.c.l.b16 %v1054
      %v2439 = vunpack.c.h.b16 %v1054
      %v2440 = vunpack.c.l.b16 %v1055
      %v2441 = vunpack.c.h.b16 %v1055
      %v2442 = vunpack.c.l.b16 %v1056
      %v2443 = vunpack.c.h.b16 %v1056
      %v2444 = vunpack.c.l.b16 %v1057
      %v2445 = vunpack.c.h.b16 %v1057
      %v2446 = vunpack.c.l.b16 %v1058
      %v2447 = vunpack.c.h.b16 %v1058
      %v2448 = vunpack.c.l.b16 %v1059
      %v2449 = vunpack.c.h.b16 %v1059
      %v2450 = vunpack.c.l.b16 %v1060
      %v2451 = vunpack.c.h.b16 %v1060
      %v2452 = vunpack.c.l.b16 %v1061
      %v2453 = vunpack.c.h.b16 %v1061
      %v2454 = vunpack.c.l.b16 %v1062
      %v2455 = vunpack.c.h.b16 %v1062
      %v2456 = vunpack.c.l.b16 %v1063
      %v2457 = vunpack.c.h.b16 %v1063
      %v2458 = vunpack.c.l.b16 %v1064
      %v2459 = vunpack.c.h.b16 %v1064
      %v2460 = vunpack.c.l.b16 %v1065
      %v2461 = vunpack.c.h.b16 %v1065
      %v2462 = vunpack.c.l.b16 %v1066
      %v2463 = vunpack.c.h.b16 %v1066
      %v2464 = vunpack.c.l.b16 %v1067
      %v2465 = vunpack.c.h.b16 %v1067
      %v2466 = vunpack.c.l.b16 %v1068
      %v2467 = vunpack.c.h.b16 %v1068
      %v2468 = vunpack.c.l.b16 %v1069
      %v2469 = vunpack.c.h.b16 %v1069
      %v2470 = vunpack.c.l.b16 %v1070
      %v2471 = vunpack.c.h.b16 %v1070
      %v2472 = vunpack.c.l.b16 %v1071
      %v2473 = vunpack.c.h.b16 %v1071
      %v2474 = vunpack.c.l.b16 %v1072
      %v2475 = vunpack.c.h.b16 %v1072
      %v2476 = vunpack.c.l.b16 %v1073
      %v2477 = vunpack.c.h.b16 %v1073
      %v2478 = vunpack.c.l.b16 %v1074
      %v2479 = vunpack.c.h.b16 %v1074
      %v2480 = vunpack.c.l.b16 %v1075
      %v2481 = vunpack.c.h.b16 %v1075
      %v2482 = vunpack.c.l.b16 %v1076
      %v2483 = vunpack.c.h.b16 %v1076
      %v2484 = vunpack.c.l.b16 %v1077
      %v2485 = vunpack.c.h.b16 %v1077
      %v2486 = vunpack.c.l.b16 %v1078
      %v2487 = vunpack.c.h.b16 %v1078
      %v2488 = vunpack.c.l.b16 %v1079
      %v2489 = vunpack.c.h.b16 %v1079
      %v2490 = vunpack.c.l.b16 %v1080
      %v2491 = vunpack.c.h.b16 %v1080
      %v2492 = vunpack.c.l.b16 %v1081
      %v2493 = vunpack.c.h.b16 %v1081
      %v2494 = vunpack.c.l.b16 %v1082
      %v2495 = vunpack.c.h.b16 %v1082
      %v2496 = vunpack.c.l.b16 %v1083
      %v2497 = vunpack.c.h.b16 %v1083
      %v2498 = vunpack.c.l.b16 %v1084
      %v2499 = vunpack.c.h.b16 %v1084
      %v2500 = vunpack.c.l.b16 %v1085
      %v2501 = vunpack.c.h.b16 %v1085
      %v2502 = vunpack.c.l.b16 %v1086
      %v2503 = vunpack.c.h.b16 %v1086
      %v2504 = vunpack.c.l.b16 %v1087
      %v2505 = vunpack.c.h.b16 %v1087
      %v2506 = vunpack.c.l.b16 %v1088
      %v2507 = vunpack.c.h.b16 %v1088
      %v2508 = vunpack.c.l.b16 %v1089
      %v2509 = vunpack.c.h.b16 %v1089
      %v2510 = vunpack.c.l.b16 %v1090
      %v2511 = vunpack.c.h.b16 %v1090
      %v2512 = vunpack.c.l.b16 %v1091
      %v2513 = vunpack.c.h.b16 %v1091
      %v2514 = vunpack.c.l.b16 %v1092
      %v2515 = vunpack.c.h.b16 %v1092
      %v2516 = vunpack.c.l.b16 %v1093
      %v2517 = vunpack.c.h.b16 %v1093
      %v2518 = vunpack.c.l.b16 %v1094
      %v2519 = vunpack.c.h.b16 %v1094
      %v2520 = vunpack.c.l.b16 %v1095
      %v2521 = vunpack.c.h.b16 %v1095
      %v2522 = vunpack.c.l.b16 %v1096
      %v2523 = vunpack.c.h.b16 %v1096
      %v2524 = vunpack.c.l.b16 %v1097
      %v2525 = vunpack.c.h.b16 %v1097
      %v2526 = vunpack.c.l.b16 %v1098
      %v2527 = vunpack.c.h.b16 %v1098
      %v2528 = vunpack.c.l.b16 %v1099
      %v2529 = vunpack.c.h.b16 %v1099
      %v2530 = vunpack.c.l.b16 %v1100
      %v2531 = vunpack.c.h.b16 %v1100
      %v2532 = vunpack.c.l.b16 %v1101
      %v2533 = vunpack.c.h.b16 %v1101
      %v2534 = vunpack.c.l.b16 %v1102
      %v2535 = vunpack.c.h.b16 %v1102
      %v2536 = vunpack.c.l.b16 %v1103
      %v2537 = vunpack.c.h.b16 %v1103
      %v2538 = vunpack.c.l.b16 %v1104
      %v2539 = vunpack.c.h.b16 %v1104
      %v2540 = vunpack.c.l.b16 %v1105
      %v2541 = vunpack.c.h.b16 %v1105
      %v2542 = vunpack.c.l.b16 %v1106
      %v2543 = vunpack.c.h.b16 %v1106
      %v2544 = vunpack.c.l.b16 %v1107
      %v2545 = vunpack.c.h.b16 %v1107
      %v2546 = vunpack.c.l.b16 %v1108
      %v2547 = vunpack.c.h.b16 %v1108
      %v2548 = vunpack.c.l.b16 %v1109
      %v2549 = vunpack.c.h.b16 %v1109
      %v2550 = vunpack.c.l.b16 %v1110
      %v2551 = vunpack.c.h.b16 %v1110
      %v2552 = vunpack.c.l.b16 %v1111
      %v2553 = vunpack.c.h.b16 %v1111
      %v2554 = vunpack.c.l.b16 %v1112
      %v2555 = vunpack.c.h.b16 %v1112
      %v2556 = vunpack.c.l.b16 %v1113
      %v2557 = vunpack.c.h.b16 %v1113
      %v2558 = vunpack.c.l.b16 %v1114
      %v2559 = vunpack.c.h.b16 %v1114
      %v2560 = vunpack.c.l.b16 %v1115
      %v2561 = vunpack.c.h.b16 %v1115
      %v2562 = vunpack.c.l.b16 %v1116
      %v2563 = vunpack.c.h.b16 %v1116
      %v2564 = vunpack.c.l.b16 %v1117
      %v2565 = vunpack.c.h.b16 %v1117
      %v2566 = vunpack.c.l.b16 %v1118
      %v2567 = vunpack.c.h.b16 %v1118
      %v2568 = vunpack.c.l.b16 %v1119
      %v2569 = vunpack.c.h.b16 %v1119
      %v2570 = vunpack.c.l.b16 %v1120
      %v2571 = vunpack.c.h.b16 %v1120
      %v2572 = vunpack.c.l.b16 %v1121
      %v2573 = vunpack.c.h.b16 %v1121
      %v2574 = vunpack.c.l.b16 %v1122
      %v2575 = vunpack.c.h.b16 %v1122
      %v2576 = vunpack.c.l.b16 %v1123
      %v2577 = vunpack.c.h.b16 %v1123
      %v2578 = vunpack.c.l.b16 %v1124
      %v2579 = vunpack.c.h.b16 %v1124
      %v2580 = vunpack.c.l.b16 %v1125
      %v2581 = vunpack.c.h.b16 %v1125
      %v2582 = vunpack.c.l.b16 %v1126
      %v2583 = vunpack.c.h.b16 %v1126
      %v2584 = vunpack.c.l.b16 %v1127
      %v2585 = vunpack.c.h.b16 %v1127
      %v2586 = vunpack.c.l.b16 %v1128
      %v2587 = vunpack.c.h.b16 %v1128
      %v2588 = vunpack.c.l.b16 %v1129
      %v2589 = vunpack.c.h.b16 %v1129
      %v2590 = vunpack.c.l.b16 %v1130
      %v2591 = vunpack.c.h.b16 %v1130
      %v2592 = vunpack.c.l.b16 %v1131
      %v2593 = vunpack.c.h.b16 %v1131
      %v2594 = vpack.c.b16 %v1638, %v1634
      %v2595 = vpack.c.b16 %v1639, %v1635
      %v2596 = vpack.c.b16 %v1640, %v1636
      %v2597 = vpack.c.b16 %v1641, %v1637
      %v2598 = vpack.c.b16 %v1646, %v1642
      %v2599 = vpack.c.b16 %v1647, %v1643
      %v2600 = vpack.c.b16 %v1648, %v1644
      %v2601 = vpack.c.b16 %v1649, %v1645
      %v2602 = vpack.c.b16 %v1654, %v1650
      %v2603 = vpack.c.b16 %v1655, %v1651
      %v2604 = vpack.c.b16 %v1656, %v1652
      %v2605 = vpack.c.b16 %v1657, %v1653
      %v2606 = vpack.c.b16 %v1662, %v1658
      %v2607 = vpack.c.b16 %v1663, %v1659
      %v2608 = vpack.c.b16 %v1664, %v1660
      %v2609 = vpack.c.b16 %v1665, %v1661
      %v2610 = vpack.c.b16 %v1670, %v1666
      %v2611 = vpack.c.b16 %v1671, %v1667
      %v2612 = vpack.c.b16 %v1672, %v1668
      %v2613 = vpack.c.b16 %v1673, %v1669
      %v2614 = vpack.c.b16 %v1678, %v1674
      %v2615 = vpack.c.b16 %v1679, %v1675
      %v2616 = vpack.c.b16 %v1680, %v1676
      %v2617 = vpack.c.b16 %v1681, %v1677
      %v2618 = vpack.c.b16 %v1686, %v1682
      %v2619 = vpack.c.b16 %v1687, %v1683
      %v2620 = vpack.c.b16 %v1688, %v1684
      %v2621 = vpack.c.b16 %v1689, %v1685
      %v2622 = vpack.c.b16 %v1694, %v1690
      %v2623 = vpack.c.b16 %v1695, %v1691
      %v2624 = vpack.c.b16 %v1696, %v1692
      %v2625 = vpack.c.b16 %v1697, %v1693
      %v2626 = vpack.c.b16 %v1702, %v1698
      %v2627 = vpack.c.b16 %v1703, %v1699
      %v2628 = vpack.c.b16 %v1704, %v1700
      %v2629 = vpack.c.b16 %v1705, %v1701
      %v2630 = vpack.c.b16 %v1710, %v1706
      %v2631 = vpack.c.b16 %v1711, %v1707
      %v2632 = vpack.c.b16 %v1712, %v1708
      %v2633 = vpack.c.b16 %v1713, %v1709
      %v2634 = vpack.c.b16 %v1718, %v1714
      %v2635 = vpack.c.b16 %v1719, %v1715
      %v2636 = vpack.c.b16 %v1720, %v1716
      %v2637 = vpack.c.b16 %v1721, %v1717
      %v2638 = vpack.c.b16 %v1726, %v1722
      %v2639 = vpack.c.b16 %v1727, %v1723
      %v2640 = vpack.c.b16 %v1728, %v1724
      %v2641 = vpack.c.b16 %v1729, %v1725
      %v2642 = vpack.c.b16 %v1734, %v1730
      %v2643 = vpack.c.b16 %v1735, %v1731
      %v2644 = vpack.c.b16 %v1736, %v1732
      %v2645 = vpack.c.b16 %v1737, %v1733
      %v2646 = vpack.c.b16 %v1742, %v1738
      %v2647 = vpack.c.b16 %v1743, %v1739
      %v2648 = vpack.c.b16 %v1744, %v1740
      %v2649 = vpack.c.b16 %v1745, %v1741
      %v2650 = vpack.c.b16 %v1750, %v1746
      %v2651 = vpack.c.b16 %v1751, %v1747
      %v2652 = vpack.c.b16 %v1752, %v1748
      %v2653 = vpack.c.b16 %v1753, %v1749
      %v2654 = vpack.c.b16 %v1758, %v1754
      %v2655 = vpack.c.b16 %v1759, %v1755
      %v2656 = vpack.c.b16 %v1760, %v1756
      %v2657 = vpack.c.b16 %v1761, %v1757
      %v2658 = vpack.c.b16 %v1766, %v1762
      %v2659 = vpack.c.b16 %v1767, %v1763
      %v2660 = vpack.c.b16 %v1768, %v1764
      %v2661 = vpack.c.b16 %v1769, %v1765
      %v2662 = vpack.c.b16 %v1774, %v1770
      %v2663 = vpack.c.b16 %v1775, %v1771
      %v2664 = vpack.c.b16 %v1776, %v1772
      %v2665 = vpack.c.b16 %v1777, %v1773
      %v2666 = vpack.c.b16 %v1782, %v1778
      %v2667 = vpack.c.b16 %v1783, %v1779
      %v2668 = vpack.c.b16 %v1784, %v1780
      %v2669 = vpack.c.b16 %v1785, %v1781
      %v2670 = vpack.c.b16 %v1790, %v1786
      %v2671 = vpack.c.b16 %v1791, %v1787
      %v2672 = vpack.c.b16 %v1792, %v1788
      %v2673 = vpack.c.b16 %v1793, %v1789
      %v2674 = vpack.c.b16 %v1798, %v1794
      %v2675 = vpack.c.b16 %v1799, %v1795
      %v2676 = vpack.c.b16 %v1800, %v1796
      %v2677 = vpack.c.b16 %v1801, %v1797
      %v2678 = vpack.c.b16 %v1806, %v1802
      %v2679 = vpack.c.b16 %v1807, %v1803
      %v2680 = vpack.c.b16 %v1808, %v1804
      %v2681 = vpack.c.b16 %v1809, %v1805
      %v2682 = vpack.c.b16 %v1814, %v1810
      %v2683 = vpack.c.b16 %v1815, %v1811
      %v2684 = vpack.c.b16 %v1816, %v1812
      %v2685 = vpack.c.b16 %v1817, %v1813
      %v2686 = vpack.c.b16 %v1822, %v1818
      %v2687 = vpack.c.b16 %v1823, %v1819
      %v2688 = vpack.c.b16 %v1824, %v1820
      %v2689 = vpack.c.b16 %v1825, %v1821
      %v2690 = vpack.c.b16 %v1830, %v1826
      %v2691 = vpack.c.b16 %v1831, %v1827
      %v2692 = vpack.c.b16 %v1832, %v1828
      %v2693 = vpack.c.b16 %v1833, %v1829
      %v2694 = vpack.c.b16 %v1838, %v1834
      %v2695 = vpack.c.b16 %v1839, %v1835
      %v2696 = vpack.c.b16 %v1840, %v1836
      %v2697 = vpack.c.b16 %v1841, %v1837
      %v2698 = vpack.c.b16 %v1846, %v1842
      %v2699 = vpack.c.b16 %v1847, %v1843
      %v2700 = vpack.c.b16 %v1848, %v1844
      %v2701 = vpack.c.b16 %v1849, %v1845
      %v2702 = vpack.c.b16 %v1854, %v1850
      %v2703 = vpack.c.b16 %v1855, %v1851
      %v2704 = vpack.c.b16 %v1856, %v1852
      %v2705 = vpack.c.b16 %v1857, %v1853
      %v2706 = vpack.c.b16 %v1862, %v1858
      %v2707 = vpack.c.b16 %v1863, %v1859
      %v2708 = vpack.c.b16 %v1864, %v1860
      %v2709 = vpack.c.b16 %v1865, %v1861
      %v2710 = vpack.c.b16 %v1870, %v1866
      %v2711 = vpack.c.b16 %v1871, %v1867
      %v2712 = vpack.c.b16 %v1872, %v1868
      %v2713 = vpack.c.b16 %v1873, %v1869
      %v2714 = vpack.c.b16 %v1878, %v1874
      %v2715 = vpack.c.b16 %v1879, %v1875
      %v2716 = vpack.c.b16 %v1880, %v1876
      %v2717 = vpack.c.b16 %v1881, %v1877
      %v2718 = vpack.c.b16 %v1886, %v1882
      %v2719 = vpack.c.b16 %v1887, %v1883
      %v2720 = vpack.c.b16 %v1888, %v1884
      %v2721 = vpack.c.b16 %v1889, %v1885
      %v2722 = vpack.c.b16 %v1894, %v1890
      %v2723 = vpack.c.b16 %v1895, %v1891
      %v2724 = vpack.c.b16 %v1896, %v1892
      %v2725 = vpack.c.b16 %v1897, %v1893
      %v2726 = vpack.c.b16 %v1902, %v1898
      %v2727 = vpack.c.b16 %v1903, %v1899
      %v2728 = vpack.c.b16 %v1904, %v1900
      %v2729 = vpack.c.b16 %v1905, %v1901
      %v2730 = vpack.c.b16 %v1910, %v1906
      %v2731 = vpack.c.b16 %v1911, %v1907
      %v2732 = vpack.c.b16 %v1912, %v1908
      %v2733 = vpack.c.b16 %v1913, %v1909
      %v2734 = vpack.c.b16 %v1918, %v1914
      %v2735 = vpack.c.b16 %v1919, %v1915
      %v2736 = vpack.c.b16 %v1920, %v1916
      %v2737 = vpack.c.b16 %v1921, %v1917
      %v2738 = vpack.c.b16 %v1926, %v1922
      %v2739 = vpack.c.b16 %v1927, %v1923
      %v2740 = vpack.c.b16 %v1928, %v1924
      %v2741 = vpack.c.b16 %v1929, %v1925
      %v2742 = vpack.c.b16 %v1934, %v1930
      %v2743 = vpack.c.b16 %v1935, %v1931
      %v2744 = vpack.c.b16 %v1936, %v1932
      %v2745 = vpack.c.b16 %v1937, %v1933
      %v2746 = vpack.c.b16 %v1942, %v1938
      %v2747 = vpack.c.b16 %v1943, %v1939
      %v2748 = vpack.c.b16 %v1944, %v1940
      %v2749 = vpack.c.b16 %v1945, %v1941
      %v2750 = vpack.c.b16 %v1950, %v1946
      %v2751 = vpack.c.b16 %v1951, %v1947
      %v2752 = vpack.c.b16 %v1952, %v1948
      %v2753 = vpack.c.b16 %v1953, %v1949
      %v2754 = vpack.c.b16 %v1958, %v1954
      %v2755 = vpack.c.b16 %v1959, %v1955
      %v2756 = vpack.c.b16 %v1960, %v1956
      %v2757 = vpack.c.b16 %v1961, %v1957
      %v2758 = vpack.c.b16 %v1966, %v1962
      %v2759 = vpack.c.b16 %v1967, %v1963
      %v2760 = vpack.c.b16 %v1968, %v1964
      %v2761 = vpack.c.b16 %v1969, %v1965
      %v2762 = vpack.c.b16 %v1974, %v1970
      %v2763 = vpack.c.b16 %v1975, %v1971
      %v2764 = vpack.c.b16 %v1976, %v1972
      %v2765 = vpack.c.b16 %v1977, %v1973
      %v2766 = vpack.c.b16 %v1982, %v1978
      %v2767 = vpack.c.b16 %v1983, %v1979
      %v2768 = vpack.c.b16 %v1984, %v1980
      %v2769 = vpack.c.b16 %v1985, %v1981
      %v2770 = vpack.c.b16 %v1990, %v1986
      %v2771 = vpack.c.b16 %v1991, %v1987
      %v2772 = vpack.c.b16 %v1992, %v1988
      %v2773 = vpack.c.b16 %v1993, %v1989
      %v2774 = vpack.c.b16 %v1998, %v1994
      %v2775 = vpack.c.b16 %v1999, %v1995
      %v2776 = vpack.c.b16 %v2000, %v1996
      %v2777 = vpack.c.b16 %v2001, %v1997
      %v2778 = vpack.c.b16 %v2006, %v2002
      %v2779 = vpack.c.b16 %v2007, %v2003
      %v2780 = vpack.c.b16 %v2008, %v2004
      %v2781 = vpack.c.b16 %v2009, %v2005
      %v2782 = vpack.c.b16 %v2014, %v2010
      %v2783 = vpack.c.b16 %v2015, %v2011
      %v2784 = vpack.c.b16 %v2016, %v2012
      %v2785 = vpack.c.b16 %v2017, %v2013
      %v2786 = vpack.c.b16 %v2022, %v2018
      %v2787 = vpack.c.b16 %v2023, %v2019
      %v2788 = vpack.c.b16 %v2024, %v2020
      %v2789 = vpack.c.b16 %v2025, %v2021
      %v2790 = vpack.c.b16 %v2030, %v2026
      %v2791 = vpack.c.b16 %v2031, %v2027
      %v2792 = vpack.c.b16 %v2032, %v2028
      %v2793 = vpack.c.b16 %v2033, %v2029
      %v2794 = vpack.c.b16 %v2038, %v2034
      %v2795 = vpack.c.b16 %v2039, %v2035
      %v2796 = vpack.c.b16 %v2040, %v2036
      %v2797 = vpack.c.b16 %v2041, %v2037
      %v2798 = vpack.c.b16 %v2046, %v2042
      %v2799 = vpack.c.b16 %v2047, %v2043
      %v2800 = vpack.c.b16 %v2048, %v2044
      %v2801 = vpack.c.b16 %v2049, %v2045
      %v2802 = vpack.c.b16 %v2054, %v2050
      %v2803 = vpack.c.b16 %v2055, %v2051
      %v2804 = vpack.c.b16 %v2056, %v2052
      %v2805 = vpack.c.b16 %v2057, %v2053
      %v2806 = vpack.c.b16 %v2062, %v2058
      %v2807 = vpack.c.b16 %v2063, %v2059
      %v2808 = vpack.c.b16 %v2064, %v2060
      %v2809 = vpack.c.b16 %v2065, %v2061
      %v2810 = vpack.c.b16 %v2070, %v2066
      %v2811 = vpack.c.b16 %v2071, %v2067
      %v2812 = vpack.c.b16 %v2072, %v2068
      %v2813 = vpack.c.b16 %v2073, %v2069
      %v2814 = vpack.c.b16 %v2078, %v2074
      %v2815 = vpack.c.b16 %v2079, %v2075
      %v2816 = vpack.c.b16 %v2080, %v2076
      %v2817 = vpack.c.b16 %v2081, %v2077
      %v2818 = vpack.c.b16 %v2086, %v2082
      %v2819 = vpack.c.b16 %v2087, %v2083
      %v2820 = vpack.c.b16 %v2088, %v2084
      %v2821 = vpack.c.b16 %v2089, %v2085
      %v2822 = vpack.c.b16 %v2094, %v2090
      %v2823 = vpack.c.b16 %v2095, %v2091
      %v2824 = vpack.c.b16 %v2096, %v2092
      %v2825 = vpack.c.b16 %v2097, %v2093
      %v2826 = vpack.c.b16 %v2102, %v2098
      %v2827 = vpack.c.b16 %v2103, %v2099
      %v2828 = vpack.c.b16 %v2104, %v2100
      %v2829 = vpack.c.b16 %v2105, %v2101
      %v2830 = vpack.c.b16 %v2110, %v2106
      %v2831 = vpack.c.b16 %v2111, %v2107
      %v2832 = vpack.c.b16 %v2112, %v2108
      %v2833 = vpack.c.b16 %v2113, %v2109
      %v2834 = vpack.c.b16 %v2118, %v2114
      %v2835 = vpack.c.b16 %v2119, %v2115
      %v2836 = vpack.c.b16 %v2120, %v2116
      %v2837 = vpack.c.b16 %v2121, %v2117
      %v2838 = vpack.c.b16 %v2126, %v2122
      %v2839 = vpack.c.b16 %v2127, %v2123
      %v2840 = vpack.c.b16 %v2128, %v2124
      %v2841 = vpack.c.b16 %v2129, %v2125
      %v2842 = vpack.c.b16 %v2134, %v2130
      %v2843 = vpack.c.b16 %v2135, %v2131
      %v2844 = vpack.c.b16 %v2136, %v2132
      %v2845 = vpack.c.b16 %v2137, %v2133
      %v2846 = vpack.c.b16 %v2142, %v2138
      %v2847 = vpack.c.b16 %v2143, %v2139
      %v2848 = vpack.c.b16 %v2144, %v2140
      %v2849 = vpack.c.b16 %v2145, %v2141
      %v2850 = vpack.c.b16 %v2150, %v2146
      %v2851 = vpack.c.b16 %v2151, %v2147
      %v2852 = vpack.c.b16 %v2152, %v2148
      %v2853 = vpack.c.b16 %v2153, %v2149
      %v2854 = vpack.c.b16 %v2158, %v2154
      %v2855 = vpack.c.b16 %v2159, %v2155
      %v2856 = vpack.c.b16 %v2160, %v2156
      %v2857 = vpack.c.b16 %v2161, %v2157
      %v2858 = vpack.c.b16 %v2166, %v2162
      %v2859 = vpack.c.b16 %v2167, %v2163
      %v2860 = vpack.c.b16 %v2168, %v2164
      %v2861 = vpack.c.b16 %v2169, %v2165
      %v2862 = vpack.c.b16 %v2174, %v2170
      %v2863 = vpack.c.b16 %v2175, %v2171
      %v2864 = vpack.c.b16 %v2176, %v2172
      %v2865 = vpack.c.b16 %v2177, %v2173
      %v2866 = vpack.c.b16 %v2182, %v2178
      %v2867 = vpack.c.b16 %v2183, %v2179
      %v2868 = vpack.c.b16 %v2184, %v2180
      %v2869 = vpack.c.b16 %v2185, %v2181
      %v2870 = vpack.c.b16 %v2190, %v2186
      %v2871 = vpack.c.b16 %v2191, %v2187
      %v2872 = vpack.c.b16 %v2192, %v2188
      %v2873 = vpack.c.b16 %v2193, %v2189
      %v2874 = vpack.c.b16 %v2198, %v2194
      %v2875 = vpack.c.b16 %v2199, %v2195
      %v2876 = vpack.c.b16 %v2200, %v2196
      %v2877 = vpack.c.b16 %v2201, %v2197
      %v2878 = vpack.c.b16 %v2206, %v2202
      %v2879 = vpack.c.b16 %v2207, %v2203
      %v2880 = vpack.c.b16 %v2208, %v2204
      %v2881 = vpack.c.b16 %v2209, %v2205
      %v2882 = vpack.c.b16 %v2214, %v2210
      %v2883 = vpack.c.b16 %v2215, %v2211
      %v2884 = vpack.c.b16 %v2216, %v2212
      %v2885 = vpack.c.b16 %v2217, %v2213
      %v2886 = vpack.c.b16 %v2222, %v2218
      %v2887 = vpack.c.b16 %v2223, %v2219
      %v2888 = vpack.c.b16 %v2224, %v2220
      %v2889 = vpack.c.b16 %v2225, %v2221
      %v2890 = vpack.c.b16 %v2230, %v2226
      %v2891 = vpack.c.b16 %v2231, %v2227
      %v2892 = vpack.c.b16 %v2232, %v2228
      %v2893 = vpack.c.b16 %v2233, %v2229
      %v2894 = vpack.c.b16 %v2238, %v2234
      %v2895 = vpack.c.b16 %v2239, %v2235
      %v2896 = vpack.c.b16 %v2240, %v2236
      %v2897 = vpack.c.b16 %v2241, %v2237
      %v2898 = vpack.c.b16 %v2246, %v2242
      %v2899 = vpack.c.b16 %v2247, %v2243
      %v2900 = vpack.c.b16 %v2248, %v2244
      %v2901 = vpack.c.b16 %v2249, %v2245
      %v2902 = vpack.c.b16 %v2254, %v2250
      %v2903 = vpack.c.b16 %v2255, %v2251
      %v2904 = vpack.c.b16 %v2256, %v2252
      %v2905 = vpack.c.b16 %v2257, %v2253
      %v2906 = vpack.c.b16 %v2262, %v2258
      %v2907 = vpack.c.b16 %v2263, %v2259
      %v2908 = vpack.c.b16 %v2264, %v2260
      %v2909 = vpack.c.b16 %v2265, %v2261
      %v2910 = vpack.c.b16 %v2270, %v2266
      %v2911 = vpack.c.b16 %v2271, %v2267
      %v2912 = vpack.c.b16 %v2272, %v2268
      %v2913 = vpack.c.b16 %v2273, %v2269
      %v2914 = vpack.c.b16 %v2278, %v2274
      %v2915 = vpack.c.b16 %v2279, %v2275
      %v2916 = vpack.c.b16 %v2280, %v2276
      %v2917 = vpack.c.b16 %v2281, %v2277
      %v2918 = vpack.c.b16 %v2286, %v2282
      %v2919 = vpack.c.b16 %v2287, %v2283
      %v2920 = vpack.c.b16 %v2288, %v2284
      %v2921 = vpack.c.b16 %v2289, %v2285
      %v2922 = vpack.c.b16 %v2294, %v2290
      %v2923 = vpack.c.b16 %v2295, %v2291
      %v2924 = vpack.c.b16 %v2296, %v2292
      %v2925 = vpack.c.b16 %v2297, %v2293
      %v2926 = vpack.c.b16 %v2302, %v2298
      %v2927 = vpack.c.b16 %v2303, %v2299
      %v2928 = vpack.c.b16 %v2304, %v2300
      %v2929 = vpack.c.b16 %v2305, %v2301
      %v2930 = vpack.c.b16 %v2310, %v2306
      %v2931 = vpack.c.b16 %v2311, %v2307
      %v2932 = vpack.c.b16 %v2312, %v2308
      %v2933 = vpack.c.b16 %v2313, %v2309
      %v2934 = vpack.c.b16 %v2318, %v2314
      %v2935 = vpack.c.b16 %v2319, %v2315
      %v2936 = vpack.c.b16 %v2320, %v2316
      %v2937 = vpack.c.b16 %v2321, %v2317
      %v2938 = vpack.c.b16 %v2326, %v2322
      %v2939 = vpack.c.b16 %v2327, %v2323
      %v2940 = vpack.c.b16 %v2328, %v2324
      %v2941 = vpack.c.b16 %v2329, %v2325
      %v2942 = vpack.c.b16 %v2334, %v2330
      %v2943 = vpack.c.b16 %v2335, %v2331
      %v2944 = vpack.c.b16 %v2336, %v2332
      %v2945 = vpack.c.b16 %v2337, %v2333
      %v2946 = vpack.c.b16 %v2342, %v2338
      %v2947 = vpack.c.b16 %v2343, %v2339
      %v2948 = vpack.c.b16 %v2344, %v2340
      %v2949 = vpack.c.b16 %v2345, %v2341
      %v2950 = vpack.c.b16 %v2350, %v2346
      %v2951 = vpack.c.b16 %v2351, %v2347
      %v2952 = vpack.c.b16 %v2352, %v2348
      %v2953 = vpack.c.b16 %v2353, %v2349
      %v2954 = vpack.c.b16 %v2358, %v2354
      %v2955 = vpack.c.b16 %v2359, %v2355
      %v2956 = vpack.c.b16 %v2360, %v2356
      %v2957 = vpack.c.b16 %v2361, %v2357
      %v2958 = vpack.c.b16 %v2366, %v2362
      %v2959 = vpack.c.b16 %v2367, %v2363
      %v2960 = vpack.c.b16 %v2368, %v2364
      %v2961 = vpack.c.b16 %v2369, %v2365
      %v2962 = vpack.c.b16 %v2374, %v2370
      %v2963 = vpack.c.b16 %v2375, %v2371
      %v2964 = vpack.c.b16 %v2376, %v2372
      %v2965 = vpack.c.b16 %v2377, %v2373
      %v2966 = vpack.c.b16 %v2382, %v2378
      %v2967 = vpack.c.b16 %v2383, %v2379
      %v2968 = vpack.c.b16 %v2384, %v2380
      %v2969 = vpack.c.b16 %v2385, %v2381
      %v2970 = vpack.c.b16 %v2390, %v2386
      %v2971 = vpack.c.b16 %v2391, %v2387
      %v2972 = vpack.c.b16 %v2392, %v2388
      %v2973 = vpack.c.b16 %v2393, %v2389
      %v2974 = vpack.c.b16 %v2398, %v2394
      %v2975 = vpack.c.b16 %v2399, %v2395
      %v2976 = vpack.c.b16 %v2400, %v2396
      %v2977 = vpack.c.b16 %v2401, %v2397
      %v2978 = vpack.c.b16 %v2406, %v2402
      %v2979 = vpack.c.b16 %v2407, %v2403
      %v2980 = vpack.c.b16 %v2408, %v2404
      %v2981 = vpack.c.b16 %v2409, %v2405
      %v2982 = vpack.c.b16 %v2414, %v2410
      %v2983 = vpack.c.b16 %v2415, %v2411
      %v2984 = vpack.c.b16 %v2416, %v2412
      %v2985 = vpack.c.b16 %v2417, %v2413
      %v2986 = vpack.c.b16 %v2422, %v2418
      %v2987 = vpack.c.b16 %v2423, %v2419
      %v2988 = vpack.c.b16 %v2424, %v2420
      %v2989 = vpack.c.b16 %v2425, %v2421
      %v2990 = vpack.c.b16 %v2430, %v2426
      %v2991 = vpack.c.b16 %v2431, %v2427
      %v2992 = vpack.c.b16 %v2432, %v2428
      %v2993 = vpack.c.b16 %v2433, %v2429
      %v2994 = vpack.c.b16 %v2438, %v2434
      %v2995 = vpack.c.b16 %v2439, %v2435
      %v2996 = vpack.c.b16 %v2440, %v2436
      %v2997 = vpack.c.b16 %v2441, %v2437
      %v2998 = vpack.c.b16 %v2446, %v2442
      %v2999 = vpack.c.b16 %v2447, %v2443
      %v3000 = vpack.c.b16 %v2448, %v2444
      %v3001 = vpack.c.b16 %v2449, %v2445
      %v3002 = vpack.c.b16 %v2454, %v2450
      %v3003 = vpack.c.b16 %v2455, %v2451
      %v3004 = vpack.c.b16 %v2456, %v2452
      %v3005 = vpack.c.b16 %v2457, %v2453
      %v3006 = vpack.c.b16 %v2462, %v2458
      %v3007 = vpack.c.b16 %v2463, %v2459
      %v3008 = vpack.c.b16 %v2464, %v2460
      %v3009 = vpack.c.b16 %v2465, %v2461
      %v3010 = vpack.c.b16 %v2470, %v2466
      %v3011 = vpack.c.b16 %v2471, %v2467
      %v3012 = vpack.c.b16 %v2472, %v2468
      %v3013 = vpack.c.b16 %v2473, %v2469
      %v3014 = vpack.c.b16 %v2478, %v2474
      %v3015 = vpack.c.b16 %v2479, %v2475
      %v3016 = vpack.c.b16 %v2480, %v2476
      %v3017 = vpack.c.b16 %v2481, %v2477
      %v3018 = vpack.c.b16 %v2486, %v2482
      %v3019 = vpack.c.b16 %v2487, %v2483
      %v3020 = vpack.c.b16 %v2488, %v2484
      %v3021 = vpack.c.b16 %v2489, %v2485
      %v3022 = vpack.c.b16 %v2494, %v2490
      %v3023 = vpack.c.b16 %v2495, %v2491
      %v3024 = vpack.c.b16 %v2496, %v2492
      %v3025 = vpack.c.b16 %v2497, %v2493
      %v3026 = vpack.c.b16 %v2502, %v2498
      %v3027 = vpack.c.b16 %v2503, %v2499
      %v3028 = vpack.c.b16 %v2504, %v2500
      %v3029 = vpack.c.b16 %v2505, %v2501
      %v3030 = vpack.c.b16 %v2510, %v2506
      %v3031 = vpack.c.b16 %v2511, %v2507
      %v3032 = vpack.c.b16 %v2512, %v2508
      %v3033 = vpack.c.b16 %v2513, %v2509
      %v3034 = vpack.c.b16 %v2518, %v2514
      %v3035 = vpack.c.b16 %v2519, %v2515
      %v3036 = vpack.c.b16 %v2520, %v2516
      %v3037 = vpack.c.b16 %v2521, %v2517
      %v3038 = vpack.c.b16 %v2526, %v2522
      %v3039 = vpack.c.b16 %v2527, %v2523
      %v3040 = vpack.c.b16 %v2528, %v2524
      %v3041 = vpack.c.b16 %v2529, %v2525
      %v3042 = vpack.c.b16 %v2534, %v2530
      %v3043 = vpack.c.b16 %v2535, %v2531
      %v3044 = vpack.c.b16 %v2536, %v2532
      %v3045 = vpack.c.b16 %v2537, %v2533
      %v3046 = vpack.c.b16 %v2542, %v2538
      %v3047 = vpack.c.b16 %v2543, %v2539
      %v3048 = vpack.c.b16 %v2544, %v2540
      %v3049 = vpack.c.b16 %v2545, %v2541
      %v3050 = vpack.c.b16 %v2550, %v2546
      %v3051 = vpack.c.b16 %v2551, %v2547
      %v3052 = vpack.c.b16 %v2552, %v2548
      %v3053 = vpack.c.b16 %v2553, %v2549
      %v3054 = vpack.c.b16 %v2558, %v2554
      %v3055 = vpack.c.b16 %v2559, %v2555
      %v3056 = vpack.c.b16 %v2560, %v2556
      %v3057 = vpack.c.b16 %v2561, %v2557
      %v3058 = vpack.c.b16 %v2566, %v2562
      %v3059 = vpack.c.b16 %v2567, %v2563
      %v3060 = vpack.c.b16 %v2568, %v2564
      %v3061 = vpack.c.b16 %v2569, %v2565
      %v3062 = vpack.c.b16 %v2574, %v2570
      %v3063 = vpack.c.b16 %v2575, %v2571
      %v3064 = vpack.c.b16 %v2576, %v2572
      %v3065 = vpack.c.b16 %v2577, %v2573
      %v3066 = vpack.c.b16 %v2582, %v2578
      %v3067 = vpack.c.b16 %v2583, %v2579
      %v3068 = vpack.c.b16 %v2584, %v2580
      %v3069 = vpack.c.b16 %v2585, %v2581
      %v3070 = vpack.c.b16 %v2590, %v2586
      %v3071 = vpack.c.b16 %v2591, %v2587
      %v3072 = vpack.c.b16 %v2592, %v2588
      %v3073 = vpack.c.b16 %v2593, %v2589
      %3554 = vmatprep.subr.bf16.mxu0 %v2595
      %3555 = vmatpush1.bf16.msra.mxu0 %v2594
      %3556 = vmatprep.subr.bf16.mxu0 %v2599
      %3557 = vmatpush1.bf16.msra.mxu0 %v2598
      %3558 = vmatprep.subr.bf16.mxu0 %v2603
      %3559 = vmatpush1.bf16.msra.mxu0 %v2602
      %3560 = vmatprep.subr.bf16.mxu0 %v2607
      %3561 = vmatpush1.bf16.msra.mxu0 %v2606
      %3562 = vmatprep.subr.bf16.mxu0 %v2611
      %3563 = vmatpush1.bf16.msra.mxu0 %v2610
      %3564 = vmatprep.subr.bf16.mxu0 %v2615
      %3565 = vmatpush1.bf16.msra.mxu0 %v2614
      %3566 = vmatprep.subr.bf16.mxu0 %v2619
      %3567 = vmatpush1.bf16.msra.mxu0 %v2618
      %3568 = vmatprep.subr.bf16.mxu0 %v2623
      %3569 = vmatpush1.bf16.msra.mxu0 %v2622
      %3570 = vmatprep.subr.bf16.mxu0 %v2627
      %3571 = vmatpush1.bf16.msra.mxu0 %v2626
      %3572 = vmatprep.subr.bf16.mxu0 %v2631
      %3573 = vmatpush1.bf16.msra.mxu0 %v2630
      %3574 = vmatprep.subr.bf16.mxu0 %v2635
      %3575 = vmatpush1.bf16.msra.mxu0 %v2634
      %3576 = vmatprep.subr.bf16.mxu0 %v2639
      %3577 = vmatpush1.bf16.msra.mxu0 %v2638
      %3578 = vmatprep.subr.bf16.mxu0 %v2643
      %3579 = vmatpush1.bf16.msra.mxu0 %v2642
      %3580 = vmatprep.subr.bf16.mxu0 %v2647
      %3581 = vmatpush1.bf16.msra.mxu0 %v2646
      %3582 = vmatprep.subr.bf16.mxu0 %v2651
      %3583 = vmatpush1.bf16.msra.mxu0 %v2650
      %3584 = vmatprep.subr.bf16.mxu0 %v2655
      %3585 = vmatpush1.bf16.msra.mxu0 %v2654
      %3586 = vmatprep.mubr.bf16.mxu0 %v623
      %3587 = vmatmul.mubr.bf16.gmra.mrb[0].mxu0 %v622
      %v3588 = vpop.f32.mrb[0].mxu0
      %v3589 = vadd.f32 %v1137, %v3588
      %v3590 = vpop.f32.mrb[0].mxu0
      %v3591 = vadd.f32 %v1141, %v3590
      %v3592 = vpop.f32.mrb[0].mxu0
      %v3593 = vadd.f32 %v1137, %v3592
      %v3594 = vpop.f32.mrb[0].mxu0
      %v3595 = vadd.f32 %v1141, %v3594
      %3596 = vmatprep.mubr.bf16.mxu0 %v638
      %3597 = vmatmul.mubr.bf16.gmra.mrb[0].mxu0 %v637
      %v3598 = vpop.f32.mrb[0].mxu0
      %v3599 = vadd.f32 %v1137, %v3598
      %v3600 = vpop.f32.mrb[0].mxu0
      %v3601 = vadd.f32 %v1141, %v3600
      %v3602 = vpop.f32.mrb[0].mxu0
      %v3603 = vadd.f32 %v1137, %v3602
      %v3604 = vpop.f32.mrb[0].mxu0
      %v3605 = vadd.f32 %v1141, %v3604
      %3606 = vdwg.mxu0
      %3607 = vmatprep.subr.bf16.mxu0 %v2659
      %3608 = vmatpush1.bf16.msra.mxu0 %v2658
      %3609 = vmatprep.subr.bf16.mxu0 %v2663
      %3610 = vmatpush1.bf16.msra.mxu0 %v2662
      %3611 = vmatprep.subr.bf16.mxu0 %v2667
      %3612 = vmatpush1.bf16.msra.mxu0 %v2666
      %3613 = vmatprep.subr.bf16.mxu0 %v2671
      %3614 = vmatpush1.bf16.msra.mxu0 %v2670
      %3615 = vmatprep.subr.bf16.mxu0 %v2675
      %3616 = vmatpush1.bf16.msra.mxu0 %v2674
      %3617 = vmatprep.subr.bf16.mxu0 %v2679
      %3618 = vmatpush1.bf16.msra.mxu0 %v2678
      %3619 = vmatprep.subr.bf16.mxu0 %v2683
      %3620 = vmatpush1.bf16.msra.mxu0 %v2682
      %3621 = vmatprep.subr.bf16.mxu0 %v2687
      %3622 = vmatpush1.bf16.msra.mxu0 %v2686
      %3623 = vmatprep.subr.bf16.mxu0 %v2691
      %3624 = vmatpush1.bf16.msra.mxu0 %v2690
      %3625 = vmatprep.subr.bf16.mxu0 %v2695
      %3626 = vmatpush1.bf16.msra.mxu0 %v2694
      %3627 = vmatprep.subr.bf16.mxu0 %v2699
      %3628 = vmatpush1.bf16.msra.mxu0 %v2698
      %3629 = vmatprep.subr.bf16.mxu0 %v2703
      %3630 = vmatpush1.bf16.msra.mxu0 %v2702
      %3631 = vmatprep.subr.bf16.mxu0 %v2707
      %3632 = vmatpush1.bf16.msra.mxu0 %v2706
      %3633 = vmatprep.subr.bf16.mxu0 %v2711
      %3634 = vmatpush1.bf16.msra.mxu0 %v2710
      %3635 = vmatprep.subr.bf16.mxu0 %v2715
      %3636 = vmatpush1.bf16.msra.mxu0 %v2714
      %3637 = vmatprep.subr.bf16.mxu0 %v2719
      %3638 = vmatpush1.bf16.msra.mxu0 %v2718
      %3639 = vmatprep.mubr.bf16.mxu0 %v625
      %3640 = vmatmul.mubr.bf16.gmra.mrb[0].mxu0 %v624
      %v3641 = vpop.f32.mrb[0].mxu0
      %v3642 = vadd.f32 %v3589, %v3641
      %v3643 = vpop.f32.mrb[0].mxu0
      %v3644 = vadd.f32 %v3591, %v3643
      %v3645 = vpop.f32.mrb[0].mxu0
      %v3646 = vadd.f32 %v3593, %v3645
      %v3647 = vpop.f32.mrb[0].mxu0
      %v3648 = vadd.f32 %v3595, %v3647
      %3649 = vmatprep.mubr.bf16.mxu0 %v640
      %3650 = vmatmul.mubr.bf16.gmra.mrb[0].mxu0 %v639
      %v3651 = vpop.f32.mrb[0].mxu0
      %v3652 = vadd.f32 %v3599, %v3651
      %v3653 = vpop.f32.mrb[0].mxu0
      %v3654 = vadd.f32 %v3601, %v3653
      %v3655 = vpop.f32.mrb[0].mxu0
      %v3656 = vadd.f32 %v3603, %v3655
      %v3657 = vpop.f32.mrb[0].mxu0
      %v3658 = vadd.f32 %v3605, %v3657
      %3659 = vdwg.mxu0
      %3660 = vmatprep.subr.bf16.mxu0 %v2723
      %3661 = vmatpush1.bf16.msra.mxu0 %v2722
      %3662 = vmatprep.subr.bf16.mxu0 %v2727
      %3663 = vmatpush1.bf16.msra.mxu0 %v2726
      %3664 = vmatprep.subr.bf16.mxu0 %v2731
      %3665 = vmatpush1.bf16.msra.mxu0 %v2730
      %3666 = vmatprep.subr.bf16.mxu0 %v2735
      %3667 = vmatpush1.bf16.msra.mxu0 %v2734
      %3668 = vmatprep.subr.bf16.mxu0 %v2739
      %3669 = vmatpush1.bf16.msra.mxu0 %v2738
      %3670 = vmatprep.subr.bf16.mxu0 %v2743
      %3671 = vmatpush1.bf16.msra.mxu0 %v2742
      %3672 = vmatprep.subr.bf16.mxu0 %v2747
      %3673 = vmatpush1.bf16.msra.mxu0 %v2746
      %3674 = vmatprep.subr.bf16.mxu0 %v2751
      %3675 = vmatpush1.bf16.msra.mxu0 %v2750
      %3676 = vmatprep.subr.bf16.mxu0 %v2755
      %3677 = vmatpush1.bf16.msra.mxu0 %v2754
      %3678 = vmatprep.subr.bf16.mxu0 %v2759
      %3679 = vmatpush1.bf16.msra.mxu0 %v2758
      %3680 = vmatprep.subr.bf16.mxu0 %v2763
      %3681 = vmatpush1.bf16.msra.mxu0 %v2762
      %3682 = vmatprep.subr.bf16.mxu0 %v2767
      %3683 = vmatpush1.bf16.msra.mxu0 %v2766
      %3684 = vmatprep.subr.bf16.mxu0 %v2771
      %3685 = vmatpush1.bf16.msra.mxu0 %v2770
      %3686 = vmatprep.subr.bf16.mxu0 %v2775
      %3687 = vmatpush1.bf16.msra.mxu0 %v2774
      %3688 = vmatprep.subr.bf16.mxu0 %v2779
      %3689 = vmatpush1.bf16.msra.mxu0 %v2778
      %3690 = vmatprep.subr.bf16.mxu0 %v2783
      %3691 = vmatpush1.bf16.msra.mxu0 %v2782
      %3692 = vmatprep.mubr.bf16.mxu0 %v627
      %3693 = vmatmul.mubr.bf16.gmra.mrb[0].mxu0 %v626
      %v3694 = vpop.f32.mrb[0].mxu0
      %v3695 = vadd.f32 %v3642, %v3694
      %v3696 = vpop.f32.mrb[0].mxu0
      %v3697 = vadd.f32 %v3644, %v3696
      %v3698 = vpop.f32.mrb[0].mxu0
      %v3699 = vadd.f32 %v3646, %v3698
      %v3700 = vpop.f32.mrb[0].mxu0
      %v3701 = vadd.f32 %v3648, %v3700
      %3702 = vmatprep.mubr.bf16.mxu0 %v642
      %3703 = vmatmul.mubr.bf16.gmra.mrb[0].mxu0 %v641
      %v3704 = vpop.f32.mrb[0].mxu0
      %v3705 = vadd.f32 %v3652, %v3704
      %v3706 = vpop.f32.mrb[0].mxu0
      %v3707 = vadd.f32 %v3654, %v3706
      %v3708 = vpop.f32.mrb[0].mxu0
      %v3709 = vadd.f32 %v3656, %v3708
      %v3710 = vpop.f32.mrb[0].mxu0
      %v3711 = vadd.f32 %v3658, %v3710
      %3712 = vdwg.mxu0
      %3713 = vmatprep.subr.bf16.mxu0 %v2787
      %3714 = vmatpush1.bf16.msra.mxu0 %v2786
      %3715 = vmatprep.subr.bf16.mxu0 %v2791
      %3716 = vmatpush1.bf16.msra.mxu0 %v2790
      %3717 = vmatprep.subr.bf16.mxu0 %v2795
      %3718 = vmatpush1.bf16.msra.mxu0 %v2794
      %3719 = vmatprep.subr.bf16.mxu0 %v2799
      %3720 = vmatpush1.bf16.msra.mxu0 %v2798
      %3721 = vmatprep.subr.bf16.mxu0 %v2803
      %3722 = vmatpush1.bf16.msra.mxu0 %v2802
      %3723 = vmatprep.subr.bf16.mxu0 %v2807
      %3724 = vmatpush1.bf16.msra.mxu0 %v2806
      %3725 = vmatprep.subr.bf16.mxu0 %v2811
      %3726 = vmatpush1.bf16.msra.mxu0 %v2810
      %3727 = vmatprep.subr.bf16.mxu0 %v2815
      %3728 = vmatpush1.bf16.msra.mxu0 %v2814
      %3729 = vmatprep.subr.bf16.mxu0 %v2819
      %3730 = vmatpush1.bf16.msra.mxu0 %v2818
      %3731 = vmatprep.subr.bf16.mxu0 %v2823
      %3732 = vmatpush1.bf16.msra.mxu0 %v2822
      %3733 = vmatprep.subr.bf16.mxu0 %v2827
      %3734 = vmatpush1.bf16.msra.mxu0 %v2826
      %3735 = vmatprep.subr.bf16.mxu0 %v2831
      %3736 = vmatpush1.bf16.msra.mxu0 %v2830
      %3737 = vmatprep.subr.bf16.mxu0 %v2835
      %3738 = vmatpush1.bf16.msra.mxu0 %v2834
      %3739 = vmatprep.subr.bf16.mxu0 %v2839
      %3740 = vmatpush1.bf16.msra.mxu0 %v2838
      %3741 = vmatprep.subr.bf16.mxu0 %v2843
      %3742 = vmatpush1.bf16.msra.mxu0 %v2842
      %3743 = vmatprep.subr.bf16.mxu0 %v2847
      %3744 = vmatpush1.bf16.msra.mxu0 %v2846
      %3745 = vmatprep.mubr.bf16.mxu0 %v629
      %3746 = vmatmul.mubr.bf16.gmra.mrb[0].mxu0 %v628
      %v3747 = vpop.f32.mrb[0].mxu0
      %v3748 = vadd.f32 %v3695, %v3747
      %v3749 = vpop.f32.mrb[0].mxu0
      %v3750 = vadd.f32 %v3697, %v3749
      %v3751 = vpop.f32.mrb[0].mxu0
      %v3752 = vadd.f32 %v3699, %v3751
      %v3753 = vpop.f32.mrb[0].mxu0
      %v3754 = vadd.f32 %v3701, %v3753
      %3755 = vmatprep.mubr.bf16.mxu0 %v644
      %3756 = vmatmul.mubr.bf16.gmra.mrb[0].mxu0 %v643
      %v3757 = vpop.f32.mrb[0].mxu0
      %v3758 = vadd.f32 %v3705, %v3757
      %v3759 = vpop.f32.mrb[0].mxu0
      %v3760 = vadd.f32 %v3707, %v3759
      %v3761 = vpop.f32.mrb[0].mxu0
      %v3762 = vadd.f32 %v3709, %v3761
      %v3763 = vpop.f32.mrb[0].mxu0
      %v3764 = vadd.f32 %v3711, %v3763
      %3765 = vdwg.mxu0
      %3766 = vmatprep.subr.bf16.mxu0 %v2851
      %3767 = vmatpush1.bf16.msra.mxu0 %v2850
      %3768 = vmatprep.subr.bf16.mxu0 %v2855
      %3769 = vmatpush1.bf16.msra.mxu0 %v2854
      %3770 = vmatprep.subr.bf16.mxu0 %v2859
      %3771 = vmatpush1.bf16.msra.mxu0 %v2858
      %3772 = vmatprep.subr.bf16.mxu0 %v2863
      %3773 = vmatpush1.bf16.msra.mxu0 %v2862
      %3774 = vmatprep.subr.bf16.mxu0 %v2867
      %3775 = vmatpush1.bf16.msra.mxu0 %v2866
      %3776 = vmatprep.subr.bf16.mxu0 %v2871
      %3777 = vmatpush1.bf16.msra.mxu0 %v2870
      %3778 = vmatprep.subr.bf16.mxu0 %v2875
      %3779 = vmatpush1.bf16.msra.mxu0 %v2874
      %3780 = vmatprep.subr.bf16.mxu0 %v2879
      %3781 = vmatpush1.bf16.msra.mxu0 %v2878
      %3782 = vmatprep.subr.bf16.mxu0 %v2883
      %3783 = vmatpush1.bf16.msra.mxu0 %v2882
      %3784 = vmatprep.subr.bf16.mxu0 %v2887
      %3785 = vmatpush1.bf16.msra.mxu0 %v2886
      %3786 = vmatprep.subr.bf16.mxu0 %v2891
      %3787 = vmatpush1.bf16.msra.mxu0 %v2890
      %3788 = vmatprep.subr.bf16.mxu0 %v2895
      %3789 = vmatpush1.bf16.msra.mxu0 %v2894
      %3790 = vmatprep.subr.bf16.mxu0 %v2899
      %3791 = vmatpush1.bf16.msra.mxu0 %v2898
      %3792 = vmatprep.subr.bf16.mxu0 %v2903
      %3793 = vmatpush1.bf16.msra.mxu0 %v2902
      %3794 = vmatprep.subr.bf16.mxu0 %v2907
      %3795 = vmatpush1.bf16.msra.mxu0 %v2906
      %3796 = vmatprep.subr.bf16.mxu0 %v2911
      %3797 = vmatpush1.bf16.msra.mxu0 %v2910
      %3798 = vmatprep.mubr.bf16.mxu0 %v631
      %3799 = vmatmul.mubr.bf16.gmra.mrb[0].mxu0 %v630
      %v3800 = vpop.f32.mrb[0].mxu0
      %v3801 = vadd.f32 %v3748, %v3800
      %v3802 = vpop.f32.mrb[0].mxu0
      %v3803 = vadd.f32 %v3750, %v3802
      %v3804 = vpop.f32.mrb[0].mxu0
      %v3805 = vadd.f32 %v3752, %v3804
      %v3806 = vpop.f32.mrb[0].mxu0
      %v3807 = vadd.f32 %v3754, %v3806
      %3808 = vmatprep.mubr.bf16.mxu0 %v646
      %3809 = vmatmul.mubr.bf16.gmra.mrb[0].mxu0 %v645
      %v3810 = vpop.f32.mrb[0].mxu0
      %v3811 = vadd.f32 %v3758, %v3810
      %v3812 = vpop.f32.mrb[0].mxu0
      %v3813 = vadd.f32 %v3760, %v3812
      %v3814 = vpop.f32.mrb[0].mxu0
      %v3815 = vadd.f32 %v3762, %v3814
      %v3816 = vpop.f32.mrb[0].mxu0
      %v3817 = vadd.f32 %v3764, %v3816
      %3818 = vdwg.mxu0
      %3819 = vmatprep.subr.bf16.mxu0 %v2915
      %3820 = vmatpush1.bf16.msra.mxu0 %v2914
      %3821 = vmatprep.subr.bf16.mxu0 %v2919
      %3822 = vmatpush1.bf16.msra.mxu0 %v2918
      %3823 = vmatprep.subr.bf16.mxu0 %v2923
      %3824 = vmatpush1.bf16.msra.mxu0 %v2922
      %3825 = vmatprep.subr.bf16.mxu0 %v2927
      %3826 = vmatpush1.bf16.msra.mxu0 %v2926
      %3827 = vmatprep.subr.bf16.mxu0 %v2931
      %3828 = vmatpush1.bf16.msra.mxu0 %v2930
      %3829 = vmatprep.subr.bf16.mxu0 %v2935
      %3830 = vmatpush1.bf16.msra.mxu0 %v2934
      %3831 = vmatprep.subr.bf16.mxu0 %v2939
      %3832 = vmatpush1.bf16.msra.mxu0 %v2938
      %3833 = vmatprep.subr.bf16.mxu0 %v2943
      %3834 = vmatpush1.bf16.msra.mxu0 %v2942
      %3835 = vmatprep.subr.bf16.mxu0 %v2947
      %3836 = vmatpush1.bf16.msra.mxu0 %v2946
      %3837 = vmatprep.subr.bf16.mxu0 %v2951
      %3838 = vmatpush1.bf16.msra.mxu0 %v2950
      %3839 = vmatprep.subr.bf16.mxu0 %v2955
      %3840 = vmatpush1.bf16.msra.mxu0 %v2954
      %3841 = vmatprep.subr.bf16.mxu0 %v2959
      %3842 = vmatpush1.bf16.msra.mxu0 %v2958
      %3843 = vmatprep.subr.bf16.mxu0 %v2963
      %3844 = vmatpush1.bf16.msra.mxu0 %v2962
      %3845 = vmatprep.subr.bf16.mxu0 %v2967
      %3846 = vmatpush1.bf16.msra.mxu0 %v2966
      %3847 = vmatprep.subr.bf16.mxu0 %v2971
      %3848 = vmatpush1.bf16.msra.mxu0 %v2970
      %3849 = vmatprep.subr.bf16.mxu0 %v2975
      %3850 = vmatpush1.bf16.msra.mxu0 %v2974
      %3851 = vmatprep.mubr.bf16.mxu0 %v633
      %3852 = vmatmul.mubr.bf16.gmra.mrb[0].mxu0 %v632
      %v3853 = vpop.f32.mrb[0].mxu0
      %v3854 = vadd.f32 %v3801, %v3853
      %v3855 = vpop.f32.mrb[0].mxu0
      %v3856 = vadd.f32 %v3803, %v3855
      %v3857 = vpop.f32.mrb[0].mxu0
      %v3858 = vadd.f32 %v3805, %v3857
      %v3859 = vpop.f32.mrb[0].mxu0
      %v3860 = vadd.f32 %v3807, %v3859
      %3861 = vmatprep.mubr.bf16.mxu0 %v648
      %3862 = vmatmul.mubr.bf16.gmra.mrb[0].mxu0 %v647
      %v3863 = vpop.f32.mrb[0].mxu0
      %v3864 = vadd.f32 %v3811, %v3863
      %v3865 = vpop.f32.mrb[0].mxu0
      %v3866 = vadd.f32 %v3813, %v3865
      %v3867 = vpop.f32.mrb[0].mxu0
      %v3868 = vadd.f32 %v3815, %v3867
      %v3869 = vpop.f32.mrb[0].mxu0
      %v3870 = vadd.f32 %v3817, %v3869
      %3871 = vdwg.mxu0
      %3872 = vmatprep.subr.bf16.mxu0 %v2979
      %3873 = vmatpush1.bf16.msra.mxu0 %v2978
      %3874 = vmatprep.subr.bf16.mxu0 %v2983
      %3875 = vmatpush1.bf16.msra.mxu0 %v2982
      %3876 = vmatprep.subr.bf16.mxu0 %v2987
      %3877 = vmatpush1.bf16.msra.mxu0 %v2986
      %3878 = vmatprep.subr.bf16.mxu0 %v2991
      %3879 = vmatpush1.bf16.msra.mxu0 %v2990
      %3880 = vmatprep.subr.bf16.mxu0 %v2995
      %3881 = vmatpush1.bf16.msra.mxu0 %v2994
      %3882 = vmatprep.subr.bf16.mxu0 %v2999
      %3883 = vmatpush1.bf16.msra.mxu0 %v2998
      %3884 = vmatprep.subr.bf16.mxu0 %v3003
      %3885 = vmatpush1.bf16.msra.mxu0 %v3002
      %3886 = vmatprep.subr.bf16.mxu0 %v3007
      %3887 = vmatpush1.bf16.msra.mxu0 %v3006
      %3888 = vmatprep.subr.bf16.mxu0 %v3011
      %3889 = vmatpush1.bf16.msra.mxu0 %v3010
      %3890 = vmatprep.subr.bf16.mxu0 %v3015
      %3891 = vmatpush1.bf16.msra.mxu0 %v3014
      %3892 = vmatprep.subr.bf16.mxu0 %v3019
      %3893 = vmatpush1.bf16.msra.mxu0 %v3018
      %3894 = vmatprep.subr.bf16.mxu0 %v3023
      %3895 = vmatpush1.bf16.msra.mxu0 %v3022
      %3896 = vmatprep.subr.bf16.mxu0 %v3027
      %3897 = vmatpush1.bf16.msra.mxu0 %v3026
      %3898 = vmatprep.subr.bf16.mxu0 %v3031
      %3899 = vmatpush1.bf16.msra.mxu0 %v3030
      %3900 = vmatprep.subr.bf16.mxu0 %v3035
      %3901 = vmatpush1.bf16.msra.mxu0 %v3034
      %3902 = vmatprep.subr.bf16.mxu0 %v3039
      %3903 = vmatpush1.bf16.msra.mxu0 %v3038
      %3904 = vmatprep.mubr.bf16.mxu0 %v635
      %3905 = vmatmul.mubr.bf16.gmra.mrb[0].mxu0 %v634
      %v3906 = vpop.f32.mrb[0].mxu0
      %v3907 = vadd.f32 %v3854, %v3906
      %v3908 = vpop.f32.mrb[0].mxu0
      %v3909 = vadd.f32 %v3856, %v3908
      %v3910 = vpop.f32.mrb[0].mxu0
      %v3911 = vadd.f32 %v3858, %v3910
      %v3912 = vpop.f32.mrb[0].mxu0
      %v3913 = vadd.f32 %v3860, %v3912
      %3914 = vmatprep.mubr.bf16.mxu0 %v650
      %3915 = vmatmul.mubr.bf16.gmra.mrb[0].mxu0 %v649
      %v3916 = vpop.f32.mrb[0].mxu0
      %v3917 = vadd.f32 %v3864, %v3916
      %v3918 = vpop.f32.mrb[0].mxu0
      %v3919 = vadd.f32 %v3866, %v3918
      %v3920 = vpop.f32.mrb[0].mxu0
      %v3921 = vadd.f32 %v3868, %v3920
      %v3922 = vpop.f32.mrb[0].mxu0
      %v3923 = vadd.f32 %v3870, %v3922
      %3924 = vdwg.mxu0
      %3925 = vmatprep.subr.bf16.mxu0 %v3043
      %3926 = vmatpush1.bf16.msra.mxu0 %v3042
      %3927 = vmatprep.subr.bf16.mxu0 %v3047
      %3928 = vmatpush1.bf16.msra.mxu0 %v3046
      %3929 = vmatprep.subr.bf16.mxu0 %v3051
      %3930 = vmatpush1.bf16.msra.mxu0 %v3050
      %3931 = vmatprep.subr.bf16.mxu0 %v3055
      %3932 = vmatpush1.bf16.msra.mxu0 %v3054
      %3933 = vmatprep.subr.bf16.mxu0 %v3059
      %3934 = vmatpush1.bf16.msra.mxu0 %v3058
      %3935 = vmatprep.subr.bf16.mxu0 %v3063
      %3936 = vmatpush1.bf16.msra.mxu0 %v3062
      %3937 = vmatprep.subr.bf16.mxu0 %v3067
      %3938 = vmatpush1.bf16.msra.mxu0 %v3066
      %3939 = vmatprep.subr.bf16.mxu0 %v3071
      %3940 = vmatpush1.bf16.msra.mxu0 %v3070
      %3941 = vmatprep.subr.bf16.mxu0 0
      %3942 = vmatpush1.bf16.msra.mxu0 0
      %3943 = vmatprep.subr.bf16.mxu0 0
      %3944 = vmatpush1.bf16.msra.mxu0 0
      %3945 = vmatprep.subr.bf16.mxu0 0
      %3946 = vmatpush1.bf16.msra.mxu0 0
      %3947 = vmatprep.subr.bf16.mxu0 0
      %3948 = vmatpush1.bf16.msra.mxu0 0
      %3949 = vmatprep.subr.bf16.mxu0 0
      %3950 = vmatpush1.bf16.msra.mxu0 0
      %3951 = vmatprep.subr.bf16.mxu0 0
      %3952 = vmatpush1.bf16.msra.mxu0 0
      %3953 = vmatprep.subr.bf16.mxu0 0
      %3954 = vmatpush1.bf16.msra.mxu0 0
      %3955 = vmatprep.subr.bf16.mxu0 0
      %3956 = vmatpush1.bf16.msra.mxu0 0
      %3957 = vmatprep.mubr.bf16.mxu0 0
      %3958 = vmatmul.mubr.bf16.gmra.mrb[0].mxu0 %v636
      %v3959 = vpop.f32.mrb[0].mxu0
      %v3960 = vadd.f32 %v3907, %v3959
      %v3961 = vpop.f32.mrb[0].mxu0
      %v3962 = vadd.f32 %v3909, %v3961
      %v3963 = vpop.f32.mrb[0].mxu0
      %v3964 = vadd.f32 %v3911, %v3963
      %v3965 = vpop.f32.mrb[0].mxu0
      %v3966 = vadd.f32 %v3913, %v3965
      %3967 = vmatprep.mubr.bf16.mxu0 0
      %3968 = vmatmul.mubr.bf16.gmra.mrb[0].mxu0 %v651
      %v3969 = vpop.f32.mrb[0].mxu0
      %v3970 = vadd.f32 %v3917, %v3969
      %v3971 = vpop.f32.mrb[0].mxu0
      %v3972 = vadd.f32 %v3919, %v3971
      %v3973 = vpop.f32.mrb[0].mxu0
      %v3974 = vadd.f32 %v3921, %v3973
      %v3975 = vpop.f32.mrb[0].mxu0
      %v3976 = vadd.f32 %v3923, %v3975
      %3977 = vdwg.mxu0
      %3978 = vmatprep.subr.bf16.mxu0 %v2597
      %3979 = vmatpush1.bf16.msra.mxu0 %v2596
      %3980 = vmatprep.subr.bf16.mxu0 %v2601
      %3981 = vmatpush1.bf16.msra.mxu0 %v2600
      %3982 = vmatprep.subr.bf16.mxu0 %v2605
      %3983 = vmatpush1.bf16.msra.mxu0 %v2604
      %3984 = vmatprep.subr.bf16.mxu0 %v2609
      %3985 = vmatpush1.bf16.msra.mxu0 %v2608
      %3986 = vmatprep.subr.bf16.mxu0 %v2613
      %3987 = vmatpush1.bf16.msra.mxu0 %v2612
      %3988 = vmatprep.subr.bf16.mxu0 %v2617
      %3989 = vmatpush1.bf16.msra.mxu0 %v2616
      %3990 = vmatprep.subr.bf16.mxu0 %v2621
      %3991 = vmatpush1.bf16.msra.mxu0 %v2620
      %3992 = vmatprep.subr.bf16.mxu0 %v2625
      %3993 = vmatpush1.bf16.msra.mxu0 %v2624
      %3994 = vmatprep.subr.bf16.mxu0 %v2629
      %3995 = vmatpush1.bf16.msra.mxu0 %v2628
      %3996 = vmatprep.subr.bf16.mxu0 %v2633
      %3997 = vmatpush1.bf16.msra.mxu0 %v2632
      %3998 = vmatprep.subr.bf16.mxu0 %v2637
      %3999 = vmatpush1.bf16.msra.mxu0 %v2636
      %4000 = vmatprep.subr.bf16.mxu0 %v2641
      %4001 = vmatpush1.bf16.msra.mxu0 %v2640
      %4002 = vmatprep.subr.bf16.mxu0 %v2645
      %4003 = vmatpush1.bf16.msra.mxu0 %v2644
      %4004 = vmatprep.subr.bf16.mxu0 %v2649
      %4005 = vmatpush1.bf16.msra.mxu0 %v2648
      %4006 = vmatprep.subr.bf16.mxu0 %v2653
      %4007 = vmatpush1.bf16.msra.mxu0 %v2652
      %4008 = vmatprep.subr.bf16.mxu0 %v2657
      %4009 = vmatpush1.bf16.msra.mxu0 %v2656
      %4010 = vmatprep.mubr.bf16.mxu0 %v623
      %4011 = vmatmul.mubr.bf16.gmra.mrb[0].mxu0 %v622
      %v4012 = vpop.f32.mrb[0].mxu0
      %v4013 = vadd.f32 %v1145, %v4012
      %v4014 = vpop.f32.mrb[0].mxu0
      %v4015 = vadd.f32 %v1149, %v4014
      %v4016 = vpop.f32.mrb[0].mxu0
      %v4017 = vadd.f32 %v1145, %v4016
      %v4018 = vpop.f32.mrb[0].mxu0
      %v4019 = vadd.f32 %v1149, %v4018
      %4020 = vmatprep.mubr.bf16.mxu0 %v638
      %4021 = vmatmul.mubr.bf16.gmra.mrb[0].mxu0 %v637
      %v4022 = vpop.f32.mrb[0].mxu0
      %v4023 = vadd.f32 %v1145, %v4022
      %v4024 = vpop.f32.mrb[0].mxu0
      %v4025 = vadd.f32 %v1149, %v4024
      %v4026 = vpop.f32.mrb[0].mxu0
      %v4027 = vadd.f32 %v1145, %v4026
      %v4028 = vpop.f32.mrb[0].mxu0
      %v4029 = vadd.f32 %v1149, %v4028
      %4030 = vdwg.mxu0
      %4031 = vmatprep.subr.bf16.mxu0 %v2661
      %4032 = vmatpush1.bf16.msra.mxu0 %v2660
      %4033 = vmatprep.subr.bf16.mxu0 %v2665
      %4034 = vmatpush1.bf16.msra.mxu0 %v2664
      %4035 = vmatprep.subr.bf16.mxu0 %v2669
      %4036 = vmatpush1.bf16.msra.mxu0 %v2668
      %4037 = vmatprep.subr.bf16.mxu0 %v2673
      %4038 = vmatpush1.bf16.msra.mxu0 %v2672
      %4039 = vmatprep.subr.bf16.mxu0 %v2677
      %4040 = vmatpush1.bf16.msra.mxu0 %v2676
      %4041 = vmatprep.subr.bf16.mxu0 %v2681
      %4042 = vmatpush1.bf16.msra.mxu0 %v2680
      %4043 = vmatprep.subr.bf16.mxu0 %v2685
      %4044 = vmatpush1.bf16.msra.mxu0 %v2684
      %4045 = vmatprep.subr.bf16.mxu0 %v2689
      %4046 = vmatpush1.bf16.msra.mxu0 %v2688
      %4047 = vmatprep.subr.bf16.mxu0 %v2693
      %4048 = vmatpush1.bf16.msra.mxu0 %v2692
      %4049 = vmatprep.subr.bf16.mxu0 %v2697
      %4050 = vmatpush1.bf16.msra.mxu0 %v2696
      %4051 = vmatprep.subr.bf16.mxu0 %v2701
      %4052 = vmatpush1.bf16.msra.mxu0 %v2700
      %4053 = vmatprep.subr.bf16.mxu0 %v2705
      %4054 = vmatpush1.bf16.msra.mxu0 %v2704
      %4055 = vmatprep.subr.bf16.mxu0 %v2709
      %4056 = vmatpush1.bf16.msra.mxu0 %v2708
      %4057 = vmatprep.subr.bf16.mxu0 %v2713
      %4058 = vmatpush1.bf16.msra.mxu0 %v2712
      %4059 = vmatprep.subr.bf16.mxu0 %v2717
      %4060 = vmatpush1.bf16.msra.mxu0 %v2716
      %4061 = vmatprep.subr.bf16.mxu0 %v2721
      %4062 = vmatpush1.bf16.msra.mxu0 %v2720
      %4063 = vmatprep.mubr.bf16.mxu0 %v625
      %4064 = vmatmul.mubr.bf16.gmra.mrb[0].mxu0 %v624
      %v4065 = vpop.f32.mrb[0].mxu0
      %v4066 = vadd.f32 %v4013, %v4065
      %v4067 = vpop.f32.mrb[0].mxu0
      %v4068 = vadd.f32 %v4015, %v4067
      %v4069 = vpop.f32.mrb[0].mxu0
      %v4070 = vadd.f32 %v4017, %v4069
      %v4071 = vpop.f32.mrb[0].mxu0
      %v4072 = vadd.f32 %v4019, %v4071
      %4073 = vmatprep.mubr.bf16.mxu0 %v640
      %4074 = vmatmul.mubr.bf16.gmra.mrb[0].mxu0 %v639
      %v4075 = vpop.f32.mrb[0].mxu0
      %v4076 = vadd.f32 %v4023, %v4075
      %v4077 = vpop.f32.mrb[0].mxu0
      %v4078 = vadd.f32 %v4025, %v4077
      %v4079 = vpop.f32.mrb[0].mxu0
      %v4080 = vadd.f32 %v4027, %v4079
      %v4081 = vpop.f32.mrb[0].mxu0
      %v4082 = vadd.f32 %v4029, %v4081
      %4083 = vdwg.mxu0
      %4084 = vmatprep.subr.bf16.mxu0 %v2725
      %4085 = vmatpush1.bf16.msra.mxu0 %v2724
      %4086 = vmatprep.subr.bf16.mxu0 %v2729
      %4087 = vmatpush1.bf16.msra.mxu0 %v2728
      %4088 = vmatprep.subr.bf16.mxu0 %v2733
      %4089 = vmatpush1.bf16.msra.mxu0 %v2732
      %4090 = vmatprep.subr.bf16.mxu0 %v2737
      %4091 = vmatpush1.bf16.msra.mxu0 %v2736
      %4092 = vmatprep.subr.bf16.mxu0 %v2741
      %4093 = vmatpush1.bf16.msra.mxu0 %v2740
      %4094 = vmatprep.subr.bf16.mxu0 %v2745
      %4095 = vmatpush1.bf16.msra.mxu0 %v2744
      %4096 = vmatprep.subr.bf16.mxu0 %v2749
      %4097 = vmatpush1.bf16.msra.mxu0 %v2748
      %4098 = vmatprep.subr.bf16.mxu0 %v2753
      %4099 = vmatpush1.bf16.msra.mxu0 %v2752
      %4100 = vmatprep.subr.bf16.mxu0 %v2757
      %4101 = vmatpush1.bf16.msra.mxu0 %v2756
      %4102 = vmatprep.subr.bf16.mxu0 %v2761
      %4103 = vmatpush1.bf16.msra.mxu0 %v2760
      %4104 = vmatprep.subr.bf16.mxu0 %v2765
      %4105 = vmatpush1.bf16.msra.mxu0 %v2764
      %4106 = vmatprep.subr.bf16.mxu0 %v2769
      %4107 = vmatpush1.bf16.msra.mxu0 %v2768
      %4108 = vmatprep.subr.bf16.mxu0 %v2773
      %4109 = vmatpush1.bf16.msra.mxu0 %v2772
      %4110 = vmatprep.subr.bf16.mxu0 %v2777
      %4111 = vmatpush1.bf16.msra.mxu0 %v2776
      %4112 = vmatprep.subr.bf16.mxu0 %v2781
      %4113 = vmatpush1.bf16.msra.mxu0 %v2780
      %4114 = vmatprep.subr.bf16.mxu0 %v2785
      %4115 = vmatpush1.bf16.msra.mxu0 %v2784
      %4116 = vmatprep.mubr.bf16.mxu0 %v627
      %4117 = vmatmul.mubr.bf16.gmra.mrb[0].mxu0 %v626
      %v4118 = vpop.f32.mrb[0].mxu0
      %v4119 = vadd.f32 %v4066, %v4118
      %v4120 = vpop.f32.mrb[0].mxu0
      %v4121 = vadd.f32 %v4068, %v4120
      %v4122 = vpop.f32.mrb[0].mxu0
      %v4123 = vadd.f32 %v4070, %v4122
      %v4124 = vpop.f32.mrb[0].mxu0
      %v4125 = vadd.f32 %v4072, %v4124
      %4126 = vmatprep.mubr.bf16.mxu0 %v642
      %4127 = vmatmul.mubr.bf16.gmra.mrb[0].mxu0 %v641
      %v4128 = vpop.f32.mrb[0].mxu0
      %v4129 = vadd.f32 %v4076, %v4128
      %v4130 = vpop.f32.mrb[0].mxu0
      %v4131 = vadd.f32 %v4078, %v4130
      %v4132 = vpop.f32.mrb[0].mxu0
      %v4133 = vadd.f32 %v4080, %v4132
      %v4134 = vpop.f32.mrb[0].mxu0
      %v4135 = vadd.f32 %v4082, %v4134
      %4136 = vdwg.mxu0
      %4137 = vmatprep.subr.bf16.mxu0 %v2789
      %4138 = vmatpush1.bf16.msra.mxu0 %v2788
      %4139 = vmatprep.subr.bf16.mxu0 %v2793
      %4140 = vmatpush1.bf16.msra.mxu0 %v2792
      %4141 = vmatprep.subr.bf16.mxu0 %v2797
      %4142 = vmatpush1.bf16.msra.mxu0 %v2796
      %4143 = vmatprep.subr.bf16.mxu0 %v2801
      %4144 = vmatpush1.bf16.msra.mxu0 %v2800
      %4145 = vmatprep.subr.bf16.mxu0 %v2805
      %4146 = vmatpush1.bf16.msra.mxu0 %v2804
      %4147 = vmatprep.subr.bf16.mxu0 %v2809
      %4148 = vmatpush1.bf16.msra.mxu0 %v2808
      %4149 = vmatprep.subr.bf16.mxu0 %v2813
      %4150 = vmatpush1.bf16.msra.mxu0 %v2812
      %4151 = vmatprep.subr.bf16.mxu0 %v2817
      %4152 = vmatpush1.bf16.msra.mxu0 %v2816
      %4153 = vmatprep.subr.bf16.mxu0 %v2821
      %4154 = vmatpush1.bf16.msra.mxu0 %v2820
      %4155 = vmatprep.subr.bf16.mxu0 %v2825
      %4156 = vmatpush1.bf16.msra.mxu0 %v2824
      %4157 = vmatprep.subr.bf16.mxu0 %v2829
      %4158 = vmatpush1.bf16.msra.mxu0 %v2828
      %4159 = vmatprep.subr.bf16.mxu0 %v2833
      %4160 = vmatpush1.bf16.msra.mxu0 %v2832
      %4161 = vmatprep.subr.bf16.mxu0 %v2837
      %4162 = vmatpush1.bf16.msra.mxu0 %v2836
      %4163 = vmatprep.subr.bf16.mxu0 %v2841
      %4164 = vmatpush1.bf16.msra.mxu0 %v2840
      %4165 = vmatprep.subr.bf16.mxu0 %v2845
      %4166 = vmatpush1.bf16.msra.mxu0 %v2844
      %4167 = vmatprep.subr.bf16.mxu0 %v2849
      %4168 = vmatpush1.bf16.msra.mxu0 %v2848
      %4169 = vmatprep.mubr.bf16.mxu0 %v629
      %4170 = vmatmul.mubr.bf16.gmra.mrb[0].mxu0 %v628
      %v4171 = vpop.f32.mrb[0].mxu0
      %v4172 = vadd.f32 %v4119, %v4171
      %v4173 = vpop.f32.mrb[0].mxu0
      %v4174 = vadd.f32 %v4121, %v4173
      %v4175 = vpop.f32.mrb[0].mxu0
      %v4176 = vadd.f32 %v4123, %v4175
      %v4177 = vpop.f32.mrb[0].mxu0
      %v4178 = vadd.f32 %v4125, %v4177
      %4179 = vmatprep.mubr.bf16.mxu0 %v644
      %4180 = vmatmul.mubr.bf16.gmra.mrb[0].mxu0 %v643
      %v4181 = vpop.f32.mrb[0].mxu0
      %v4182 = vadd.f32 %v4129, %v4181
      %v4183 = vpop.f32.mrb[0].mxu0
      %v4184 = vadd.f32 %v4131, %v4183
      %v4185 = vpop.f32.mrb[0].mxu0
      %v4186 = vadd.f32 %v4133, %v4185
      %v4187 = vpop.f32.mrb[0].mxu0
      %v4188 = vadd.f32 %v4135, %v4187
      %4189 = vdwg.mxu0
      %4190 = vmatprep.subr.bf16.mxu0 %v2853
      %4191 = vmatpush1.bf16.msra.mxu0 %v2852
      %4192 = vmatprep.subr.bf16.mxu0 %v2857
      %4193 = vmatpush1.bf16.msra.mxu0 %v2856
      %4194 = vmatprep.subr.bf16.mxu0 %v2861
      %4195 = vmatpush1.bf16.msra.mxu0 %v2860
      %4196 = vmatprep.subr.bf16.mxu0 %v2865
      %4197 = vmatpush1.bf16.msra.mxu0 %v2864
      %4198 = vmatprep.subr.bf16.mxu0 %v2869
      %4199 = vmatpush1.bf16.msra.mxu0 %v2868
      %4200 = vmatprep.subr.bf16.mxu0 %v2873
      %4201 = vmatpush1.bf16.msra.mxu0 %v2872
      %4202 = vmatprep.subr.bf16.mxu0 %v2877
      %4203 = vmatpush1.bf16.msra.mxu0 %v2876
      %4204 = vmatprep.subr.bf16.mxu0 %v2881
      %4205 = vmatpush1.bf16.msra.mxu0 %v2880
      %4206 = vmatprep.subr.bf16.mxu0 %v2885
      %4207 = vmatpush1.bf16.msra.mxu0 %v2884
      %4208 = vmatprep.subr.bf16.mxu0 %v2889
      %4209 = vmatpush1.bf16.msra.mxu0 %v2888
      %4210 = vmatprep.subr.bf16.mxu0 %v2893
      %4211 = vmatpush1.bf16.msra.mxu0 %v2892
      %4212 = vmatprep.subr.bf16.mxu0 %v2897
      %4213 = vmatpush1.bf16.msra.mxu0 %v2896
      %4214 = vmatprep.subr.bf16.mxu0 %v2901
      %4215 = vmatpush1.bf16.msra.mxu0 %v2900
      %4216 = vmatprep.subr.bf16.mxu0 %v2905
      %4217 = vmatpush1.bf16.msra.mxu0 %v2904
      %4218 = vmatprep.subr.bf16.mxu0 %v2909
      %4219 = vmatpush1.bf16.msra.mxu0 %v2908
      %4220 = vmatprep.subr.bf16.mxu0 %v2913
      %4221 = vmatpush1.bf16.msra.mxu0 %v2912
      %4222 = vmatprep.mubr.bf16.mxu0 %v631
      %4223 = vmatmul.mubr.bf16.gmra.mrb[0].mxu0 %v630
      %v4224 = vpop.f32.mrb[0].mxu0
      %v4225 = vadd.f32 %v4172, %v4224
      %v4226 = vpop.f32.mrb[0].mxu0
      %v4227 = vadd.f32 %v4174, %v4226
      %v4228 = vpop.f32.mrb[0].mxu0
      %v4229 = vadd.f32 %v4176, %v4228
      %v4230 = vpop.f32.mrb[0].mxu0
      %v4231 = vadd.f32 %v4178, %v4230
      %4232 = vmatprep.mubr.bf16.mxu0 %v646
      %4233 = vmatmul.mubr.bf16.gmra.mrb[0].mxu0 %v645
      %v4234 = vpop.f32.mrb[0].mxu0
      %v4235 = vadd.f32 %v4182, %v4234
      %v4236 = vpop.f32.mrb[0].mxu0
      %v4237 = vadd.f32 %v4184, %v4236
      %v4238 = vpop.f32.mrb[0].mxu0
      %v4239 = vadd.f32 %v4186, %v4238
      %v4240 = vpop.f32.mrb[0].mxu0
      %v4241 = vadd.f32 %v4188, %v4240
      %4242 = vdwg.mxu0
      %4243 = vmatprep.subr.bf16.mxu0 %v2917
      %4244 = vmatpush1.bf16.msra.mxu0 %v2916
      %4245 = vmatprep.subr.bf16.mxu0 %v2921
      %4246 = vmatpush1.bf16.msra.mxu0 %v2920
      %4247 = vmatprep.subr.bf16.mxu0 %v2925
      %4248 = vmatpush1.bf16.msra.mxu0 %v2924
      %4249 = vmatprep.subr.bf16.mxu0 %v2929
      %4250 = vmatpush1.bf16.msra.mxu0 %v2928
      %4251 = vmatprep.subr.bf16.mxu0 %v2933
      %4252 = vmatpush1.bf16.msra.mxu0 %v2932
      %4253 = vmatprep.subr.bf16.mxu0 %v2937
      %4254 = vmatpush1.bf16.msra.mxu0 %v2936
      %4255 = vmatprep.subr.bf16.mxu0 %v2941
      %4256 = vmatpush1.bf16.msra.mxu0 %v2940
      %4257 = vmatprep.subr.bf16.mxu0 %v2945
      %4258 = vmatpush1.bf16.msra.mxu0 %v2944
      %4259 = vmatprep.subr.bf16.mxu0 %v2949
      %4260 = vmatpush1.bf16.msra.mxu0 %v2948
      %4261 = vmatprep.subr.bf16.mxu0 %v2953
      %4262 = vmatpush1.bf16.msra.mxu0 %v2952
      %4263 = vmatprep.subr.bf16.mxu0 %v2957
      %4264 = vmatpush1.bf16.msra.mxu0 %v2956
      %4265 = vmatprep.subr.bf16.mxu0 %v2961
      %4266 = vmatpush1.bf16.msra.mxu0 %v2960
      %4267 = vmatprep.subr.bf16.mxu0 %v2965
      %4268 = vmatpush1.bf16.msra.mxu0 %v2964
      %4269 = vmatprep.subr.bf16.mxu0 %v2969
      %4270 = vmatpush1.bf16.msra.mxu0 %v2968
      %4271 = vmatprep.subr.bf16.mxu0 %v2973
      %4272 = vmatpush1.bf16.msra.mxu0 %v2972
      %4273 = vmatprep.subr.bf16.mxu0 %v2977
      %4274 = vmatpush1.bf16.msra.mxu0 %v2976
      %4275 = vmatprep.mubr.bf16.mxu0 %v633
      %4276 = vmatmul.mubr.bf16.gmra.mrb[0].mxu0 %v632
      %v4277 = vpop.f32.mrb[0].mxu0
      %v4278 = vadd.f32 %v4225, %v4277
      %v4279 = vpop.f32.mrb[0].mxu0
      %v4280 = vadd.f32 %v4227, %v4279
      %v4281 = vpop.f32.mrb[0].mxu0
      %v4282 = vadd.f32 %v4229, %v4281
      %v4283 = vpop.f32.mrb[0].mxu0
      %v4284 = vadd.f32 %v4231, %v4283
      %4285 = vmatprep.mubr.bf16.mxu0 %v648
      %4286 = vmatmul.mubr.bf16.gmra.mrb[0].mxu0 %v647
      %v4287 = vpop.f32.mrb[0].mxu0
      %v4288 = vadd.f32 %v4235, %v4287
      %v4289 = vpop.f32.mrb[0].mxu0
      %v4290 = vadd.f32 %v4237, %v4289
      %v4291 = vpop.f32.mrb[0].mxu0
      %v4292 = vadd.f32 %v4239, %v4291
      %v4293 = vpop.f32.mrb[0].mxu0
      %v4294 = vadd.f32 %v4241, %v4293
      %4295 = vdwg.mxu0
      %4296 = vmatprep.subr.bf16.mxu0 %v2981
      %4297 = vmatpush1.bf16.msra.mxu0 %v2980
      %4298 = vmatprep.subr.bf16.mxu0 %v2985
      %4299 = vmatpush1.bf16.msra.mxu0 %v2984
      %4300 = vmatprep.subr.bf16.mxu0 %v2989
      %4301 = vmatpush1.bf16.msra.mxu0 %v2988
      %4302 = vmatprep.subr.bf16.mxu0 %v2993
      %4303 = vmatpush1.bf16.msra.mxu0 %v2992
      %4304 = vmatprep.subr.bf16.mxu0 %v2997
      %4305 = vmatpush1.bf16.msra.mxu0 %v2996
      %4306 = vmatprep.subr.bf16.mxu0 %v3001
      %4307 = vmatpush1.bf16.msra.mxu0 %v3000
      %4308 = vmatprep.subr.bf16.mxu0 %v3005
      %4309 = vmatpush1.bf16.msra.mxu0 %v3004
      %4310 = vmatprep.subr.bf16.mxu0 %v3009
      %4311 = vmatpush1.bf16.msra.mxu0 %v3008
      %4312 = vmatprep.subr.bf16.mxu0 %v3013
      %4313 = vmatpush1.bf16.msra.mxu0 %v3012
      %4314 = vmatprep.subr.bf16.mxu0 %v3017
      %4315 = vmatpush1.bf16.msra.mxu0 %v3016
      %4316 = vmatprep.subr.bf16.mxu0 %v3021
      %4317 = vmatpush1.bf16.msra.mxu0 %v3020
      %4318 = vmatprep.subr.bf16.mxu0 %v3025
      %4319 = vmatpush1.bf16.msra.mxu0 %v3024
      %4320 = vmatprep.subr.bf16.mxu0 %v3029
      %4321 = vmatpush1.bf16.msra.mxu0 %v3028
      %4322 = vmatprep.subr.bf16.mxu0 %v3033
      %4323 = vmatpush1.bf16.msra.mxu0 %v3032
      %4324 = vmatprep.subr.bf16.mxu0 %v3037
      %4325 = vmatpush1.bf16.msra.mxu0 %v3036
      %4326 = vmatprep.subr.bf16.mxu0 %v3041
      %4327 = vmatpush1.bf16.msra.mxu0 %v3040
      %4328 = vmatprep.mubr.bf16.mxu0 %v635
      %4329 = vmatmul.mubr.bf16.gmra.mrb[0].mxu0 %v634
      %v4330 = vpop.f32.mrb[0].mxu0
      %v4331 = vadd.f32 %v4278, %v4330
      %v4332 = vpop.f32.mrb[0].mxu0
      %v4333 = vadd.f32 %v4280, %v4332
      %v4334 = vpop.f32.mrb[0].mxu0
      %v4335 = vadd.f32 %v4282, %v4334
      %v4336 = vpop.f32.mrb[0].mxu0
      %v4337 = vadd.f32 %v4284, %v4336
      %4338 = vmatprep.mubr.bf16.mxu0 %v650
      %4339 = vmatmul.mubr.bf16.gmra.mrb[0].mxu0 %v649
      %v4340 = vpop.f32.mrb[0].mxu0
      %v4341 = vadd.f32 %v4288, %v4340
      %v4342 = vpop.f32.mrb[0].mxu0
      %v4343 = vadd.f32 %v4290, %v4342
      %v4344 = vpop.f32.mrb[0].mxu0
      %v4345 = vadd.f32 %v4292, %v4344
      %v4346 = vpop.f32.mrb[0].mxu0
      %v4347 = vadd.f32 %v4294, %v4346
      %4348 = vdwg.mxu0
      %4349 = vmatprep.subr.bf16.mxu0 %v3045
      %4350 = vmatpush1.bf16.msra.mxu0 %v3044
      %4351 = vmatprep.subr.bf16.mxu0 %v3049
      %4352 = vmatpush1.bf16.msra.mxu0 %v3048
      %4353 = vmatprep.subr.bf16.mxu0 %v3053
      %4354 = vmatpush1.bf16.msra.mxu0 %v3052
      %4355 = vmatprep.subr.bf16.mxu0 %v3057
      %4356 = vmatpush1.bf16.msra.mxu0 %v3056
      %4357 = vmatprep.subr.bf16.mxu0 %v3061
      %4358 = vmatpush1.bf16.msra.mxu0 %v3060
      %4359 = vmatprep.subr.bf16.mxu0 %v3065
      %4360 = vmatpush1.bf16.msra.mxu0 %v3064
      %4361 = vmatprep.subr.bf16.mxu0 %v3069
      %4362 = vmatpush1.bf16.msra.mxu0 %v3068
      %4363 = vmatprep.subr.bf16.mxu0 %v3073
      %4364 = vmatpush1.bf16.msra.mxu0 %v3072
      %4365 = vmatprep.subr.bf16.mxu0 0
      %4366 = vmatpush1.bf16.msra.mxu0 0
      %4367 = vmatprep.subr.bf16.mxu0 0
      %4368 = vmatpush1.bf16.msra.mxu0 0
      %4369 = vmatprep.subr.bf16.mxu0 0
      %4370 = vmatpush1.bf16.msra.mxu0 0
      %4371 = vmatprep.subr.bf16.mxu0 0
      %4372 = vmatpush1.bf16.msra.mxu0 0
      %4373 = vmatprep.subr.bf16.mxu0 0
      %4374 = vmatpush1.bf16.msra.mxu0 0
      %4375 = vmatprep.subr.bf16.mxu0 0
      %4376 = vmatpush1.bf16.msra.mxu0 0
      %4377 = vmatprep.subr.bf16.mxu0 0
      %4378 = vmatpush1.bf16.msra.mxu0 0
      %4379 = vmatprep.subr.bf16.mxu0 0
      %4380 = vmatpush1.bf16.msra.mxu0 0
      %4381 = vmatprep.mubr.bf16.mxu0 0
      %4382 = vmatmul.mubr.bf16.gmra.mrb[0].mxu0 %v636
      %v4383 = vpop.f32.mrb[0].mxu0
      %v4384 = vadd.f32 %v4331, %v4383
      %v4385 = vpop.f32.mrb[0].mxu0
      %v4386 = vadd.f32 %v4333, %v4385
      %v4387 = vpop.f32.mrb[0].mxu0
      %v4388 = vadd.f32 %v4335, %v4387
      %v4389 = vpop.f32.mrb[0].mxu0
      %v4390 = vadd.f32 %v4337, %v4389
      %4391 = vmatprep.mubr.bf16.mxu0 0
      %4392 = vmatmul.mubr.bf16.gmra.mrb[0].mxu0 %v651
      %v4393 = vpop.f32.mrb[0].mxu0
      %v4394 = vadd.f32 %v4341, %v4393
      %v4395 = vpop.f32.mrb[0].mxu0
      %v4396 = vadd.f32 %v4343, %v4395
      %v4397 = vpop.f32.mrb[0].mxu0
      %v4398 = vadd.f32 %v4345, %v4397
      %v4399 = vpop.f32.mrb[0].mxu0
      %v4400 = vadd.f32 %v4347, %v4399
      %4401 = vdwg.mxu0
      %v4402 = vmax.f32 %v3960, 0.0
      %v4403 = vmax.f32 %v3962, 0.0
      %v4404 = vmax.f32 %v4384, 0.0
      %v4405 = vmax.f32 %v4386, 0.0
      %v4406 = vmax.f32 %v3964, 0.0
      %v4407 = vmax.f32 %v3966, 0.0
      %v4408 = vmax.f32 %v4388, 0.0
      %v4409 = vmax.f32 %v4390, 0.0
      %v4410 = vmax.f32 %v3970, 0.0
      %v4411 = vmax.f32 %v3972, 0.0
      %v4412 = vmax.f32 %v4394, 0.0
      %v4413 = vmax.f32 %v4396, 0.0
      %v4414 = vmax.f32 %v3974, 0.0
      %v4415 = vmax.f32 %v3976, 0.0
      %v4416 = vmax.f32 %v4398, 0.0
      %v4417 = vmax.f32 %v4400, 0.0
      %v4418 = vpack.c.bf16 %v4406, %v4402
      %v4419 = vpack.c.bf16 %v4407, %v4403
      %v4420 = vpack.c.bf16 %v4408, %v4404
      %v4421 = vpack.c.bf16 %v4409, %v4405
      %v4422 = vpack.c.bf16 %v4414, %v4410
      %v4423 = vpack.c.bf16 %v4415, %v4411
      %v4424 = vpack.c.bf16 %v4416, %v4412
      %v4425 = vpack.c.bf16 %v4417, %v4413
      %v4434 = vunpack.c.l.b16 %v4418
      %v4435 = vunpack.c.l.b16 %v4419
      %v4436 = vunpack.c.l.b16 %v4420
      %v4437 = vunpack.c.l.b16 %v4421
      %v4438 = vunpack.c.h.b16 %v4418
      %v4439 = vunpack.c.h.b16 %v4419
      %v4440 = vunpack.c.h.b16 %v4420
      %v4441 = vunpack.c.h.b16 %v4421
      %v4442 = vunpack.c.l.b16 %v4422
      %v4443 = vunpack.c.l.b16 %v4423
      %v4444 = vunpack.c.l.b16 %v4424
      %v4445 = vunpack.c.l.b16 %v4425
      %v4446 = vunpack.c.h.b16 %v4422
      %v4447 = vunpack.c.h.b16 %v4423
      %v4448 = vunpack.c.h.b16 %v4424
      %v4449 = vunpack.c.h.b16 %v4425
      %v4450 = vpack.c.b16 %v4435, %v4434
      %v4451 = vpack.c.b16 %v4437, %v4436
      %v4452 = vpack.c.b16 %v4439, %v4438
      %v4453 = vpack.c.b16 %v4441, %v4440
      %v4454 = vpack.c.b16 %v4443, %v4442
      %v4455 = vpack.c.b16 %v4445, %v4444
      %v4456 = vpack.c.b16 %v4447, %v4446
      %v4457 = vpack.c.b16 %v4449, %v4448
      %4466 = vst [vmem:[%s177] sm:$0xff] %v4450
      %4467 = vst [vmem:[%s177 + $0x8] sm:$0xff] %v4451
      %4468 = vst [vmem:[%s177 + $0x10] sm:$0xff] %v4452
      %4469 = vst [vmem:[%s177 + $0x18] sm:$0xff] %v4453
      %4470 = vst [vmem:[%s177 + $0x20] sm:$0xff] %v4454
      %4471 = vst [vmem:[%s177 + $0x28] sm:$0xff] %v4455
      %4472 = vst [vmem:[%s177 + $0x30] sm:$0xff] %v4456
      %4473 = vst [vmem:[%s177 + $0x38] sm:$0xff] %v4457
      %s4474 = smul.u32 4, %s14
      %p4475 = scmp.lt.s32.totalorder %s4474, 7
      %s4476 = scalar_select %p4475, %s4474, 7
      %s4477 = smul.addr %s4476, 4
      %s4478 = smul.addr %s4477, 4
      %s4479 = scalar_lea.vmem %s3, %s4478
      // Predicated region
      $region33: #{cnn_forward.4} parent=31 // pred_check
        %p4480 = pneg %p100
      $region34: #{cnn_forward.4} parent=31 // pred_check_branch
        %4482 = sbr.rel (%p4480) target = $region36
      $region35: #{cnn_forward.4} parent=31 // pred_region
        %s4483 = smul.u32 4, %s14
      $region36: #{cnn_forward.4} parent=31 // pred_fallthru
        _
    $region32: #{cnn_forward.4} parent=5 // pred_fallthru
      _
    %p4484 = scmp.le.s32.totalorder 2, %s9
    // Predicated region
    $region37: #{cnn_forward.4} parent=5 // pred_check
      %p4485 = pneg %p4484
    $region38: #{cnn_forward.4} parent=5 // pred_check_branch
      %4487 = sbr.rel (%p4485) target = $region40
    $region39: #{cnn_forward.4} parent=5 // pred_region
      %s4488 = ssub.s32 %s9, 2
      // Predicated region
      $region41: #{cnn_forward.4} parent=39 // pred_check
        %p4489 = pneg %p106
      $region42: #{cnn_forward.4} parent=39 // pred_check_branch
        %4491 = sbr.rel (%p4489) target = $region44
      $region43: #{cnn_forward.4} parent=39 // pred_region
        %s4492 = smul.u32 4, %s15
        %p4493 = scmp.lt.s32.totalorder %s4492, 7
        %s4494 = scalar_select %p4493, %s4492, 7
        %s4495 = smul.addr %s4494, 4
        %s4496 = smul.addr %s4495, 4
        %s4497 = scalar_lea.vmem %s3, %s4496
      $region44: #{cnn_forward.4} parent=39 // pred_fallthru
        _
    $region40: #{cnn_forward.4} parent=5 // pred_fallthru
      _
  $region6: #{cnn_forward.4} parent=0 // loop_footer
    %s13 = sadd.s32 1, %s9
  $region7: #{cnn_forward.4} parent=0 // loop_footer_branch
    %8 = sbr.rel target = $region3
  $region8: #{cnn_forward.4} parent=0 // loop_exit
    _

// kernel: cnn_forward.5
$region0: #{cnn_forward.5}
  #allocation0 [shape = 'u32[]', space=smem, size = 0x4, offset = 0x4, fixed_abs, tag = 'smem constant byte address 0x4 - core index']
  #allocation1 [shape = 'u32[144,128]{1,0:T(1,128)}', space=vmem, size = 0x12000, scoped, tag = 'internal scratch']
  %s0 = inlined_call_operand.vmem [shape: bf16[16,1568], index: 0, kind: input, shape index: {}]
  %s1 = inlined_call_operand.vmem [shape: bf16[1568,128], index: 1, kind: input, shape index: {}]
  %s2 = inlined_call_operand.vmem [shape: f32[1,128], index: 2, kind: input, shape index: {}]
  %s3 = inlined_call_operand.vmem [shape: f32[16,128], index: 3, kind: output, shape index: {}]
  %s4 = sld [smem:[#allocation0]]
  $region22: #{cnn_forward.5} parent=0
    _
  %s6 = ssub.s32 1, %s4
  %s7 = scalar_select 0, %s6, %s4
  // Predicated region
  $region2: #{cnn_forward.5} parent=0 // pred_check
    _
  $region3: #{cnn_forward.5} parent=0 // pred_check_branch
    %9 = sbr.rel (0) target = $region5
  $region4: #{cnn_forward.5} parent=0 // pred_region
    _
  $region5: #{cnn_forward.5} parent=0 // pred_fallthru
    _
  // Predicated region
  $region6: #{cnn_forward.5} parent=0 // pred_check
    _
  $region7: #{cnn_forward.5} parent=0 // pred_check_branch
    %11 = sbr.rel (0) target = $region9
  $region8: #{cnn_forward.5} parent=0 // pred_region
    _
  $region9: #{cnn_forward.5} parent=0 // pred_fallthru
    _
  // Predicated region
  $region10: #{cnn_forward.5} parent=0 // pred_check
    _
  $region11: #{cnn_forward.5} parent=0 // pred_check_branch
    %13 = sbr.rel (0) target = $region13
  $region12: #{cnn_forward.5} parent=0 // pred_region
    _
  $region13: #{cnn_forward.5} parent=0 // pred_fallthru
    _
  %v15 = vld [vmem:[%s0] sm:$0xff]
  %v16 = vld [vmem:[%s0 + $0x8] sm:$0xff]
  %v17 = vld [vmem:[%s0 + $0x10] sm:$0xff]
  %v18 = vld [vmem:[%s0 + $0x18] sm:$0xff]
  %v19 = vld [vmem:[%s0 + $0x20] sm:$0xff]
  %v20 = vld [vmem:[%s0 + $0x28] sm:$0xff]
  %v21 = vld [vmem:[%s0 + $0x30] sm:$0xf]
  %v22 = vld [vmem:[%s0 + $0x34] sm:$0xff]
  %v23 = vld [vmem:[%s0 + $0x3c] sm:$0xff]
  %v24 = vld [vmem:[%s0 + $0x44] sm:$0xff]
  %v25 = vld [vmem:[%s0 + $0x4c] sm:$0xff]
  %v26 = vld [vmem:[%s0 + $0x54] sm:$0xff]
  %v27 = vld [vmem:[%s0 + $0x5c] sm:$0xff]
  %v28 = vld [vmem:[%s0 + $0x64] sm:$0xf]
  %v29 = vld [vmem:[%s1] sm:$0xf]
  %v30 = vld [vmem:[%s1 + $0x4] sm:$0xf]
  %v31 = vld [vmem:[%s1 + $0x8] sm:$0xf]
  %v32 = vld [vmem:[%s1 + $0xc] sm:$0xf]
  %v33 = vld [vmem:[%s1 + $0x10] sm:$0xf]
  %v34 = vld [vmem:[%s1 + $0x14] sm:$0xf]
  %v35 = vld [vmem:[%s1 + $0x18] sm:$0xf]
  %v36 = vld [vmem:[%s1 + $0x1c] sm:$0xf]
  %v37 = vld [vmem:[%s1 + $0x20] sm:$0xf]
  %v38 = vld [vmem:[%s1 + $0x24] sm:$0xf]
  %v39 = vld [vmem:[%s1 + $0x28] sm:$0xf]
  %v40 = vld [vmem:[%s1 + $0x2c] sm:$0xf]
  %v41 = vld [vmem:[%s1 + $0x30] sm:$0xf]
  %v42 = vld [vmem:[%s1 + $0x34] sm:$0xf]
  %v43 = vld [vmem:[%s1 + $0x38] sm:$0xf]
  %v44 = vld [vmem:[%s1 + $0x3c] sm:$0xf]
  %v45 = vld [vmem:[%s1 + $0x40] sm:$0xf]
  %v46 = vld [vmem:[%s1 + $0x44] sm:$0xf]
  %v47 = vld [vmem:[%s1 + $0x48] sm:$0xf]
  %v48 = vld [vmem:[%s1 + $0x4c] sm:$0xf]
  %v49 = vld [vmem:[%s1 + $0x50] sm:$0xf]
  %v50 = vld [vmem:[%s1 + $0x54] sm:$0xf]
  %v51 = vld [vmem:[%s1 + $0x58] sm:$0xf]
  %v52 = vld [vmem:[%s1 + $0x5c] sm:$0xf]
  %v53 = vld [vmem:[%s1 + $0x60] sm:$0xf]
  %v54 = vld [vmem:[%s1 + $0x64] sm:$0xf]
  %v55 = vld [vmem:[%s1 + $0x68] sm:$0xf]
  %v56 = vld [vmem:[%s1 + $0x6c] sm:$0xf]
  %v57 = vld [vmem:[%s1 + $0x70] sm:$0xf]
  %v58 = vld [vmem:[%s1 + $0x74] sm:$0xf]
  %v59 = vld [vmem:[%s1 + $0x78] sm:$0xf]
  %v60 = vld [vmem:[%s1 + $0x7c] sm:$0xf]
  %v61 = vld [vmem:[%s1 + $0x80] sm:$0xf]
  %v62 = vld [vmem:[%s1 + $0x84] sm:$0xf]
  %v63 = vld [vmem:[%s1 + $0x88] sm:$0xf]
  %v64 = vld [vmem:[%s1 + $0x8c] sm:$0xf]
  %v65 = vld [vmem:[%s1 + $0x90] sm:$0xf]
  %v66 = vld [vmem:[%s1 + $0x94] sm:$0xf]
  %v67 = vld [vmem:[%s1 + $0x98] sm:$0xf]
  %v68 = vld [vmem:[%s1 + $0x9c] sm:$0xf]
  %v69 = vld [vmem:[%s1 + $0xa0] sm:$0xf]
  %v70 = vld [vmem:[%s1 + $0xa4] sm:$0xf]
  %v71 = vld [vmem:[%s1 + $0xa8] sm:$0xf]
  %v72 = vld [vmem:[%s1 + $0xac] sm:$0xf]
  %v73 = vld [vmem:[%s1 + $0xb0] sm:$0xf]
  %v74 = vld [vmem:[%s1 + $0xb4] sm:$0xf]
  %v75 = vld [vmem:[%s1 + $0xb8] sm:$0xf]
  %v76 = vld [vmem:[%s1 + $0xbc] sm:$0xf]
  %v77 = vld [vmem:[%s1 + $0xc0] sm:$0xf]
  %v78 = vld [vmem:[%s1 + $0xc4] sm:$0xf]
  %v79 = vld [vmem:[%s1 + $0xc8] sm:$0xf]
  %v80 = vld [vmem:[%s1 + $0xcc] sm:$0xf]
  %v81 = vld [vmem:[%s1 + $0xd0] sm:$0xf]
  %v82 = vld [vmem:[%s1 + $0xd4] sm:$0xf]
  %v83 = vld [vmem:[%s1 + $0xd8] sm:$0xf]
  %v84 = vld [vmem:[%s1 + $0xdc] sm:$0xf]
  %v85 = vld [vmem:[%s1 + $0xe0] sm:$0xf]
  %v86 = vld [vmem:[%s1 + $0xe4] sm:$0xf]
  %v87 = vld [vmem:[%s1 + $0xe8] sm:$0xf]
  %v88 = vld [vmem:[%s1 + $0xec] sm:$0xf]
  %v89 = vld [vmem:[%s1 + $0xf0] sm:$0xf]
  %v90 = vld [vmem:[%s1 + $0xf4] sm:$0xf]
  %v91 = vld [vmem:[%s1 + $0xf8] sm:$0xf]
  %v92 = vld [vmem:[%s1 + $0xfc] sm:$0xf]
  %v93 = vld [vmem:[%s1 + $0x100] sm:$0xf]
  %v94 = vld [vmem:[%s1 + $0x104] sm:$0xf]
  %v95 = vld [vmem:[%s1 + $0x108] sm:$0xf]
  %v96 = vld [vmem:[%s1 + $0x10c] sm:$0xf]
  %v97 = vld [vmem:[%s1 + $0x110] sm:$0xf]
  %v98 = vld [vmem:[%s1 + $0x114] sm:$0xf]
  %v99 = vld [vmem:[%s1 + $0x118] sm:$0xf]
  %v100 = vld [vmem:[%s1 + $0x11c] sm:$0xf]
  %v101 = vld [vmem:[%s1 + $0x120] sm:$0xf]
  %v102 = vld [vmem:[%s1 + $0x124] sm:$0xf]
  %v103 = vld [vmem:[%s1 + $0x128] sm:$0xf]
  %v104 = vld [vmem:[%s1 + $0x12c] sm:$0xf]
  %v105 = vld [vmem:[%s1 + $0x130] sm:$0xf]
  %v106 = vld [vmem:[%s1 + $0x134] sm:$0xf]
  %v107 = vld [vmem:[%s1 + $0x138] sm:$0xf]
  %v108 = vld [vmem:[%s1 + $0x13c] sm:$0xf]
  %v109 = vld [vmem:[%s1 + $0x140] sm:$0xf]
  %v110 = vld [vmem:[%s1 + $0x144] sm:$0xf]
  %v111 = vld [vmem:[%s1 + $0x148] sm:$0xf]
  %v112 = vld [vmem:[%s1 + $0x14c] sm:$0xf]
  %v113 = vld [vmem:[%s1 + $0x150] sm:$0xf]
  %v114 = vld [vmem:[%s1 + $0x154] sm:$0xf]
  %v115 = vld [vmem:[%s1 + $0x158] sm:$0xf]
  %v116 = vld [vmem:[%s1 + $0x15c] sm:$0xf]
  %v117 = vld [vmem:[%s1 + $0x160] sm:$0xf]
  %v118 = vld [vmem:[%s1 + $0x164] sm:$0xf]
  %v119 = vld [vmem:[%s1 + $0x168] sm:$0xf]
  %v120 = vld [vmem:[%s1 + $0x16c] sm:$0xf]
  %v121 = vld [vmem:[%s1 + $0x170] sm:$0xf]
  %v122 = vld [vmem:[%s1 + $0x174] sm:$0xf]
  %v123 = vld [vmem:[%s1 + $0x178] sm:$0xf]
  %v124 = vld [vmem:[%s1 + $0x17c] sm:$0xf]
  %v125 = vld [vmem:[%s1 + $0x180] sm:$0xf]
  %v126 = vld [vmem:[%s1 + $0x184] sm:$0xf]
  %v127 = vld [vmem:[%s1 + $0x188] sm:$0xf]
  %v128 = vld [vmem:[%s1 + $0x18c] sm:$0xf]
  %v129 = vld [vmem:[%s1 + $0x190] sm:$0xf]
  %v130 = vld [vmem:[%s1 + $0x194] sm:$0xf]
  %v131 = vld [vmem:[%s1 + $0x198] sm:$0xf]
  %v132 = vld [vmem:[%s1 + $0x19c] sm:$0xf]
  %v133 = vld [vmem:[%s1 + $0x1a0] sm:$0xf]
  %v134 = vld [vmem:[%s1 + $0x1a4] sm:$0xf]
  %v135 = vld [vmem:[%s1 + $0x1a8] sm:$0xf]
  %v136 = vld [vmem:[%s1 + $0x1ac] sm:$0xf]
  %v137 = vld [vmem:[%s1 + $0x1b0] sm:$0xf]
  %v138 = vld [vmem:[%s1 + $0x1b4] sm:$0xf]
  %v139 = vld [vmem:[%s1 + $0x1b8] sm:$0xf]
  %v140 = vld [vmem:[%s1 + $0x1bc] sm:$0xf]
  %v141 = vld [vmem:[%s1 + $0x1c0] sm:$0xf]
  %v142 = vld [vmem:[%s1 + $0x1c4] sm:$0xf]
  %v143 = vld [vmem:[%s1 + $0x1c8] sm:$0xf]
  %v144 = vld [vmem:[%s1 + $0x1cc] sm:$0xf]
  %v145 = vld [vmem:[%s1 + $0x1d0] sm:$0xf]
  %v146 = vld [vmem:[%s1 + $0x1d4] sm:$0xf]
  %v147 = vld [vmem:[%s1 + $0x1d8] sm:$0xf]
  %v148 = vld [vmem:[%s1 + $0x1dc] sm:$0xf]
  %v149 = vld [vmem:[%s1 + $0x1e0] sm:$0xf]
  %v150 = vld [vmem:[%s1 + $0x1e4] sm:$0xf]
  %v151 = vld [vmem:[%s1 + $0x1e8] sm:$0xf]
  %v152 = vld [vmem:[%s1 + $0x1ec] sm:$0xf]
  %v153 = vld [vmem:[%s1 + $0x1f0] sm:$0xf]
  %v154 = vld [vmem:[%s1 + $0x1f4] sm:$0xf]
  %v155 = vld [vmem:[%s1 + $0x1f8] sm:$0xf]
  %v156 = vld [vmem:[%s1 + $0x1fc] sm:$0xf]
  %v157 = vld [vmem:[%s1 + $0x200] sm:$0xf]
  %v158 = vld [vmem:[%s1 + $0x204] sm:$0xf]
  %v159 = vld [vmem:[%s1 + $0x208] sm:$0xf]
  %v160 = vld [vmem:[%s1 + $0x20c] sm:$0xf]
  %v161 = vld [vmem:[%s1 + $0x210] sm:$0xf]
  %v162 = vld [vmem:[%s1 + $0x214] sm:$0xf]
  %v163 = vld [vmem:[%s1 + $0x218] sm:$0xf]
  %v164 = vld [vmem:[%s1 + $0x21c] sm:$0xf]
  %v165 = vld [vmem:[%s1 + $0x220] sm:$0xf]
  %v166 = vld [vmem:[%s1 + $0x224] sm:$0xf]
  %v167 = vld [vmem:[%s1 + $0x228] sm:$0xf]
  %v168 = vld [vmem:[%s1 + $0x22c] sm:$0xf]
  %v169 = vld [vmem:[%s1 + $0x230] sm:$0xf]
  %v170 = vld [vmem:[%s1 + $0x234] sm:$0xf]
  %v171 = vld [vmem:[%s1 + $0x238] sm:$0xf]
  %v172 = vld [vmem:[%s1 + $0x23c] sm:$0xf]
  %v173 = vld [vmem:[%s1 + $0x240] sm:$0xf]
  %v174 = vld [vmem:[%s1 + $0x244] sm:$0xf]
  %v175 = vld [vmem:[%s1 + $0x248] sm:$0xf]
  %v176 = vld [vmem:[%s1 + $0x24c] sm:$0xf]
  %v177 = vld [vmem:[%s1 + $0x250] sm:$0xf]
  %v178 = vld [vmem:[%s1 + $0x254] sm:$0xf]
  %v179 = vld [vmem:[%s1 + $0x258] sm:$0xf]
  %v180 = vld [vmem:[%s1 + $0x25c] sm:$0xf]
  %v181 = vld [vmem:[%s1 + $0x260] sm:$0xf]
  %v182 = vld [vmem:[%s1 + $0x264] sm:$0xf]
  %v183 = vld [vmem:[%s1 + $0x268] sm:$0xf]
  %v184 = vld [vmem:[%s1 + $0x26c] sm:$0xf]
  %v185 = vld [vmem:[%s1 + $0x270] sm:$0xf]
  %v186 = vld [vmem:[%s1 + $0x274] sm:$0xf]
  %v187 = vld [vmem:[%s1 + $0x278] sm:$0xf]
  %v188 = vld [vmem:[%s1 + $0x27c] sm:$0xf]
  %v189 = vld [vmem:[%s1 + $0x280] sm:$0xf]
  %v190 = vld [vmem:[%s1 + $0x284] sm:$0xf]
  %v191 = vld [vmem:[%s1 + $0x288] sm:$0xf]
  %v192 = vld [vmem:[%s1 + $0x28c] sm:$0xf]
  %v193 = vld [vmem:[%s1 + $0x290] sm:$0xf]
  %v194 = vld [vmem:[%s1 + $0x294] sm:$0xf]
  %v195 = vld [vmem:[%s1 + $0x298] sm:$0xf]
  %v196 = vld [vmem:[%s1 + $0x29c] sm:$0xf]
  %v197 = vld [vmem:[%s1 + $0x2a0] sm:$0xf]
  %v198 = vld [vmem:[%s1 + $0x2a4] sm:$0xf]
  %v199 = vld [vmem:[%s1 + $0x2a8] sm:$0xf]
  %v200 = vld [vmem:[%s1 + $0x2ac] sm:$0xf]
  %v201 = vld [vmem:[%s1 + $0x2b0] sm:$0xf]
  %v202 = vld [vmem:[%s1 + $0x2b4] sm:$0xf]
  %v203 = vld [vmem:[%s1 + $0x2b8] sm:$0xf]
  %v204 = vld [vmem:[%s1 + $0x2bc] sm:$0xf]
  %v205 = vld [vmem:[%s1 + $0x2c0] sm:$0xf]
  %v206 = vld [vmem:[%s1 + $0x2c4] sm:$0xf]
  %v207 = vld [vmem:[%s1 + $0x2c8] sm:$0xf]
  %v208 = vld [vmem:[%s1 + $0x2cc] sm:$0xf]
  %v209 = vld [vmem:[%s1 + $0x2d0] sm:$0xf]
  %v210 = vld [vmem:[%s1 + $0x2d4] sm:$0xf]
  %v211 = vld [vmem:[%s1 + $0x2d8] sm:$0xf]
  %v212 = vld [vmem:[%s1 + $0x2dc] sm:$0xf]
  %v213 = vld [vmem:[%s1 + $0x2e0] sm:$0xf]
  %v214 = vld [vmem:[%s1 + $0x2e4] sm:$0xf]
  %v215 = vld [vmem:[%s1 + $0x2e8] sm:$0xf]
  %v216 = vld [vmem:[%s1 + $0x2ec] sm:$0xf]
  %v217 = vld [vmem:[%s1 + $0x2f0] sm:$0xf]
  %v218 = vld [vmem:[%s1 + $0x2f4] sm:$0xf]
  %v219 = vld [vmem:[%s1 + $0x2f8] sm:$0xf]
  %v220 = vld [vmem:[%s1 + $0x2fc] sm:$0xf]
  %v221 = vld [vmem:[%s1 + $0x300] sm:$0xf]
  %v222 = vld [vmem:[%s1 + $0x304] sm:$0xf]
  %v223 = vld [vmem:[%s1 + $0x308] sm:$0xf]
  %v224 = vld [vmem:[%s1 + $0x30c] sm:$0xf]
  %v225 = vld [vmem:[%s2] sm:$0x1]
  %v227 = vlaneseq
  %v228 = vshrl.u32 %v227, 7
  %v229 = vsub.s32 0, %v228
  %v230 = vrot.slane %v225, %v229
  %v246 = vunpack.c.l.b16 %v15
  %v247 = vunpack.c.h.b16 %v15
  %v248 = vunpack.c.l.b16 %v16
  %v249 = vunpack.c.h.b16 %v16
  %v250 = vunpack.c.l.b16 %v17
  %v251 = vunpack.c.h.b16 %v17
  %v252 = vunpack.c.l.b16 %v18
  %v253 = vunpack.c.h.b16 %v18
  %v254 = vunpack.c.l.b16 %v19
  %v255 = vunpack.c.h.b16 %v19
  %v256 = vunpack.c.l.b16 %v20
  %v257 = vunpack.c.h.b16 %v20
  %v258 = vunpack.c.l.b16 %v21
  %v259 = vunpack.c.l.b16 %v22
  %v260 = vunpack.c.h.b16 %v22
  %v261 = vunpack.c.l.b16 %v23
  %v262 = vunpack.c.h.b16 %v23
  %v263 = vunpack.c.l.b16 %v24
  %v264 = vunpack.c.h.b16 %v24
  %v265 = vunpack.c.l.b16 %v25
  %v266 = vunpack.c.h.b16 %v25
  %v267 = vunpack.c.l.b16 %v26
  %v268 = vunpack.c.h.b16 %v26
  %v269 = vunpack.c.l.b16 %v27
  %v270 = vunpack.c.h.b16 %v27
  %v271 = vunpack.c.l.b16 %v28
  %v272 = vpack.c.b16 %v259, %v246
  %v273 = vpack.c.b16 %v260, %v247
  %v274 = vpack.c.b16 %v261, %v248
  %v275 = vpack.c.b16 %v262, %v249
  %v276 = vpack.c.b16 %v263, %v250
  %v277 = vpack.c.b16 %v264, %v251
  %v278 = vpack.c.b16 %v265, %v252
  %v279 = vpack.c.b16 %v266, %v253
  %v280 = vpack.c.b16 %v267, %v254
  %v281 = vpack.c.b16 %v268, %v255
  %v282 = vpack.c.b16 %v269, %v256
  %v283 = vpack.c.b16 %v270, %v257
  %v284 = vpack.c.b16 %v271, %v258
  %v493 = vunpack.c.l.b16 %v29
  %v494 = vunpack.c.l.b16 %v30
  %v495 = vunpack.c.l.b16 %v31
  %v496 = vunpack.c.l.b16 %v32
  %v497 = vunpack.c.l.b16 %v33
  %v498 = vunpack.c.l.b16 %v34
  %v499 = vunpack.c.l.b16 %v35
  %v500 = vunpack.c.l.b16 %v36
  %v501 = vunpack.c.l.b16 %v37
  %v502 = vunpack.c.l.b16 %v38
  %v503 = vunpack.c.l.b16 %v39
  %v504 = vunpack.c.l.b16 %v40
  %v505 = vunpack.c.l.b16 %v41
  %v506 = vunpack.c.l.b16 %v42
  %v507 = vunpack.c.l.b16 %v43
  %v508 = vunpack.c.l.b16 %v44
  %v509 = vunpack.c.l.b16 %v45
  %v510 = vunpack.c.l.b16 %v46
  %v511 = vunpack.c.l.b16 %v47
  %v512 = vunpack.c.l.b16 %v48
  %v513 = vunpack.c.l.b16 %v49
  %v514 = vunpack.c.l.b16 %v50
  %v515 = vunpack.c.l.b16 %v51
  %v516 = vunpack.c.l.b16 %v52
  %v517 = vunpack.c.l.b16 %v53
  %v518 = vunpack.c.l.b16 %v54
  %v519 = vunpack.c.l.b16 %v55
  %v520 = vunpack.c.l.b16 %v56
  %v521 = vunpack.c.l.b16 %v57
  %v522 = vunpack.c.l.b16 %v58
  %v523 = vunpack.c.l.b16 %v59
  %v524 = vunpack.c.l.b16 %v60
  %v525 = vunpack.c.l.b16 %v61
  %v526 = vunpack.c.l.b16 %v62
  %v527 = vunpack.c.l.b16 %v63
  %v528 = vunpack.c.l.b16 %v64
  %v529 = vunpack.c.l.b16 %v65
  %v530 = vunpack.c.l.b16 %v66
  %v531 = vunpack.c.l.b16 %v67
  %v532 = vunpack.c.l.b16 %v68
  %v533 = vunpack.c.l.b16 %v69
  %v534 = vunpack.c.l.b16 %v70
  %v535 = vunpack.c.l.b16 %v71
  %v536 = vunpack.c.l.b16 %v72
  %v537 = vunpack.c.l.b16 %v73
  %v538 = vunpack.c.l.b16 %v74
  %v539 = vunpack.c.l.b16 %v75
  %v540 = vunpack.c.l.b16 %v76
  %v541 = vunpack.c.l.b16 %v77
  %v542 = vunpack.c.l.b16 %v78
  %v543 = vunpack.c.l.b16 %v79
  %v544 = vunpack.c.l.b16 %v80
  %v545 = vunpack.c.l.b16 %v81
  %v546 = vunpack.c.l.b16 %v82
  %v547 = vunpack.c.l.b16 %v83
  %v548 = vunpack.c.l.b16 %v84
  %v549 = vunpack.c.l.b16 %v85
  %v550 = vunpack.c.l.b16 %v86
  %v551 = vunpack.c.l.b16 %v87
  %v552 = vunpack.c.l.b16 %v88
  %v553 = vunpack.c.l.b16 %v89
  %v554 = vunpack.c.l.b16 %v90
  %v555 = vunpack.c.l.b16 %v91
  %v556 = vunpack.c.l.b16 %v92
  %v557 = vunpack.c.l.b16 %v93
  %v558 = vunpack.c.l.b16 %v94
  %v559 = vunpack.c.l.b16 %v95
  %v560 = vunpack.c.l.b16 %v96
  %v561 = vunpack.c.l.b16 %v97
  %v562 = vunpack.c.l.b16 %v98
  %v563 = vunpack.c.l.b16 %v99
  %v564 = vunpack.c.l.b16 %v100
  %v565 = vunpack.c.l.b16 %v101
  %v566 = vunpack.c.l.b16 %v102
  %v567 = vunpack.c.l.b16 %v103
  %v568 = vunpack.c.l.b16 %v104
  %v569 = vunpack.c.l.b16 %v105
  %v570 = vunpack.c.l.b16 %v106
  %v571 = vunpack.c.l.b16 %v107
  %v572 = vunpack.c.l.b16 %v108
  %v573 = vunpack.c.l.b16 %v109
  %v574 = vunpack.c.l.b16 %v110
  %v575 = vunpack.c.l.b16 %v111
  %v576 = vunpack.c.l.b16 %v112
  %v577 = vunpack.c.l.b16 %v113
  %v578 = vunpack.c.l.b16 %v114
  %v579 = vunpack.c.l.b16 %v115
  %v580 = vunpack.c.l.b16 %v116
  %v581 = vunpack.c.l.b16 %v117
  %v582 = vunpack.c.l.b16 %v118
  %v583 = vunpack.c.l.b16 %v119
  %v584 = vunpack.c.l.b16 %v120
  %v585 = vunpack.c.l.b16 %v121
  %v586 = vunpack.c.l.b16 %v122
  %v587 = vunpack.c.l.b16 %v123
  %v588 = vunpack.c.l.b16 %v124
  %v589 = vunpack.c.l.b16 %v125
  %v590 = vunpack.c.l.b16 %v126
  %v591 = vunpack.c.l.b16 %v127
  %v592 = vunpack.c.l.b16 %v128
  %v593 = vunpack.c.l.b16 %v129
  %v594 = vunpack.c.l.b16 %v130
  %v595 = vunpack.c.l.b16 %v131
  %v596 = vunpack.c.l.b16 %v132
  %v597 = vunpack.c.l.b16 %v133
  %v598 = vunpack.c.l.b16 %v134
  %v599 = vunpack.c.l.b16 %v135
  %v600 = vunpack.c.l.b16 %v136
  %v601 = vunpack.c.l.b16 %v137
  %v602 = vunpack.c.l.b16 %v138
  %v603 = vunpack.c.l.b16 %v139
  %v604 = vunpack.c.l.b16 %v140
  %v605 = vunpack.c.l.b16 %v141
  %v606 = vunpack.c.l.b16 %v142
  %v607 = vunpack.c.l.b16 %v143
  %v608 = vunpack.c.l.b16 %v144
  %v609 = vunpack.c.l.b16 %v145
  %v610 = vunpack.c.l.b16 %v146
  %v611 = vunpack.c.l.b16 %v147
  %v612 = vunpack.c.l.b16 %v148
  %v613 = vunpack.c.l.b16 %v149
  %v614 = vunpack.c.l.b16 %v150
  %v615 = vunpack.c.l.b16 %v151
  %v616 = vunpack.c.l.b16 %v152
  %v617 = vunpack.c.l.b16 %v153
  %v618 = vunpack.c.l.b16 %v154
  %v619 = vunpack.c.l.b16 %v155
  %v620 = vunpack.c.l.b16 %v156
  %v621 = vunpack.c.l.b16 %v157
  %v622 = vunpack.c.l.b16 %v158
  %v623 = vunpack.c.l.b16 %v159
  %v624 = vunpack.c.l.b16 %v160
  %v625 = vunpack.c.l.b16 %v161
  %v626 = vunpack.c.l.b16 %v162
  %v627 = vunpack.c.l.b16 %v163
  %v628 = vunpack.c.l.b16 %v164
  %v629 = vunpack.c.l.b16 %v165
  %v630 = vunpack.c.l.b16 %v166
  %v631 = vunpack.c.l.b16 %v167
  %v632 = vunpack.c.l.b16 %v168
  %v633 = vunpack.c.l.b16 %v169
  %v634 = vunpack.c.l.b16 %v170
  %v635 = vunpack.c.l.b16 %v171
  %v636 = vunpack.c.l.b16 %v172
  %v637 = vunpack.c.l.b16 %v173
  %v638 = vunpack.c.l.b16 %v174
  %v639 = vunpack.c.l.b16 %v175
  %v640 = vunpack.c.l.b16 %v176
  %v641 = vunpack.c.l.b16 %v177
  %v642 = vunpack.c.l.b16 %v178
  %v643 = vunpack.c.l.b16 %v179
  %v644 = vunpack.c.l.b16 %v180
  %v645 = vunpack.c.l.b16 %v181
  %v646 = vunpack.c.l.b16 %v182
  %v647 = vunpack.c.l.b16 %v183
  %v648 = vunpack.c.l.b16 %v184
  %v649 = vunpack.c.l.b16 %v185
  %v650 = vunpack.c.l.b16 %v186
  %v651 = vunpack.c.l.b16 %v187
  %v652 = vunpack.c.l.b16 %v188
  %v653 = vunpack.c.l.b16 %v189
  %v654 = vunpack.c.l.b16 %v190
  %v655 = vunpack.c.l.b16 %v191
  %v656 = vunpack.c.l.b16 %v192
  %v657 = vunpack.c.l.b16 %v193
  %v658 = vunpack.c.l.b16 %v194
  %v659 = vunpack.c.l.b16 %v195
  %v660 = vunpack.c.l.b16 %v196
  %v661 = vunpack.c.l.b16 %v197
  %v662 = vunpack.c.l.b16 %v198
  %v663 = vunpack.c.l.b16 %v199
  %v664 = vunpack.c.l.b16 %v200
  %v665 = vunpack.c.l.b16 %v201
  %v666 = vunpack.c.l.b16 %v202
  %v667 = vunpack.c.l.b16 %v203
  %v668 = vunpack.c.l.b16 %v204
  %v669 = vunpack.c.l.b16 %v205
  %v670 = vunpack.c.l.b16 %v206
  %v671 = vunpack.c.l.b16 %v207
  %v672 = vunpack.c.l.b16 %v208
  %v673 = vunpack.c.l.b16 %v209
  %v674 = vunpack.c.l.b16 %v210
  %v675 = vunpack.c.l.b16 %v211
  %v676 = vunpack.c.l.b16 %v212
  %v677 = vunpack.c.l.b16 %v213
  %v678 = vunpack.c.l.b16 %v214
  %v679 = vunpack.c.l.b16 %v215
  %v680 = vunpack.c.l.b16 %v216
  %v681 = vunpack.c.l.b16 %v217
  %v682 = vunpack.c.l.b16 %v218
  %v683 = vunpack.c.l.b16 %v219
  %v684 = vunpack.c.l.b16 %v220
  %v685 = vunpack.c.l.b16 %v221
  %v686 = vunpack.c.l.b16 %v222
  %v687 = vunpack.c.l.b16 %v223
  %v688 = vunpack.c.l.b16 %v224
  %v689 = vpack.c.b16 %v494, %v493
  %v690 = vpack.c.b16 %v496, %v495
  %v691 = vpack.c.b16 %v498, %v497
  %v692 = vpack.c.b16 %v500, %v499
  %v693 = vpack.c.b16 %v502, %v501
  %v694 = vpack.c.b16 %v504, %v503
  %v695 = vpack.c.b16 %v506, %v505
  %v696 = vpack.c.b16 %v508, %v507
  %v697 = vpack.c.b16 %v510, %v509
  %v698 = vpack.c.b16 %v512, %v511
  %v699 = vpack.c.b16 %v514, %v513
  %v700 = vpack.c.b16 %v516, %v515
  %v701 = vpack.c.b16 %v518, %v517
  %v702 = vpack.c.b16 %v520, %v519
  %v703 = vpack.c.b16 %v522, %v521
  %v704 = vpack.c.b16 %v524, %v523
  %v705 = vpack.c.b16 %v526, %v525
  %v706 = vpack.c.b16 %v528, %v527
  %v707 = vpack.c.b16 %v530, %v529
  %v708 = vpack.c.b16 %v532, %v531
  %v709 = vpack.c.b16 %v534, %v533
  %v710 = vpack.c.b16 %v536, %v535
  %v711 = vpack.c.b16 %v538, %v537
  %v712 = vpack.c.b16 %v540, %v539
  %v713 = vpack.c.b16 %v542, %v541
  %v714 = vpack.c.b16 %v544, %v543
  %v715 = vpack.c.b16 %v546, %v545
  %v716 = vpack.c.b16 %v548, %v547
  %v717 = vpack.c.b16 %v550, %v549
  %v718 = vpack.c.b16 %v552, %v551
  %v719 = vpack.c.b16 %v554, %v553
  %v720 = vpack.c.b16 %v556, %v555
  %v721 = vpack.c.b16 %v558, %v557
  %v722 = vpack.c.b16 %v560, %v559
  %v723 = vpack.c.b16 %v562, %v561
  %v724 = vpack.c.b16 %v564, %v563
  %v725 = vpack.c.b16 %v566, %v565
  %v726 = vpack.c.b16 %v568, %v567
  %v727 = vpack.c.b16 %v570, %v569
  %v728 = vpack.c.b16 %v572, %v571
  %v729 = vpack.c.b16 %v574, %v573
  %v730 = vpack.c.b16 %v576, %v575
  %v731 = vpack.c.b16 %v578, %v577
  %v732 = vpack.c.b16 %v580, %v579
  %v733 = vpack.c.b16 %v582, %v581
  %v734 = vpack.c.b16 %v584, %v583
  %v735 = vpack.c.b16 %v586, %v585
  %v736 = vpack.c.b16 %v588, %v587
  %v737 = vpack.c.b16 %v590, %v589
  %v738 = vpack.c.b16 %v592, %v591
  %v739 = vpack.c.b16 %v594, %v593
  %v740 = vpack.c.b16 %v596, %v595
  %v741 = vpack.c.b16 %v598, %v597
  %v742 = vpack.c.b16 %v600, %v599
  %v743 = vpack.c.b16 %v602, %v601
  %v744 = vpack.c.b16 %v604, %v603
  %v745 = vpack.c.b16 %v606, %v605
  %v746 = vpack.c.b16 %v608, %v607
  %v747 = vpack.c.b16 %v610, %v609
  %v748 = vpack.c.b16 %v612, %v611
  %v749 = vpack.c.b16 %v614, %v613
  %v750 = vpack.c.b16 %v616, %v615
  %v751 = vpack.c.b16 %v618, %v617
  %v752 = vpack.c.b16 %v620, %v619
  %v753 = vpack.c.b16 %v622, %v621
  %v754 = vpack.c.b16 %v624, %v623
  %v755 = vpack.c.b16 %v626, %v625
  %v756 = vpack.c.b16 %v628, %v627
  %v757 = vpack.c.b16 %v630, %v629
  %v758 = vpack.c.b16 %v632, %v631
  %v759 = vpack.c.b16 %v634, %v633
  %v760 = vpack.c.b16 %v636, %v635
  %v761 = vpack.c.b16 %v638, %v637
  %v762 = vpack.c.b16 %v640, %v639
  %v763 = vpack.c.b16 %v642, %v641
  %v764 = vpack.c.b16 %v644, %v643
  %v765 = vpack.c.b16 %v646, %v645
  %v766 = vpack.c.b16 %v648, %v647
  %v767 = vpack.c.b16 %v650, %v649
  %v768 = vpack.c.b16 %v652, %v651
  %v769 = vpack.c.b16 %v654, %v653
  %v770 = vpack.c.b16 %v656, %v655
  %v771 = vpack.c.b16 %v658, %v657
  %v772 = vpack.c.b16 %v660, %v659
  %v773 = vpack.c.b16 %v662, %v661
  %v774 = vpack.c.b16 %v664, %v663
  %v775 = vpack.c.b16 %v666, %v665
  %v776 = vpack.c.b16 %v668, %v667
  %v777 = vpack.c.b16 %v670, %v669
  %v778 = vpack.c.b16 %v672, %v671
  %v779 = vpack.c.b16 %v674, %v673
  %v780 = vpack.c.b16 %v676, %v675
  %v781 = vpack.c.b16 %v678, %v677
  %v782 = vpack.c.b16 %v680, %v679
  %v783 = vpack.c.b16 %v682, %v681
  %v784 = vpack.c.b16 %v684, %v683
  %v785 = vpack.c.b16 %v686, %v685
  %v786 = vpack.c.b16 %v688, %v687
  %vm885 = vcmask 261120
  %v887 = vsel %vm885, %v284, 0
  %889 = vmatprep.subr.bf16.mxu0 0
  %890 = vmatpush1.bf16.msra.mxu0 %v689
  %891 = vmatprep.subr.bf16.mxu0 0
  %892 = vmatpush1.bf16.msra.mxu0 %v690
  %893 = vmatprep.subr.bf16.mxu0 0
  %894 = vmatpush1.bf16.msra.mxu0 %v691
  %895 = vmatprep.subr.bf16.mxu0 0
  %896 = vmatpush1.bf16.msra.mxu0 %v692
  %897 = vmatprep.subr.bf16.mxu0 0
  %898 = vmatpush1.bf16.msra.mxu0 %v693
  %899 = vmatprep.subr.bf16.mxu0 0
  %900 = vmatpush1.bf16.msra.mxu0 %v694
  %901 = vmatprep.subr.bf16.mxu0 0
  %902 = vmatpush1.bf16.msra.mxu0 %v695
  %903 = vmatprep.subr.bf16.mxu0 0
  %904 = vmatpush1.bf16.msra.mxu0 %v696
  %905 = vmatprep.subr.bf16.mxu0 0
  %906 = vmatpush1.bf16.msra.mxu0 %v697
  %907 = vmatprep.subr.bf16.mxu0 0
  %908 = vmatpush1.bf16.msra.mxu0 %v698
  %909 = vmatprep.subr.bf16.mxu0 0
  %910 = vmatpush1.bf16.msra.mxu0 %v699
  %911 = vmatprep.subr.bf16.mxu0 0
  %912 = vmatpush1.bf16.msra.mxu0 %v700
  %913 = vmatprep.subr.bf16.mxu0 0
  %914 = vmatpush1.bf16.msra.mxu0 %v701
  %915 = vmatprep.subr.bf16.mxu0 0
  %916 = vmatpush1.bf16.msra.mxu0 %v702
  %917 = vmatprep.subr.bf16.mxu0 0
  %918 = vmatpush1.bf16.msra.mxu0 %v703
  %919 = vmatprep.subr.bf16.mxu0 0
  %920 = vmatpush1.bf16.msra.mxu0 %v704
  %921 = vmatprep.mubr.bf16.mxu0 %v273
  %922 = vmatmul.mubr.bf16.gmra.mrb[0].mxu0 %v272
  %v923 = vpop.f32.mrb[0].mxu0
  %v924 = vadd.f32 %v230, %v923
  %v925 = vpop.f32.mrb[0].mxu0
  %v926 = vpop.f32.mrb[0].mxu0
  %v927 = vadd.f32 %v230, %v926
  %v928 = vpop.f32.mrb[0].mxu0
  %929 = vdwg.mxu0
  %930 = vmatprep.subr.bf16.mxu0 0
  %931 = vmatpush1.bf16.msra.mxu0 %v705
  %932 = vmatprep.subr.bf16.mxu0 0
  %933 = vmatpush1.bf16.msra.mxu0 %v706
  %934 = vmatprep.subr.bf16.mxu0 0
  %935 = vmatpush1.bf16.msra.mxu0 %v707
  %936 = vmatprep.subr.bf16.mxu0 0
  %937 = vmatpush1.bf16.msra.mxu0 %v708
  %938 = vmatprep.subr.bf16.mxu0 0
  %939 = vmatpush1.bf16.msra.mxu0 %v709
  %940 = vmatprep.subr.bf16.mxu0 0
  %941 = vmatpush1.bf16.msra.mxu0 %v710
  %942 = vmatprep.subr.bf16.mxu0 0
  %943 = vmatpush1.bf16.msra.mxu0 %v711
  %944 = vmatprep.subr.bf16.mxu0 0
  %945 = vmatpush1.bf16.msra.mxu0 %v712
  %946 = vmatprep.subr.bf16.mxu0 0
  %947 = vmatpush1.bf16.msra.mxu0 %v713
  %948 = vmatprep.subr.bf16.mxu0 0
  %949 = vmatpush1.bf16.msra.mxu0 %v714
  %950 = vmatprep.subr.bf16.mxu0 0
  %951 = vmatpush1.bf16.msra.mxu0 %v715
  %952 = vmatprep.subr.bf16.mxu0 0
  %953 = vmatpush1.bf16.msra.mxu0 %v716
  %954 = vmatprep.subr.bf16.mxu0 0
  %955 = vmatpush1.bf16.msra.mxu0 %v717
  %956 = vmatprep.subr.bf16.mxu0 0
  %957 = vmatpush1.bf16.msra.mxu0 %v718
  %958 = vmatprep.subr.bf16.mxu0 0
  %959 = vmatpush1.bf16.msra.mxu0 %v719
  %960 = vmatprep.subr.bf16.mxu0 0
  %961 = vmatpush1.bf16.msra.mxu0 %v720
  %962 = vmatprep.mubr.bf16.mxu0 %v275
  %963 = vmatmul.mubr.bf16.gmra.mrb[0].mxu0 %v274
  %v964 = vpop.f32.mrb[0].mxu0
  %v965 = vadd.f32 %v924, %v964
  %v966 = vpop.f32.mrb[0].mxu0
  %v967 = vpop.f32.mrb[0].mxu0
  %v968 = vadd.f32 %v927, %v967
  %v969 = vpop.f32.mrb[0].mxu0
  %970 = vdwg.mxu0
  %971 = vmatprep.subr.bf16.mxu0 0
  %972 = vmatpush1.bf16.msra.mxu0 %v721
  %973 = vmatprep.subr.bf16.mxu0 0
  %974 = vmatpush1.bf16.msra.mxu0 %v722
  %975 = vmatprep.subr.bf16.mxu0 0
  %976 = vmatpush1.bf16.msra.mxu0 %v723
  %977 = vmatprep.subr.bf16.mxu0 0
  %978 = vmatpush1.bf16.msra.mxu0 %v724
  %979 = vmatprep.subr.bf16.mxu0 0
  %980 = vmatpush1.bf16.msra.mxu0 %v725
  %981 = vmatprep.subr.bf16.mxu0 0
  %982 = vmatpush1.bf16.msra.mxu0 %v726
  %983 = vmatprep.subr.bf16.mxu0 0
  %984 = vmatpush1.bf16.msra.mxu0 %v727
  %985 = vmatprep.subr.bf16.mxu0 0
  %986 = vmatpush1.bf16.msra.mxu0 %v728
  %987 = vmatprep.subr.bf16.mxu0 0
  %988 = vmatpush1.bf16.msra.mxu0 %v729
  %989 = vmatprep.subr.bf16.mxu0 0
  %990 = vmatpush1.bf16.msra.mxu0 %v730
  %991 = vmatprep.subr.bf16.mxu0 0
  %992 = vmatpush1.bf16.msra.mxu0 %v731
  %993 = vmatprep.subr.bf16.mxu0 0
  %994 = vmatpush1.bf16.msra.mxu0 %v732
  %995 = vmatprep.subr.bf16.mxu0 0
  %996 = vmatpush1.bf16.msra.mxu0 %v733
  %997 = vmatprep.subr.bf16.mxu0 0
  %998 = vmatpush1.bf16.msra.mxu0 %v734
  %999 = vmatprep.subr.bf16.mxu0 0
  %1000 = vmatpush1.bf16.msra.mxu0 %v735
  %1001 = vmatprep.subr.bf16.mxu0 0
  %1002 = vmatpush1.bf16.msra.mxu0 %v736
  %1003 = vmatprep.mubr.bf16.mxu0 %v277
  %1004 = vmatmul.mubr.bf16.gmra.mrb[0].mxu0 %v276
  %v1005 = vpop.f32.mrb[0].mxu0
  %v1006 = vadd.f32 %v965, %v1005
  %v1007 = vpop.f32.mrb[0].mxu0
  %v1008 = vpop.f32.mrb[0].mxu0
  %v1009 = vadd.f32 %v968, %v1008
  %v1010 = vpop.f32.mrb[0].mxu0
  %1011 = vdwg.mxu0
  %1012 = vmatprep.subr.bf16.mxu0 0
  %1013 = vmatpush1.bf16.msra.mxu0 %v737
  %1014 = vmatprep.subr.bf16.mxu0 0
  %1015 = vmatpush1.bf16.msra.mxu0 %v738
  %1016 = vmatprep.subr.bf16.mxu0 0
  %1017 = vmatpush1.bf16.msra.mxu0 %v739
  %1018 = vmatprep.subr.bf16.mxu0 0
  %1019 = vmatpush1.bf16.msra.mxu0 %v740
  %1020 = vmatprep.subr.bf16.mxu0 0
  %1021 = vmatpush1.bf16.msra.mxu0 %v741
  %1022 = vmatprep.subr.bf16.mxu0 0
  %1023 = vmatpush1.bf16.msra.mxu0 %v742
  %1024 = vmatprep.subr.bf16.mxu0 0
  %1025 = vmatpush1.bf16.msra.mxu0 %v743
  %1026 = vmatprep.subr.bf16.mxu0 0
  %1027 = vmatpush1.bf16.msra.mxu0 %v744
  %1028 = vmatprep.subr.bf16.mxu0 0
  %1029 = vmatpush1.bf16.msra.mxu0 %v745
  %1030 = vmatprep.subr.bf16.mxu0 0
  %1031 = vmatpush1.bf16.msra.mxu0 %v746
  %1032 = vmatprep.subr.bf16.mxu0 0
  %1033 = vmatpush1.bf16.msra.mxu0 %v747
  %1034 = vmatprep.subr.bf16.mxu0 0
  %1035 = vmatpush1.bf16.msra.mxu0 %v748
  %1036 = vmatprep.subr.bf16.mxu0 0
  %1037 = vmatpush1.bf16.msra.mxu0 %v749
  %1038 = vmatprep.subr.bf16.mxu0 0
  %1039 = vmatpush1.bf16.msra.mxu0 %v750
  %1040 = vmatprep.subr.bf16.mxu0 0
  %1041 = vmatpush1.bf16.msra.mxu0 %v751
  %1042 = vmatprep.subr.bf16.mxu0 0
  %1043 = vmatpush1.bf16.msra.mxu0 %v752
  %1044 = vmatprep.mubr.bf16.mxu0 %v279
  %1045 = vmatmul.mubr.bf16.gmra.mrb[0].mxu0 %v278
  %v1046 = vpop.f32.mrb[0].mxu0
  %v1047 = vadd.f32 %v1006, %v1046
  %v1048 = vpop.f32.mrb[0].mxu0
  %v1049 = vpop.f32.mrb[0].mxu0
  %v1050 = vadd.f32 %v1009, %v1049
  %v1051 = vpop.f32.mrb[0].mxu0
  %1052 = vdwg.mxu0
  %1053 = vmatprep.subr.bf16.mxu0 0
  %1054 = vmatpush1.bf16.msra.mxu0 %v753
  %1055 = vmatprep.subr.bf16.mxu0 0
  %1056 = vmatpush1.bf16.msra.mxu0 %v754
  %1057 = vmatprep.subr.bf16.mxu0 0
  %1058 = vmatpush1.bf16.msra.mxu0 %v755
  %1059 = vmatprep.subr.bf16.mxu0 0
  %1060 = vmatpush1.bf16.msra.mxu0 %v756
  %1061 = vmatprep.subr.bf16.mxu0 0
  %1062 = vmatpush1.bf16.msra.mxu0 %v757
  %1063 = vmatprep.subr.bf16.mxu0 0
  %1064 = vmatpush1.bf16.msra.mxu0 %v758
  %1065 = vmatprep.subr.bf16.mxu0 0
  %1066 = vmatpush1.bf16.msra.mxu0 %v759
  %1067 = vmatprep.subr.bf16.mxu0 0
  %1068 = vmatpush1.bf16.msra.mxu0 %v760
  %1069 = vmatprep.subr.bf16.mxu0 0
  %1070 = vmatpush1.bf16.msra.mxu0 %v761
  %1071 = vmatprep.subr.bf16.mxu0 0
  %1072 = vmatpush1.bf16.msra.mxu0 %v762
  %1073 = vmatprep.subr.bf16.mxu0 0
  %1074 = vmatpush1.bf16.msra.mxu0 %v763
  %1075 = vmatprep.subr.bf16.mxu0 0
  %1076 = vmatpush1.bf16.msra.mxu0 %v764
  %1077 = vmatprep.subr.bf16.mxu0 0
  %1078 = vmatpush1.bf16.msra.mxu0 %v765
  %1079 = vmatprep.subr.bf16.mxu0 0
  %1080 = vmatpush1.bf16.msra.mxu0 %v766
  %1081 = vmatprep.subr.bf16.mxu0 0
  %1082 = vmatpush1.bf16.msra.mxu0 %v767
  %1083 = vmatprep.subr.bf16.mxu0 0
  %1084 = vmatpush1.bf16.msra.mxu0 %v768
  %1085 = vmatprep.mubr.bf16.mxu0 %v281
  %1086 = vmatmul.mubr.bf16.gmra.mrb[0].mxu0 %v280
  %v1087 = vpop.f32.mrb[0].mxu0
  %v1088 = vadd.f32 %v1047, %v1087
  %v1089 = vpop.f32.mrb[0].mxu0
  %v1090 = vpop.f32.mrb[0].mxu0
  %v1091 = vadd.f32 %v1050, %v1090
  %v1092 = vpop.f32.mrb[0].mxu0
  %1093 = vdwg.mxu0
  %1094 = vmatprep.subr.bf16.mxu0 0
  %1095 = vmatpush1.bf16.msra.mxu0 %v769
  %1096 = vmatprep.subr.bf16.mxu0 0
  %1097 = vmatpush1.bf16.msra.mxu0 %v770
  %1098 = vmatprep.subr.bf16.mxu0 0
  %1099 = vmatpush1.bf16.msra.mxu0 %v771
  %1100 = vmatprep.subr.bf16.mxu0 0
  %1101 = vmatpush1.bf16.msra.mxu0 %v772
  %1102 = vmatprep.subr.bf16.mxu0 0
  %1103 = vmatpush1.bf16.msra.mxu0 %v773
  %1104 = vmatprep.subr.bf16.mxu0 0
  %1105 = vmatpush1.bf16.msra.mxu0 %v774
  %1106 = vmatprep.subr.bf16.mxu0 0
  %1107 = vmatpush1.bf16.msra.mxu0 %v775
  %1108 = vmatprep.subr.bf16.mxu0 0
  %1109 = vmatpush1.bf16.msra.mxu0 %v776
  %1110 = vmatprep.subr.bf16.mxu0 0
  %1111 = vmatpush1.bf16.msra.mxu0 %v777
  %1112 = vmatprep.subr.bf16.mxu0 0
  %1113 = vmatpush1.bf16.msra.mxu0 %v778
  %1114 = vmatprep.subr.bf16.mxu0 0
  %1115 = vmatpush1.bf16.msra.mxu0 %v779
  %1116 = vmatprep.subr.bf16.mxu0 0
  %1117 = vmatpush1.bf16.msra.mxu0 %v780
  %1118 = vmatprep.subr.bf16.mxu0 0
  %1119 = vmatpush1.bf16.msra.mxu0 %v781
  %1120 = vmatprep.subr.bf16.mxu0 0
  %1121 = vmatpush1.bf16.msra.mxu0 %v782
  %1122 = vmatprep.subr.bf16.mxu0 0
  %1123 = vmatpush1.bf16.msra.mxu0 %v783
  %1124 = vmatprep.subr.bf16.mxu0 0
  %1125 = vmatpush1.bf16.msra.mxu0 %v784
  %1126 = vmatprep.mubr.bf16.mxu0 %v283
  %1127 = vmatmul.mubr.bf16.gmra.mrb[0].mxu0 %v282
  %v1128 = vpop.f32.mrb[0].mxu0
  %v1129 = vadd.f32 %v1088, %v1128
  %v1130 = vpop.f32.mrb[0].mxu0
  %v1131 = vpop.f32.mrb[0].mxu0
  %v1132 = vadd.f32 %v1091, %v1131
  %v1133 = vpop.f32.mrb[0].mxu0
  %1134 = vdwg.mxu0
  %1135 = vmatprep.subr.bf16.mxu0 0
  %1136 = vmatpush1.bf16.msra.mxu0 %v785
  %1137 = vmatprep.subr.bf16.mxu0 0
  %1138 = vmatpush1.bf16.msra.mxu0 %v786
  %1139 = vmatprep.subr.bf16.mxu0 0
  %1140 = vmatpush1.bf16.msra.mxu0 0
  %1141 = vmatprep.subr.bf16.mxu0 0
  %1142 = vmatpush1.bf16.msra.mxu0 0
  %1143 = vmatprep.subr.bf16.mxu0 0
  %1144 = vmatpush1.bf16.msra.mxu0 0
  %1145 = vmatprep.subr.bf16.mxu0 0
  %1146 = vmatpush1.bf16.msra.mxu0 0
  %1147 = vmatprep.subr.bf16.mxu0 0
  %1148 = vmatpush1.bf16.msra.mxu0 0
  %1149 = vmatprep.subr.bf16.mxu0 0
  %1150 = vmatpush1.bf16.msra.mxu0 0
  %1151 = vmatprep.subr.bf16.mxu0 0
  %1152 = vmatpush1.bf16.msra.mxu0 0
  %1153 = vmatprep.subr.bf16.mxu0 0
  %1154 = vmatpush1.bf16.msra.mxu0 0
  %1155 = vmatprep.subr.bf16.mxu0 0
  %1156 = vmatpush1.bf16.msra.mxu0 0
  %1157 = vmatprep.subr.bf16.mxu0 0
  %1158 = vmatpush1.bf16.msra.mxu0 0
  %1159 = vmatprep.subr.bf16.mxu0 0
  %1160 = vmatpush1.bf16.msra.mxu0 0
  %1161 = vmatprep.subr.bf16.mxu0 0
  %1162 = vmatpush1.bf16.msra.mxu0 0
  %1163 = vmatprep.subr.bf16.mxu0 0
  %1164 = vmatpush1.bf16.msra.mxu0 0
  %1165 = vmatprep.subr.bf16.mxu0 0
  %1166 = vmatpush1.bf16.msra.mxu0 0
  %1167 = vmatprep.mubr.bf16.mxu0 0
  %1168 = vmatmul.mubr.bf16.gmra.mrb[0].mxu0 %v887
  %v1169 = vpop.f32.mrb[0].mxu0
  %v1170 = vadd.f32 %v1129, %v1169
  %v1171 = vpop.f32.mrb[0].mxu0
  %v1172 = vpop.f32.mrb[0].mxu0
  %v1173 = vadd.f32 %v1132, %v1172
  %v1174 = vpop.f32.mrb[0].mxu0
  %1175 = vdwg.mxu0
  %1176 = vst [vmem:[%s3] sm:$0xff] %v1170
  %1177 = vst [vmem:[%s3 + $0x8] sm:$0xff] %v1173
  // Predicated region
  $region14: #{cnn_forward.5} parent=0 // pred_check
    _
  $region15: #{cnn_forward.5} parent=0 // pred_check_branch
    %1179 = sbr.rel (0) target = $region17
  $region16: #{cnn_forward.5} parent=0 // pred_region
    _
  $region17: #{cnn_forward.5} parent=0 // pred_fallthru
    _
  // Predicated region
  $region18: #{cnn_forward.5} parent=0 // pred_check
    _
  $region19: #{cnn_forward.5} parent=0 // pred_check_branch
    %1181 = sbr.rel (0) target = $region21
  $region20: #{cnn_forward.5} parent=0 // pred_region
    _
  $region21: #{cnn_forward.5} parent=0 // pred_fallthru
    _

</llo_original>
